<compile_context>
chip_gen: v5e
topology: v5e:2x2
jax: 0.10.0
libtpu: 0.0.40
codegen_flags: <defaults>
</compile_context>

<pallas_src>
import functools

import jax
import jax.numpy as jnp
from jax.experimental import pallas as pl
from jax.experimental.pallas import tpu as pltpu


# ------------------------------ tiling helpers ------------------------------

_VMEM_LIMIT = 48 * 1024 * 1024  # raise scoped-VMEM (v5e default 16 MiB, v6e/v7x 32 MiB)


def _compiler_params(sem):
    return pltpu.CompilerParams(dimension_semantics=sem,
                                vmem_limit_bytes=_VMEM_LIMIT)


def _row_tile(m):
    """Largest row tile; only split into >=2 blocks when each block stays >=256."""
    for t in (512, 256):
        if m % t == 0 and m // t >= 2:
            return t
    for t in (512, 256, 128, 64, 32, 16, 8):
        if m % t == 0:
            return t
    return m


def _col_tile(n):
    """Lane-dense (multiple of 128) output tile when possible, else full N."""
    for t in (512, 256, 128):
        if n % t == 0:
            return t
    return n


def _q_tile(sq):
    """Query-row tile for attention: whole sequence when small, else 256/128."""
    for t in (256, 128):
        if sq % t == 0 and sq // t >= 2:
            return t
    return sq


# --------------------------- in-kernel building blocks ----------------------

def _layer_norm(y, g, b):
    mu = jnp.mean(y, axis=-1, keepdims=True)
    var = jnp.mean((y - mu) ** 2, axis=-1, keepdims=True)
    return (y - mu) * jax.lax.rsqrt(var + 1e-5) * g + b


def _mask_bias(kpad_row, tq, sk, causal, q_offset):
    """Additive (tq, sk) f32 bias built in-kernel from a (1, sk) key-pad row."""
    bias = jnp.broadcast_to(kpad_row, (tq, sk)) * jnp.float32(-1e30)
    if causal:
        row = jax.lax.broadcasted_iota(jnp.int32, (tq, sk), 0) + q_offset
        col = jax.lax.broadcasted_iota(jnp.int32, (tq, sk), 1)
        bias = bias + jnp.where(col > row, jnp.float32(-1e30), jnp.float32(0.0))
    return bias


def _attention(xq, xkv, wq, bq, wkv, bkv, wo, bo, g, beta, bias, n_head):
    """Batched-heads attention + out-proj + residual + LayerNorm, all in VMEM.

    xq:  (tq, D) f32 query-side activation (also the residual),
    xkv: (sk, D) f32 key/value-side activation,
    weights (wq/wkv/wo) are bf16 MXU operands; accumulation is f32,
    bias: (tq, sk) additive f32 mask bias.
    """
    tq, D = xq.shape
    sk = xkv.shape[0]
    dh = D // n_head
    scale = jnp.float32(1.0 / (float(dh) ** 0.5 + 1e-8))  # matches sqrt(dk)+1e-8
    bf16 = jnp.bfloat16

    # fused projections (wkv = [wk | wv])
    q = jnp.dot(xq.astype(bf16), wq, preferred_element_type=jnp.float32) + bq
    kv = jnp.dot(xkv.astype(bf16), wkv, preferred_element_type=jnp.float32) + bkv
    k = kv[:, :D]
    v = kv[:, D:]

    # one batched contraction over all heads (no per-head loop / concat)
    qh = jnp.transpose(q.reshape(tq, n_head, dh), (1, 0, 2)).astype(bf16)  # (H,tq,dh)
    kh = jnp.transpose(k.reshape(sk, n_head, dh), (1, 0, 2)).astype(bf16)  # (H,sk,dh)
    vh = jnp.transpose(v.reshape(sk, n_head, dh), (1, 0, 2)).astype(bf16)  # (H,sk,dh)

    # contract over dh of both operands -> no materialized k.T
    s = jax.lax.dot_general(qh, kh, (((2,), (2,)), ((0,), (0,))),
                            preferred_element_type=jnp.float32) * scale    # (H,tq,sk)
    s = s + bias[None, :, :]
    s = s - jnp.max(s, axis=-1, keepdims=True)
    p = jnp.exp(s)
    p = p * pl.reciprocal(jnp.sum(p, axis=-1, keepdims=True), approx=True)

    ctx = jax.lax.dot_general(p.astype(bf16), vh, (((2,), (1,)), ((0,), (0,))),
                              preferred_element_type=jnp.float32)          # (H,tq,dh)
    ctx = jnp.transpose(ctx, (1, 0, 2)).reshape(tq, D)

    o = jnp.dot(ctx.astype(bf16), wo, preferred_element_type=jnp.float32) + bo
    return _layer_norm(o + xq, g, beta)


def _ffn(x, w1, b1, w2, b2, g, beta):
    # hidden (tq, dff) stays in VMEM/vregs, never hits HBM
    # TODO(synk): for very large dff add an 'arbitrary' dff axis + VMEM f32
    # accumulator (and pl.Buffered(1) on the constant weight specs) to respect
    # the 64 MiB VMEM budget on v7x.
    h = jnp.dot(x.astype(jnp.bfloat16), w1, preferred_element_type=jnp.float32) + b1
    h = jnp.maximum(h, 0.0)
    y = jnp.dot(h.astype(jnp.bfloat16), w2, preferred_element_type=jnp.float32) + b2
    return _layer_norm(y + x, g, beta)


# ----------------------------- fused layer kernels ---------------------------

def _enc_layer_kernel(xq_ref, xf_ref, kpad_ref,
                      wq_ref, bq_ref, wkv_ref, bkv_ref, wo_ref, bo_ref,
                      ag_ref, ab_ref,
                      w1_ref, b1_ref, w2_ref, b2_ref, fg_ref, fb_ref,
                      o_ref, *, n_head):
    xq = xq_ref[0]                       # (tq, D) query tile (also residual)
    xf = xf_ref[0]                       # (S, D)  full sequence for K/V
    bias = _mask_bias(kpad_ref[0], xq.shape[0], xf.shape[0],
                      causal=False, q_offset=0)
    y = _attention(xq, xf, wq_ref[...], bq_ref[...], wkv_ref[...], bkv_ref[...],
                   wo_ref[...], bo_ref[...], ag_ref[...], ab_ref[...],
                   bias, n_head)
    o_ref[0] = _ffn(y, w1_ref[...], b1_ref[...], w2_ref[...], b2_ref[...],
                    fg_ref[...], fb_ref[...])


def _dec_layer_kernel(dq_ref, df_ref, enc_ref, ypad_ref, xpad_ref,
                      swq, sbq, swkv, sbkv, swo, sbo, sg, sb,
                      cwq, cbq, cwkv, cbkv, cwo, cbo, cg, cb,
                      w1_ref, b1_ref, w2_ref, b2_ref, fg_ref, fb_ref,
                      o_ref, *, n_head):
    dq = dq_ref[0]                       # (tq, D) decoder query tile
    df = df_ref[0]                       # (Sd, D) full decoder sequence
    enc = enc_ref[0]                     # (Se, D) encoder output
    q_off = pl.program_id(1) * dq.shape[0]

    bias_self = _mask_bias(ypad_ref[0], dq.shape[0], df.shape[0],
                           causal=True, q_offset=q_off)
    y = _attention(dq, df, swq[...], sbq[...], swkv[...], sbkv[...],
                   swo[...], sbo[...], sg[...], sb[...], bias_self, n_head)

    bias_cross = _mask_bias(xpad_ref[0], dq.shape[0], enc.shape[0],
                            causal=False, q_offset=0)
    y = _attention(y, enc, cwq[...], cbq[...], cwkv[...], cbkv[...],
                   cwo[...], cbo[...], cg[...], cb[...], bias_cross, n_head)

    o_ref[0] = _ffn(y, w1_ref[...], b1_ref[...], w2_ref[...], b2_ref[...],
                    fg_ref[...], fb_ref[...])


def _linear_kernel(x_ref, w_ref, b_ref, o_ref):
    o_ref[...] = (jnp.dot(x_ref[...], w_ref[...],
                          preferred_element_type=jnp.float32) + b_ref[...])


# ------------------------------- wrappers ------------------------------------

def _bf16(a):
    return a.astype(jnp.bfloat16)


def _mh_args(m):
    return (_bf16(m["wq"]), m["bq"], _bf16(m["wkv"]), m["bkv"],
            _bf16(m["wo"]), m["bo"], m["ln_g"], m["ln_b"])


def _ffn_args(f):
    return (_bf16(f["w1"]), f["b1"], _bf16(f["w2"]), f["b2"],
            f["ln_g"], f["ln_b"])


def _cspec(shape):
    """BlockSpec for a weight replicated across the (b, q) grid."""
    return pl.BlockSpec(shape, lambda b, q: (0, 0))


def _mh_specs(D):
    return [_cspec((D, D)), _cspec((1, D)), _cspec((D, 2 * D)), _cspec((1, 2 * D)),
            _cspec((D, D)), _cspec((1, D)), _cspec((1, D)), _cspec((1, D))]


def _ffn_specs(D, dff):
    return [_cspec((D, dff)), _cspec((1, dff)), _cspec((dff, D)), _cspec((1, D)),
            _cspec((1, D)), _cspec((1, D))]


def encoder_layer(p, x, kpad, *, n_head):
    """x: (B,S,D) f32, kpad: (B,1,S) f32 (1.0 where key is padding)."""
    B, S, D = x.shape
    tq = _q_tile(S)
    dff = p["ffn"]["w1"].shape[1]
    in_specs = ([pl.BlockSpec((1, tq, D), lambda b, q: (b, q, 0)),
                 pl.BlockSpec((1, S, D), lambda b, q: (b, 0, 0)),
                 pl.BlockSpec((1, 1, S), lambda b, q: (b, 0, 0))]
                + _mh_specs(D) + _ffn_specs(D, dff))
    return pl.pallas_call(
        functools.partial(_enc_layer_kernel, n_head=n_head),
        out_shape=jax.ShapeDtypeStruct((B, S, D), jnp.float32),
        grid=(B, S // tq),
        in_specs=in_specs,
        out_specs=pl.BlockSpec((1, tq, D), lambda b, q: (b, q, 0)),
        compiler_params=_compiler_params(("parallel", "parallel")),
    )(x, x, kpad, *_mh_args(p["mh"]), *_ffn_args(p["ffn"]))


def decoder_layer(p, dec, enc, ypad, xpad, *, n_head):
    """dec: (B,Sd,D), enc: (B,Se,D), ypad: (B,1,Sd), xpad: (B,1,Se)."""
    B, Sd, D = dec.shape
    Se = enc.shape[1]
    tq = _q_tile(Sd)
    dff = p["ffn"]["w1"].shape[1]
    in_specs = ([pl.BlockSpec((1, tq, D), lambda b, q: (b, q, 0)),
                 pl.BlockSpec((1, Sd, D), lambda b, q: (b, 0, 0)),
                 pl.BlockSpec((1, Se, D), lambda b, q: (b, 0, 0)),
                 pl.BlockSpec((1, 1, Sd), lambda b, q: (b, 0, 0)),
                 pl.BlockSpec((1, 1, Se), lambda b, q: (b, 0, 0))]
                + _mh_specs(D) + _mh_specs(D) + _ffn_specs(D, dff))
    return pl.pallas_call(
        functools.partial(_dec_layer_kernel, n_head=n_head),
        out_shape=jax.ShapeDtypeStruct((B, Sd, D), jnp.float32),
        grid=(B, Sd // tq),
        in_specs=in_specs,
        out_specs=pl.BlockSpec((1, tq, D), lambda b, q: (b, q, 0)),
        compiler_params=_compiler_params(("parallel", "parallel")),
    )(dec, dec, enc, ypad, xpad,
      *_mh_args(p["mh_self"]), *_mh_args(p["mh_cross"]), *_ffn_args(p["ffn"]))


def pallas_linear(x, w, b2d):
    """Tiled (M,K)@(K,N)+b; vocab axis innermost, lane-dense N tiles, bf16 MXU."""
    M, K = x.shape
    N = w.shape[1]
    tm = _row_tile(M)
    tn = _col_tile(N)
    # TODO(synk): for very large K add a third 'arbitrary' K axis + VMEM f32
    # accumulator; K here is the embedding dim so it stays whole.
    return pl.pallas_call(
        _linear_kernel,
        out_shape=jax.ShapeDtypeStruct((M, N), jnp.float32),
        grid=(M // tm, N // tn),
        in_specs=[
            pl.BlockSpec((tm, K), lambda i, j: (i, 0)),
            pl.BlockSpec((K, tn), lambda i, j: (0, j)),
            pl.BlockSpec((1, tn), lambda i, j: (0, j)),
        ],
        out_specs=pl.BlockSpec((tm, tn), lambda i, j: (i, j)),
        compiler_params=_compiler_params(("parallel", "parallel")),
    )(_bf16(x), _bf16(w), b2d)


# ------------------------------ model pieces --------------------------------

def position_encoding(max_len, emb_dim):
    # base 1000.0 matches the MorvanZhou reference (canonical transformer: 10000.0)
    pos = jnp.arange(max_len, dtype=jnp.float32)[:, None]
    i = jnp.arange(emb_dim)
    denom = jnp.power(1000.0, 2.0 * (i // 2).astype(jnp.float32) / emb_dim)
    angle = pos / denom
    pe = jnp.where(i % 2 == 0, jnp.sin(angle), jnp.cos(angle))
    return pe.astype(jnp.float32)                       # (max_len, emb_dim)


def embed(params, tokens):
    # TODO(synk): token-id embedding gather stays in plain JAX (data-dependent
    # gather; not part of the matmul/attention hot path).
    x = jnp.take(params["emb"], tokens, axis=0)         # (B, S, D)
    S = tokens.shape[1]
    return x + params["pe"][:S][None, :, :]


def key_pad_row(tokens, padding_idx=0):
    # (B, 1, S) float32, 1.0 where the key position is a padding token.
    return (tokens == padding_idx).astype(jnp.float32)[:, None, :]


def transformer_forward(params, x_tokens, y_tokens, n_head):
    x_e = embed(params, x_tokens)
    y_e = embed(params, y_tokens)
    x_pad = key_pad_row(x_tokens)
    y_pad = key_pad_row(y_tokens)

    enc = x_e
    for lp in params["encoder"]:
        enc = encoder_layer(lp, enc, x_pad, n_head=n_head)

    dec = y_e
    for lp in params["decoder"]:
        dec = decoder_layer(lp, dec, enc, y_pad, x_pad, n_head=n_head)

    B, S, D = dec.shape
    logits = pallas_linear(dec.reshape(B * S, D), params["out_w"], params["out_b"])
    return logits.reshape(B, S, -1)


# ------------------------------ parameter init ------------------------------

def init_params(key, n_vocab, max_len, emb_dim, n_layer, dff):
    keys = jax.random.split(key, 512)
    kit = iter(keys)

    def lin(din, dout, scale=0.05):
        w = jax.random.normal(next(kit), (din, dout), jnp.float32) * scale
        b = jnp.zeros((1, dout), jnp.float32)
        return w, b

    def mh_params():
        wq, bq = lin(emb_dim, emb_dim)
        wkv, bkv = lin(emb_dim, 2 * emb_dim)      # fused [wk | wv]
        wo, bo = lin(emb_dim, emb_dim)
        return dict(wq=wq, bq=bq, wkv=wkv, bkv=bkv, wo=wo, bo=bo,
                    ln_g=jnp.ones((1, emb_dim), jnp.float32),
                    ln_b=jnp.zeros((1, emb_dim), jnp.float32))

    def ffn_params():
        w1, b1 = lin(emb_dim, dff)
        w2, b2 = lin(dff, emb_dim)
        return dict(w1=w1, b1=b1, w2=w2, b2=b2,
                    ln_g=jnp.ones((1, emb_dim), jnp.float32),
                    ln_b=jnp.zeros((1, emb_dim), jnp.float32))

    params = dict(
        emb=jax.random.normal(next(kit), (n_vocab, emb_dim), jnp.float32) * 0.1,
        pe=position_encoding(max_len, emb_dim),
        encoder=[dict(mh=mh_params(), ffn=ffn_params()) for _ in range(n_layer)],
        decoder=[dict(mh_self=mh_params(), mh_cross=mh_params(),
                      ffn=ffn_params()) for _ in range(n_layer)],
    )
    out_w, out_b = lin(emb_dim, n_vocab)
    params["out_w"] = out_w
    params["out_b"] = out_b
    return params


# ---------------------------------- main -------------------------------------

if __name__ == "__main__":
    # lane-dense demo dims (D and vocab multiples of 128) per perf review
    B, S = 2, 8
    N_VOCAB, MAX_LEN, EMB, N_HEAD, N_LAYER, DFF = 128, 8, 128, 4, 2, 256

    key = jax.random.PRNGKey(0)
    kp, kx, ky = jax.random.split(key, 3)
    params = init_params(kp, N_VOCAB, MAX_LEN, EMB, N_LAYER, DFF)

    x = jax.random.randint(kx, (B, S), 1, N_VOCAB, dtype=jnp.int32)
    y = jax.random.randint(ky, (B, S), 1, N_VOCAB, dtype=jnp.int32)
    x = x.at[:, -2:].set(0)   # padding tokens in the source
    y = y.at[:, -1:].set(0)   # a padding token in the target (exercises causal+pad)

    fwd = jax.jit(functools.partial(transformer_forward, n_head=N_HEAD))
    logits = fwd(params, x, y)
    jax.block_until_ready(logits)

    assert logits.shape == (B, S, N_VOCAB), logits.shape
    assert bool(jnp.all(jnp.isfinite(logits)))
    print("KERNEL_OK")
</pallas_src>

<mosaic_0001>
module attributes {stable_mosaic.version = 11 : i64} {
  func.func @_linear_kernel(%arg0: i32, %arg1: i32, %arg2: memref<16x128xbf16, #tpu.memory_space<vmem>>, %arg3: memref<128x128xbf16, #tpu.memory_space<vmem>>, %arg4: memref<1x128xf32, #tpu.memory_space<vmem>>, %arg5: memref<16x128xf32, #tpu.memory_space<vmem>>) attributes {dimension_semantics = [#tpu.dimension_semantics<parallel>, #tpu.dimension_semantics<parallel>], iteration_bounds = array<i64: 1, 1>, scalar_prefetch = 0 : i64, scratch_operands = 0 : i64, tpu.core_type = #tpu.core_type<tc>, window_params = [{transform_indices = @transform_0, window_bounds = array<i64: 16, 128>}, {transform_indices = @transform_1, window_bounds = array<i64: 128, 128>}, {transform_indices = @transform_2, window_bounds = array<i64: 1, 128>}, {transform_indices = @transform_3, window_bounds = array<i64: 16, 128>}]} {
    %c0 = arith.constant 0 : index
    %c0_0 = arith.constant 0 : index
    %0 = vector.load %arg2[%c0, %c0_0] : memref<16x128xbf16, #tpu.memory_space<vmem>>, vector<16x128xbf16>
    %c0_1 = arith.constant 0 : index
    %c0_2 = arith.constant 0 : index
    %1 = vector.load %arg3[%c0_1, %c0_2] : memref<128x128xbf16, #tpu.memory_space<vmem>>, vector<128x128xbf16>
    %cst = arith.constant dense<0.000000e+00> : vector<16x128xf32>
    %2 = tpu.matmul %0, %1, %cst {dimension_numbers = #tpu.dot_dimension_numbers<[1], [0], [0], [1], [0, 0, 1, 1], [], []>} : vector<16x128xbf16>, vector<128x128xbf16>, vector<16x128xf32> -> vector<16x128xf32>
    %c0_3 = arith.constant 0 : index
    %c0_4 = arith.constant 0 : index
    %3 = vector.load %arg4[%c0_3, %c0_4] : memref<1x128xf32, #tpu.memory_space<vmem>>, vector<1x128xf32>
    %4 = vector.broadcast %3 : vector<1x128xf32> to vector<16x128xf32>
    %5 = arith.addf %2, %4 : vector<16x128xf32>
    %c0_5 = arith.constant 0 : index
    %c0_6 = arith.constant 0 : index
    %6 = vector.load %arg5[%c0_5, %c0_6] : memref<16x128xf32, #tpu.memory_space<vmem>>, vector<16x128xf32>
    tpu.vector_store %arg5[%c0_5, %c0_6], %5 {strides = array<i32>} : memref<16x128xf32, #tpu.memory_space<vmem>>, vector<16x128xf32>,
    return
  }
  func.func @transform_0(%arg0: i32, %arg1: i32) -> (i32, i32) {
    %c0_i32 = arith.constant 0 : i32
    %c0_i32_0 = arith.constant 0 : i32
    return %arg0, %c0_i32 : i32, i32
  }
  func.func @transform_1(%arg0: i32, %arg1: i32) -> (i32, i32) {
    %c0_i32 = arith.constant 0 : i32
    %c0_i32_0 = arith.constant 0 : i32
    return %c0_i32, %arg1 : i32, i32
  }
  func.func @transform_2(%arg0: i32, %arg1: i32) -> (i32, i32) {
    %c0_i32 = arith.constant 0 : i32
    %c0_i32_0 = arith.constant 0 : i32
    return %c0_i32, %arg1 : i32, i32
  }
  func.func @transform_3(%arg0: i32, %arg1: i32) -> (i32, i32) {
    %c0_i32 = arith.constant 0 : i32
    return %arg0, %arg1 : i32, i32
  }
}

module attributes {stable_mosaic.version = 11 : i64} {
  func.func @_dec_layer_kernel(%arg0: i32, %arg1: i32, %arg2: memref<1x8x128xf32, #tpu.memory_space<vmem>>, %arg3: memref<1x8x128xf32, #tpu.memory_space<vmem>>, %arg4: memref<1x8x128xf32, #tpu.memory_space<vmem>>, %arg5: memref<1x1x8xf32, #tpu.memory_space<vmem>>, %arg6: memref<1x1x8xf32, #tpu.memory_space<vmem>>, %arg7: memref<128x128xbf16, #tpu.memory_space<vmem>>, %arg8: memref<1x128xf32, #tpu.memory_space<vmem>>, %arg9: memref<128x256xbf16, #tpu.memory_space<vmem>>, %arg10: memref<1x256xf32, #tpu.memory_space<vmem>>, %arg11: memref<128x128xbf16, #tpu.memory_space<vmem>>, %arg12: memref<1x128xf32, #tpu.memory_space<vmem>>, %arg13: memref<1x128xf32, #tpu.memory_space<vmem>>, %arg14: memref<1x128xf32, #tpu.memory_space<vmem>>, %arg15: memref<128x128xbf16, #tpu.memory_space<vmem>>, %arg16: memref<1x128xf32, #tpu.memory_space<vmem>>, %arg17: memref<128x256xbf16, #tpu.memory_space<vmem>>, %arg18: memref<1x256xf32, #tpu.memory_space<vmem>>, %arg19: memref<128x128xbf16, #tpu.memory_space<vmem>>, %arg20: memref<1x128xf32, #tpu.memory_space<vmem>>, %arg21: memref<1x128xf32, #tpu.memory_space<vmem>>, %arg22: memref<1x128xf32, #tpu.memory_space<vmem>>, %arg23: memref<128x256xbf16, #tpu.memory_space<vmem>>, %arg24: memref<1x256xf32, #tpu.memory_space<vmem>>, %arg25: memref<256x128xbf16, #tpu.memory_space<vmem>>, %arg26: memref<1x128xf32, #tpu.memory_space<vmem>>, %arg27: memref<1x128xf32, #tpu.memory_space<vmem>>, %arg28: memref<1x128xf32, #tpu.memory_space<vmem>>, %arg29: memref<1x8x128xf32, #tpu.memory_space<vmem>>) attributes {dimension_semantics = [#tpu.dimension_semantics<parallel>, #tpu.dimension_semantics<parallel>], iteration_bounds = array<i64: 2, 1>, scalar_prefetch = 0 : i64, scratch_operands = 0 : i64, tpu.core_type = #tpu.core_type<tc>, window_params = [{transform_indices = @transform_0, window_bounds = array<i64: 1, 8, 128>}, {transform_indices = @transform_1, window_bounds = array<i64: 1, 8, 128>}, {transform_indices = @transform_2, window_bounds = array<i64: 1, 8, 128>}, {transform_indices = @transform_3, window_bounds = array<i64: 1, 1, 8>}, {transform_indices = @transform_4, window_bounds = array<i64: 1, 1, 8>}, {pipeline_mode = #tpu.pipeline_mode<synchronous>, transform_indices = @transform_5, window_bounds = array<i64: 128, 128>}, {pipeline_mode = #tpu.pipeline_mode<synchronous>, transform_indices = @transform_6, window_bounds = array<i64: 1, 128>}, {pipeline_mode = #tpu.pipeline_mode<synchronous>, transform_indices = @transform_7, window_bounds = array<i64: 128, 256>}, {pipeline_mode = #tpu.pipeline_mode<synchronous>, transform_indices = @transform_8, window_bounds = array<i64: 1, 256>}, {pipeline_mode = #tpu.pipeline_mode<synchronous>, transform_indices = @transform_9, window_bounds = array<i64: 128, 128>}, {pipeline_mode = #tpu.pipeline_mode<synchronous>, transform_indices = @transform_10, window_bounds = array<i64: 1, 128>}, {pipeline_mode = #tpu.pipeline_mode<synchronous>, transform_indices = @transform_11, window_bounds = array<i64: 1, 128>}, {pipeline_mode = #tpu.pipeline_mode<synchronous>, transform_indices = @transform_12, window_bounds = array<i64: 1, 128>}, {pipeline_mode = #tpu.pipeline_mode<synchronous>, transform_indices = @transform_13, window_bounds = array<i64: 128, 128>}, {pipeline_mode = #tpu.pipeline_mode<synchronous>, transform_indices = @transform_14, window_bounds = array<i64: 1, 128>}, {pipeline_mode = #tpu.pipeline_mode<synchronous>, transform_indices = @transform_15, window_bounds = array<i64: 128, 256>}, {pipeline_mode = #tpu.pipeline_mode<synchronous>, transform_indices = @transform_16, window_bounds = array<i64: 1, 256>}, {pipeline_mode = #tpu.pipeline_mode<synchronous>, transform_indices = @transform_17, window_bounds = array<i64: 128, 128>}, {pipeline_mode = #tpu.pipeline_mode<synchronous>, transform_indices = @transform_18, window_bounds = array<i64: 1, 128>}, {pipeline_mode = #tpu.pipeline_mode<synchronous>, transform_indices = @transform_19, window_bounds = array<i64: 1, 128>}, {pipeline_mode = #tpu.pipeline_mode<synchronous>, transform_indices = @transform_20, window_bounds = array<i64: 1, 128>}, {pipeline_mode = #tpu.pipeline_mode<synchronous>, transform_indices = @transform_21, window_bounds = array<i64: 128, 256>}, {pipeline_mode = #tpu.pipeline_mode<synchronous>, transform_indices = @transform_22, window_bounds = array<i64: 1, 256>}, {pipeline_mode = #tpu.pipeline_mode<synchronous>, transform_indices = @transform_23, window_bounds = array<i64: 256, 128>}, {pipeline_mode = #tpu.pipeline_mode<synchronous>, transform_indices = @transform_24, window_bounds = array<i64: 1, 128>}, {pipeline_mode = #tpu.pipeline_mode<synchronous>, transform_indices = @transform_25, window_bounds = array<i64: 1, 128>}, {pipeline_mode = #tpu.pipeline_mode<synchronous>, transform_indices = @transform_26, window_bounds = array<i64: 1, 128>}, {transform_indices = @transform_27, window_bounds = array<i64: 1, 8, 128>}]} {
    %c0 = arith.constant 0 : index
    %c0_0 = arith.constant 0 : index
    %c0_1 = arith.constant 0 : index
    %0 = vector.load %arg2[%c0, %c0_0, %c0_1] : memref<1x8x128xf32, #tpu.memory_space<vmem>>, vector<1x8x128xf32>
    %1 = vector.shape_cast %0 : vector<1x8x128xf32> to vector<8x128xf32>
    %c0_2 = arith.constant 0 : index
    %c0_3 = arith.constant 0 : index
    %c0_4 = arith.constant 0 : index
    %2 = vector.load %arg3[%c0_2, %c0_3, %c0_4] : memref<1x8x128xf32, #tpu.memory_space<vmem>>, vector<1x8x128xf32>
    %3 = vector.shape_cast %2 : vector<1x8x128xf32> to vector<8x128xf32>
    %c0_5 = arith.constant 0 : index
    %c0_6 = arith.constant 0 : index
    %c0_7 = arith.constant 0 : index
    %4 = vector.load %arg4[%c0_5, %c0_6, %c0_7] : memref<1x8x128xf32, #tpu.memory_space<vmem>>, vector<1x8x128xf32>
    %5 = vector.shape_cast %4 : vector<1x8x128xf32> to vector<8x128xf32>
    %c8_i32 = arith.constant 8 : i32
    %6 = arith.muli %arg1, %c8_i32 : i32
    %c0_8 = arith.constant 0 : index
    %c0_9 = arith.constant 0 : index
    %c0_10 = arith.constant 0 : index
    %7 = vector.load %arg5[%c0_8, %c0_9, %c0_10] : memref<1x1x8xf32, #tpu.memory_space<vmem>>, vector<1x1x8xf32>
    %8 = vector.shape_cast %7 : vector<1x1x8xf32> to vector<1x8xf32>
    %9 = vector.shape_cast %8 : vector<1x8xf32> to vector<1x8xf32>
    %10 = vector.broadcast %9 : vector<1x8xf32> to vector<8x8xf32>
    %cst = arith.constant -1.000000e+30 : f32
    %11 = vector.broadcast %cst : f32 to vector<8x8xf32>
    %12 = arith.mulf %10, %11 : vector<8x8xf32>
    %13 = tpu.iota {dimensions = array<i32: 0>} : vector<8x8xi32>
    %14 = vector.broadcast %6 : i32 to vector<8x8xi32>
    %15 = arith.addi %13, %14 : vector<8x8xi32>
    %16 = tpu.iota {dimensions = array<i32: 1>} : vector<8x8xi32>
    %17 = arith.cmpi sgt, %16, %15 : vector<8x8xi32>
    %cst_11 = arith.constant -1.000000e+30 : f32
    %cst_12 = arith.constant 0.000000e+00 : f32
    %18 = vector.broadcast %cst_11 : f32 to vector<8x8xf32>
    %19 = vector.broadcast %cst_12 : f32 to vector<8x8xf32>
    %20 = arith.select %17, %18, %19 : vector<8x8xi1>, vector<8x8xf32>
    %21 = arith.addf %12, %20 : vector<8x8xf32>
    %c0_13 = arith.constant 0 : index
    %c0_14 = arith.constant 0 : index
    %22 = vector.load %arg7[%c0_13, %c0_14] : memref<128x128xbf16, #tpu.memory_space<vmem>>, vector<128x128xbf16>
    %c0_15 = arith.constant 0 : index
    %c0_16 = arith.constant 0 : index
    %23 = vector.load %arg8[%c0_15, %c0_16] : memref<1x128xf32, #tpu.memory_space<vmem>>, vector<1x128xf32>
    %c0_17 = arith.constant 0 : index
    %c0_18 = arith.constant 0 : index
    %24 = vector.load %arg9[%c0_17, %c0_18] : memref<128x256xbf16, #tpu.memory_space<vmem>>, vector<128x256xbf16>
    %c0_19 = arith.constant 0 : index
    %c0_20 = arith.constant 0 : index
    %25 = vector.load %arg10[%c0_19, %c0_20] : memref<1x256xf32, #tpu.memory_space<vmem>>, vector<1x256xf32>
    %c0_21 = arith.constant 0 : index
    %c0_22 = arith.constant 0 : index
    %26 = vector.load %arg11[%c0_21, %c0_22] : memref<128x128xbf16, #tpu.memory_space<vmem>>, vector<128x128xbf16>
    %c0_23 = arith.constant 0 : index
    %c0_24 = arith.constant 0 : index
    %27 = vector.load %arg12[%c0_23, %c0_24] : memref<1x128xf32, #tpu.memory_space<vmem>>, vector<1x128xf32>
    %c0_25 = arith.constant 0 : index
    %c0_26 = arith.constant 0 : index
    %28 = vector.load %arg13[%c0_25, %c0_26] : memref<1x128xf32, #tpu.memory_space<vmem>>, vector<1x128xf32>
    %c0_27 = arith.constant 0 : index
    %c0_28 = arith.constant 0 : index
    %29 = vector.load %arg14[%c0_27, %c0_28] : memref<1x128xf32, #tpu.memory_space<vmem>>, vector<1x128xf32>
    %30 = arith.truncf %1 : vector<8x128xf32> to vector<8x128xbf16>
    %cst_29 = arith.constant dense<0.000000e+00> : vector<8x128xf32>
    %31 = tpu.matmul %30, %22, %cst_29 {dimension_numbers = #tpu.dot_dimension_numbers<[1], [0], [0], [1], [0, 0, 1, 1], [], []>} : vector<8x128xbf16>, vector<128x128xbf16>, vector<8x128xf32> -> vector<8x128xf32>
    %32 = vector.broadcast %23 : vector<1x128xf32> to vector<8x128xf32>
    %33 = arith.addf %31, %32 : vector<8x128xf32>
    %34 = arith.truncf %3 : vector<8x128xf32> to vector<8x128xbf16>
    %cst_30 = arith.constant dense<0.000000e+00> : vector<8x256xf32>
    %35 = tpu.matmul %34, %24, %cst_30 {dimension_numbers = #tpu.dot_dimension_numbers<[1], [0], [0], [1], [0, 0, 1, 1], [], []>} : vector<8x128xbf16>, vector<128x256xbf16>, vector<8x256xf32> -> vector<8x256xf32>
    %36 = vector.broadcast %25 : vector<1x256xf32> to vector<8x256xf32>
    %37 = arith.addf %35, %36 : vector<8x256xf32>
    %38 = vector.extract_strided_slice %37 {offsets = [0, 0], sizes = [8, 128], strides = [1, 1]} : vector<8x256xf32> to vector<8x128xf32>
    %39 = vector.extract_strided_slice %37 {offsets = [0, 128], sizes = [8, 128], strides = [1, 1]} : vector<8x256xf32> to vector<8x128xf32>
    %40 = vector.shape_cast %33 : vector<8x128xf32> to vector<8x4x32xf32>
    %41 = tpu.transpose %40, [1, 0, 2] : vector<8x4x32xf32> -> vector<4x8x32xf32>
    %42 = arith.truncf %41 : vector<4x8x32xf32> to vector<4x8x32xbf16>
    %43 = vector.shape_cast %38 : vector<8x128xf32> to vector<8x4x32xf32>
    %44 = tpu.transpose %43, [1, 0, 2] : vector<8x4x32xf32> -> vector<4x8x32xf32>
    %45 = arith.truncf %44 : vector<4x8x32xf32> to vector<4x8x32xbf16>
    %46 = vector.shape_cast %39 : vector<8x128xf32> to vector<8x4x32xf32>
    %47 = tpu.transpose %46, [1, 0, 2] : vector<8x4x32xf32> -> vector<4x8x32xf32>
    %48 = arith.truncf %47 : vector<4x8x32xf32> to vector<4x8x32xbf16>
    %cst_31 = arith.constant dense<0.000000e+00> : vector<4x8x8xf32>
    %49 = tpu.matmul %42, %45, %cst_31 {dimension_numbers = #tpu.dot_dimension_numbers<[2], [2], [1], [1], [0, 0, 0, 1, 1, 1], [0], [0]>} : vector<4x8x32xbf16>, vector<4x8x32xbf16>, vector<4x8x8xf32> -> vector<4x8x8xf32>
    %cst_32 = arith.constant 0.176776692 : f32
    %50 = vector.broadcast %cst_32 : f32 to vector<4x8x8xf32>
    %51 = arith.mulf %49, %50 : vector<4x8x8xf32>
    %52 = vector.shape_cast %21 : vector<8x8xf32> to vector<1x8x8xf32>
    %53 = vector.broadcast %52 : vector<1x8x8xf32> to vector<4x8x8xf32>
    %54 = arith.addf %51, %53 : vector<4x8x8xf32>
    %cst_33 = arith.constant dense<0xFF800000> : vector<4x8xf32>
    %55 = vector.multi_reduction <maximumf>, %54, %cst_33 [2] : vector<4x8x8xf32> to vector<4x8xf32>
    %56 = vector.shape_cast %55 : vector<4x8xf32> to vector<4x8x1xf32>
    %57 = vector.broadcast %56 : vector<4x8x1xf32> to vector<4x8x8xf32>
    %58 = arith.subf %54, %57 : vector<4x8x8xf32>
    %59 = math.exp %58 : vector<4x8x8xf32>
    %cst_34 = arith.constant dense<0.000000e+00> : vector<4x8xf32>
    %60 = vector.multi_reduction <add>, %59, %cst_34 [2] : vector<4x8x8xf32> to vector<4x8xf32>
    %61 = vector.shape_cast %60 : vector<4x8xf32> to vector<4x8x1xf32>
    %62 = tpu.reciprocal %61 {approx = true} : vector<4x8x1xf32> -> vector<4x8x1xf32>
    %63 = vector.broadcast %62 : vector<4x8x1xf32> to vector<4x8x8xf32>
    %64 = arith.mulf %59, %63 : vector<4x8x8xf32>
    %65 = arith.truncf %64 : vector<4x8x8xf32> to vector<4x8x8xbf16>
    %cst_35 = arith.constant dense<0.000000e+00> : vector<4x8x32xf32>
    %66 = tpu.matmul %65, %48, %cst_35 {dimension_numbers = #tpu.dot_dimension_numbers<[2], [1], [1], [2], [0, 0, 0, 1, 1, 2], [0], [0]>} : vector<4x8x8xbf16>, vector<4x8x32xbf16>, vector<4x8x32xf32> -> vector<4x8x32xf32>
    %67 = tpu.transpose %66, [1, 0, 2] : vector<4x8x32xf32> -> vector<8x4x32xf32>
    %68 = vector.shape_cast %67 : vector<8x4x32xf32> to vector<8x128xf32>
    %69 = arith.truncf %68 : vector<8x128xf32> to vector<8x128xbf16>
    %cst_36 = arith.constant dense<0.000000e+00> : vector<8x128xf32>
    %70 = tpu.matmul %69, %26, %cst_36 {dimension_numbers = #tpu.dot_dimension_numbers<[1], [0], [0], [1], [0, 0, 1, 1], [], []>} : vector<8x128xbf16>, vector<128x128xbf16>, vector<8x128xf32> -> vector<8x128xf32>
    %71 = vector.broadcast %27 : vector<1x128xf32> to vector<8x128xf32>
    %72 = arith.addf %70, %71 : vector<8x128xf32>
    %73 = arith.addf %72, %1 : vector<8x128xf32>
    %cst_37 = arith.constant dense<0.000000e+00> : vector<8xf32>
    %74 = vector.multi_reduction <add>, %73, %cst_37 [1] : vector<8x128xf32> to vector<8xf32>
    %75 = vector.shape_cast %74 : vector<8xf32> to vector<8x1xf32>
    %cst_38 = arith.constant 1.280000e+02 : f32
    %76 = vector.broadcast %cst_38 : f32 to vector<8x1xf32>
    %77 = arith.divf %75, %76 : vector<8x1xf32>
    %78 = vector.broadcast %77 : vector<8x1xf32> to vector<8x128xf32>
    %79 = arith.subf %73, %78 : vector<8x128xf32>
    %80 = arith.mulf %79, %79 : vector<8x128xf32>
    %cst_39 = arith.constant dense<0.000000e+00> : vector<8xf32>
    %81 = vector.multi_reduction <add>, %80, %cst_39 [1] : vector<8x128xf32> to vector<8xf32>
    %82 = vector.shape_cast %81 : vector<8xf32> to vector<8x1xf32>
    %cst_40 = arith.constant 1.280000e+02 : f32
    %83 = vector.broadcast %cst_40 : f32 to vector<8x1xf32>
    %84 = arith.divf %82, %83 : vector<8x1xf32>
    %85 = vector.broadcast %77 : vector<8x1xf32> to vector<8x128xf32>
    %86 = arith.subf %73, %85 : vector<8x128xf32>
    %cst_41 = arith.constant 9.99999974E-6 : f32
    %87 = vector.broadcast %cst_41 : f32 to vector<8x1xf32>
    %88 = arith.addf %84, %87 : vector<8x1xf32>
    %89 = math.rsqrt %88 : vector<8x1xf32>
    %90 = vector.broadcast %89 : vector<8x1xf32> to vector<8x128xf32>
    %91 = arith.mulf %86, %90 : vector<8x128xf32>
    %92 = vector.broadcast %28 : vector<1x128xf32> to vector<8x128xf32>
    %93 = arith.mulf %91, %92 : vector<8x128xf32>
    %94 = vector.broadcast %29 : vector<1x128xf32> to vector<8x128xf32>
    %95 = arith.addf %93, %94 : vector<8x128xf32>
    %c0_42 = arith.constant 0 : index
    %c0_43 = arith.constant 0 : index
    %c0_44 = arith.constant 0 : index
    %96 = vector.load %arg6[%c0_42, %c0_43, %c0_44] : memref<1x1x8xf32, #tpu.memory_space<vmem>>, vector<1x1x8xf32>
    %97 = vector.shape_cast %96 : vector<1x1x8xf32> to vector<1x8xf32>
    %98 = vector.shape_cast %97 : vector<1x8xf32> to vector<1x8xf32>
    %99 = vector.broadcast %98 : vector<1x8xf32> to vector<8x8xf32>
    %cst_45 = arith.constant -1.000000e+30 : f32
    %100 = vector.broadcast %cst_45 : f32 to vector<8x8xf32>
    %101 = arith.mulf %99, %100 : vector<8x8xf32>
    %c0_46 = arith.constant 0 : index
    %c0_47 = arith.constant 0 : index
    %102 = vector.load %arg15[%c0_46, %c0_47] : memref<128x128xbf16, #tpu.memory_space<vmem>>, vector<128x128xbf16>
    %c0_48 = arith.constant 0 : index
    %c0_49 = arith.constant 0 : index
    %103 = vector.load %arg16[%c0_48, %c0_49] : memref<1x128xf32, #tpu.memory_space<vmem>>, vector<1x128xf32>
    %c0_50 = arith.constant 0 : index
    %c0_51 = arith.constant 0 : index
    %104 = vector.load %arg17[%c0_50, %c0_51] : memref<128x256xbf16, #tpu.memory_space<vmem>>, vector<128x256xbf16>
    %c0_52 = arith.constant 0 : index
    %c0_53 = arith.constant 0 : index
    %105 = vector.load %arg18[%c0_52, %c0_53] : memref<1x256xf32, #tpu.memory_space<vmem>>, vector<1x256xf32>
    %c0_54 = arith.constant 0 : index
    %c0_55 = arith.constant 0 : index
    %106 = vector.load %arg19[%c0_54, %c0_55] : memref<128x128xbf16, #tpu.memory_space<vmem>>, vector<128x128xbf16>
    %c0_56 = arith.constant 0 : index
    %c0_57 = arith.constant 0 : index
    %107 = vector.load %arg20[%c0_56, %c0_57] : memref<1x128xf32, #tpu.memory_space<vmem>>, vector<1x128xf32>
    %c0_58 = arith.constant 0 : index
    %c0_59 = arith.constant 0 : index
    %108 = vector.load %arg21[%c0_58, %c0_59] : memref<1x128xf32, #tpu.memory_space<vmem>>, vector<1x128xf32>
    %c0_60 = arith.constant 0 : index
    %c0_61 = arith.constant 0 : index
    %109 = vector.load %arg22[%c0_60, %c0_61] : memref<1x128xf32, #tpu.memory_space<vmem>>, vector<1x128xf32>
    %110 = arith.truncf %95 : vector<8x128xf32> to vector<8x128xbf16>
    %cst_62 = arith.constant dense<0.000000e+00> : vector<8x128xf32>
    %111 = tpu.matmul %110, %102, %cst_62 {dimension_numbers = #tpu.dot_dimension_numbers<[1], [0], [0], [1], [0, 0, 1, 1], [], []>} : vector<8x128xbf16>, vector<128x128xbf16>, vector<8x128xf32> -> vector<8x128xf32>
    %112 = vector.broadcast %103 : vector<1x128xf32> to vector<8x128xf32>
    %113 = arith.addf %111, %112 : vector<8x128xf32>
    %114 = arith.truncf %5 : vector<8x128xf32> to vector<8x128xbf16>
    %cst_63 = arith.constant dense<0.000000e+00> : vector<8x256xf32>
    %115 = tpu.matmul %114, %104, %cst_63 {dimension_numbers = #tpu.dot_dimension_numbers<[1], [0], [0], [1], [0, 0, 1, 1], [], []>} : vector<8x128xbf16>, vector<128x256xbf16>, vector<8x256xf32> -> vector<8x256xf32>
    %116 = vector.broadcast %105 : vector<1x256xf32> to vector<8x256xf32>
    %117 = arith.addf %115, %116 : vector<8x256xf32>
    %118 = vector.extract_strided_slice %117 {offsets = [0, 0], sizes = [8, 128], strides = [1, 1]} : vector<8x256xf32> to vector<8x128xf32>
    %119 = vector.extract_strided_slice %117 {offsets = [0, 128], sizes = [8, 128], strides = [1, 1]} : vector<8x256xf32> to vector<8x128xf32>
    %120 = vector.shape_cast %113 : vector<8x128xf32> to vector<8x4x32xf32>
    %121 = tpu.transpose %120, [1, 0, 2] : vector<8x4x32xf32> -> vector<4x8x32xf32>
    %122 = arith.truncf %121 : vector<4x8x32xf32> to vector<4x8x32xbf16>
    %123 = vector.shape_cast %118 : vector<8x128xf32> to vector<8x4x32xf32>
    %124 = tpu.transpose %123, [1, 0, 2] : vector<8x4x32xf32> -> vector<4x8x32xf32>
    %125 = arith.truncf %124 : vector<4x8x32xf32> to vector<4x8x32xbf16>
    %126 = vector.shape_cast %119 : vector<8x128xf32> to vector<8x4x32xf32>
    %127 = tpu.transpose %126, [1, 0, 2] : vector<8x4x32xf32> -> vector<4x8x32xf32>
    %128 = arith.truncf %127 : vector<4x8x32xf32> to vector<4x8x32xbf16>
    %cst_64 = arith.constant dense<0.000000e+00> : vector<4x8x8xf32>
    %129 = tpu.matmul %122, %125, %cst_64 {dimension_numbers = #tpu.dot_dimension_numbers<[2], [2], [1], [1], [0, 0, 0, 1, 1, 1], [0], [0]>} : vector<4x8x32xbf16>, vector<4x8x32xbf16>, vector<4x8x8xf32> -> vector<4x8x8xf32>
    %cst_65 = arith.constant 0.176776692 : f32
    %130 = vector.broadcast %cst_65 : f32 to vector<4x8x8xf32>
    %131 = arith.mulf %129, %130 : vector<4x8x8xf32>
    %132 = vector.shape_cast %101 : vector<8x8xf32> to vector<1x8x8xf32>
    %133 = vector.broadcast %132 : vector<1x8x8xf32> to vector<4x8x8xf32>
    %134 = arith.addf %131, %133 : vector<4x8x8xf32>
    %cst_66 = arith.constant dense<0xFF800000> : vector<4x8xf32>
    %135 = vector.multi_reduction <maximumf>, %134, %cst_66 [2] : vector<4x8x8xf32> to vector<4x8xf32>
    %136 = vector.shape_cast %135 : vector<4x8xf32> to vector<4x8x1xf32>
    %137 = vector.broadcast %136 : vector<4x8x1xf32> to vector<4x8x8xf32>
    %138 = arith.subf %134, %137 : vector<4x8x8xf32>
    %139 = math.exp %138 : vector<4x8x8xf32>
    %cst_67 = arith.constant dense<0.000000e+00> : vector<4x8xf32>
    %140 = vector.multi_reduction <add>, %139, %cst_67 [2] : vector<4x8x8xf32> to vector<4x8xf32>
    %141 = vector.shape_cast %140 : vector<4x8xf32> to vector<4x8x1xf32>
    %142 = tpu.reciprocal %141 {approx = true} : vector<4x8x1xf32> -> vector<4x8x1xf32>
    %143 = vector.broadcast %142 : vector<4x8x1xf32> to vector<4x8x8xf32>
    %144 = arith.mulf %139, %143 : vector<4x8x8xf32>
    %145 = arith.truncf %144 : vector<4x8x8xf32> to vector<4x8x8xbf16>
    %cst_68 = arith.constant dense<0.000000e+00> : vector<4x8x32xf32>
    %146 = tpu.matmul %145, %128, %cst_68 {dimension_numbers = #tpu.dot_dimension_numbers<[2], [1], [1], [2], [0, 0, 0, 1, 1, 2], [0], [0]>} : vector<4x8x8xbf16>, vector<4x8x32xbf16>, vector<4x8x32xf32> -> vector<4x8x32xf32>
    %147 = tpu.transpose %146, [1, 0, 2] : vector<4x8x32xf32> -> vector<8x4x32xf32>
    %148 = vector.shape_cast %147 : vector<8x4x32xf32> to vector<8x128xf32>
    %149 = arith.truncf %148 : vector<8x128xf32> to vector<8x128xbf16>
    %cst_69 = arith.constant dense<0.000000e+00> : vector<8x128xf32>
    %150 = tpu.matmul %149, %106, %cst_69 {dimension_numbers = #tpu.dot_dimension_numbers<[1], [0], [0], [1], [0, 0, 1, 1], [], []>} : vector<8x128xbf16>, vector<128x128xbf16>, vector<8x128xf32> -> vector<8x128xf32>
    %151 = vector.broadcast %107 : vector<1x128xf32> to vector<8x128xf32>
    %152 = arith.addf %150, %151 : vector<8x128xf32>
    %153 = arith.addf %152, %95 : vector<8x128xf32>
    %cst_70 = arith.constant dense<0.000000e+00> : vector<8xf32>
    %154 = vector.multi_reduction <add>, %153, %cst_70 [1] : vector<8x128xf32> to vector<8xf32>
    %155 = vector.shape_cast %154 : vector<8xf32> to vector<8x1xf32>
    %cst_71 = arith.constant 1.280000e+02 : f32
    %156 = vector.broadcast %cst_71 : f32 to vector<8x1xf32>
    %157 = arith.divf %155, %156 : vector<8x1xf32>
    %158 = vector.broadcast %157 : vector<8x1xf32> to vector<8x128xf32>
    %159 = arith.subf %153, %158 : vector<8x128xf32>
    %160 = arith.mulf %159, %159 : vector<8x128xf32>
    %cst_72 = arith.constant dense<0.000000e+00> : vector<8xf32>
    %161 = vector.multi_reduction <add>, %160, %cst_72 [1] : vector<8x128xf32> to vector<8xf32>
    %162 = vector.shape_cast %161 : vector<8xf32> to vector<8x1xf32>
    %cst_73 = arith.constant 1.280000e+02 : f32
    %163 = vector.broadcast %cst_73 : f32 to vector<8x1xf32>
    %164 = arith.divf %162, %163 : vector<8x1xf32>
    %165 = vector.broadcast %157 : vector<8x1xf32> to vector<8x128xf32>
    %166 = arith.subf %153, %165 : vector<8x128xf32>
    %cst_74 = arith.constant 9.99999974E-6 : f32
    %167 = vector.broadcast %cst_74 : f32 to vector<8x1xf32>
    %168 = arith.addf %164, %167 : vector<8x1xf32>
    %169 = math.rsqrt %168 : vector<8x1xf32>
    %170 = vector.broadcast %169 : vector<8x1xf32> to vector<8x128xf32>
    %171 = arith.mulf %166, %170 : vector<8x128xf32>
    %172 = vector.broadcast %108 : vector<1x128xf32> to vector<8x128xf32>
    %173 = arith.mulf %171, %172 : vector<8x128xf32>
    %174 = vector.broadcast %109 : vector<1x128xf32> to vector<8x128xf32>
    %175 = arith.addf %173, %174 : vector<8x128xf32>
    %c0_75 = arith.constant 0 : index
    %c0_76 = arith.constant 0 : index
    %176 = vector.load %arg23[%c0_75, %c0_76] : memref<128x256xbf16, #tpu.memory_space<vmem>>, vector<128x256xbf16>
    %c0_77 = arith.constant 0 : index
    %c0_78 = arith.constant 0 : index
    %177 = vector.load %arg24[%c0_77, %c0_78] : memref<1x256xf32, #tpu.memory_space<vmem>>, vector<1x256xf32>
    %c0_79 = arith.constant 0 : index
    %c0_80 = arith.constant 0 : index
    %178 = vector.load %arg25[%c0_79, %c0_80] : memref<256x128xbf16, #tpu.memory_space<vmem>>, vector<256x128xbf16>
    %c0_81 = arith.constant 0 : index
    %c0_82 = arith.constant 0 : index
    %179 = vector.load %arg26[%c0_81, %c0_82] : memref<1x128xf32, #tpu.memory_space<vmem>>, vector<1x128xf32>
    %c0_83 = arith.constant 0 : index
    %c0_84 = arith.constant 0 : index
    %180 = vector.load %arg27[%c0_83, %c0_84] : memref<1x128xf32, #tpu.memory_space<vmem>>, vector<1x128xf32>
    %c0_85 = arith.constant 0 : index
    %c0_86 = arith.constant 0 : index
    %181 = vector.load %arg28[%c0_85, %c0_86] : memref<1x128xf32, #tpu.memory_space<vmem>>, vector<1x128xf32>
    %182 = arith.truncf %175 : vector<8x128xf32> to vector<8x128xbf16>
    %cst_87 = arith.constant dense<0.000000e+00> : vector<8x256xf32>
    %183 = tpu.matmul %182, %176, %cst_87 {dimension_numbers = #tpu.dot_dimension_numbers<[1], [0], [0], [1], [0, 0, 1, 1], [], []>} : vector<8x128xbf16>, vector<128x256xbf16>, vector<8x256xf32> -> vector<8x256xf32>
    %184 = vector.broadcast %177 : vector<1x256xf32> to vector<8x256xf32>
    %185 = arith.addf %183, %184 : vector<8x256xf32>
    %cst_88 = arith.constant 0.000000e+00 : f32
    %186 = vector.broadcast %cst_88 : f32 to vector<8x256xf32>
    %187 = arith.maximumf %185, %186 : vector<8x256xf32>
    %188 = arith.truncf %187 : vector<8x256xf32> to vector<8x256xbf16>
    %cst_89 = arith.constant dense<0.000000e+00> : vector<8x128xf32>
    %189 = tpu.matmul %188, %178, %cst_89 {dimension_numbers = #tpu.dot_dimension_numbers<[1], [0], [0], [1], [0, 0, 1, 1], [], []>} : vector<8x256xbf16>, vector<256x128xbf16>, vector<8x128xf32> -> vector<8x128xf32>
    %190 = vector.broadcast %179 : vector<1x128xf32> to vector<8x128xf32>
    %191 = arith.addf %189, %190 : vector<8x128xf32>
    %192 = arith.addf %191, %175 : vector<8x128xf32>
    %cst_90 = arith.constant dense<0.000000e+00> : vector<8xf32>
    %193 = vector.multi_reduction <add>, %192, %cst_90 [1] : vector<8x128xf32> to vector<8xf32>
    %194 = vector.shape_cast %193 : vector<8xf32> to vector<8x1xf32>
    %cst_91 = arith.constant 1.280000e+02 : f32
    %195 = vector.broadcast %cst_91 : f32 to vector<8x1xf32>
    %196 = arith.divf %194, %195 : vector<8x1xf32>
    %197 = vector.broadcast %196 : vector<8x1xf32> to vector<8x128xf32>
    %198 = arith.subf %192, %197 : vector<8x128xf32>
    %199 = arith.mulf %198, %198 : vector<8x128xf32>
    %cst_92 = arith.constant dense<0.000000e+00> : vector<8xf32>
    %200 = vector.multi_reduction <add>, %199, %cst_92 [1] : vector<8x128xf32> to vector<8xf32>
    %201 = vector.shape_cast %200 : vector<8xf32> to vector<8x1xf32>
    %cst_93 = arith.constant 1.280000e+02 : f32
    %202 = vector.broadcast %cst_93 : f32 to vector<8x1xf32>
    %203 = arith.divf %201, %202 : vector<8x1xf32>
    %204 = vector.broadcast %196 : vector<8x1xf32> to vector<8x128xf32>
    %205 = arith.subf %192, %204 : vector<8x128xf32>
    %cst_94 = arith.constant 9.99999974E-6 : f32
    %206 = vector.broadcast %cst_94 : f32 to vector<8x1xf32>
    %207 = arith.addf %203, %206 : vector<8x1xf32>
    %208 = math.rsqrt %207 : vector<8x1xf32>
    %209 = vector.broadcast %208 : vector<8x1xf32> to vector<8x128xf32>
    %210 = arith.mulf %205, %209 : vector<8x128xf32>
    %211 = vector.broadcast %180 : vector<1x128xf32> to vector<8x128xf32>
    %212 = arith.mulf %210, %211 : vector<8x128xf32>
    %213 = vector.broadcast %181 : vector<1x128xf32> to vector<8x128xf32>
    %214 = arith.addf %212, %213 : vector<8x128xf32>
    %c0_95 = arith.constant 0 : index
    %c0_96 = arith.constant 0 : index
    %c0_97 = arith.constant 0 : index
    %215 = vector.load %arg29[%c0_95, %c0_96, %c0_97] : memref<1x8x128xf32, #tpu.memory_space<vmem>>, vector<1x8x128xf32>
    %216 = vector.shape_cast %215 : vector<1x8x128xf32> to vector<8x128xf32>
    %217 = vector.shape_cast %214 : vector<8x128xf32> to vector<1x8x128xf32>
    tpu.vector_store %arg29[%c0_95, %c0_96, %c0_97], %217 {strides = array<i32>} : memref<1x8x128xf32, #tpu.memory_space<vmem>>, vector<1x8x128xf32>,
    return
  }
  func.func @transform_0(%arg0: i32, %arg1: i32) -> (i32, i32, i32) {
    %c0_i32 = arith.constant 0 : i32
    %c0_i32_0 = arith.constant 0 : i32
    return %arg0, %arg1, %c0_i32 : i32, i32, i32
  }
  func.func @transform_1(%arg0: i32, %arg1: i32) -> (i32, i32, i32) {
    %c0_i32 = arith.constant 0 : i32
    %c0_i32_0 = arith.constant 0 : i32
    %c0_i32_1 = arith.constant 0 : i32
    return %arg0, %c0_i32, %c0_i32_0 : i32, i32, i32
  }
  func.func @transform_2(%arg0: i32, %arg1: i32) -> (i32, i32, i32) {
    %c0_i32 = arith.constant 0 : i32
    %c0_i32_0 = arith.constant 0 : i32
    %c0_i32_1 = arith.constant 0 : i32
    return %arg0, %c0_i32, %c0_i32_0 : i32, i32, i32
  }
  func.func @transform_3(%arg0: i32, %arg1: i32) -> (i32, i32, i32) {
    %c0_i32 = arith.constant 0 : i32
    %c0_i32_0 = arith.constant 0 : i32
    %c0_i32_1 = arith.constant 0 : i32
    return %arg0, %c0_i32, %c0_i32_0 : i32, i32, i32
  }
  func.func @transform_4(%arg0: i32, %arg1: i32) -> (i32, i32, i32) {
    %c0_i32 = arith.constant 0 : i32
    %c0_i32_0 = arith.constant 0 : i32
    %c0_i32_1 = arith.constant 0 : i32
    return %arg0, %c0_i32, %c0_i32_0 : i32, i32, i32
  }
  func.func @transform_5(%arg0: i32, %arg1: i32) -> (i32, i32) {
    %c0_i32 = arith.constant 0 : i32
    %c0_i32_0 = arith.constant 0 : i32
    %c0_i32_1 = arith.constant 0 : i32
    return %c0_i32, %c0_i32_0 : i32, i32
  }
  func.func @transform_6(%arg0: i32, %arg1: i32) -> (i32, i32) {
    %c0_i32 = arith.constant 0 : i32
    %c0_i32_0 = arith.constant 0 : i32
    %c0_i32_1 = arith.constant 0 : i32
    return %c0_i32, %c0_i32_0 : i32, i32
  }
  func.func @transform_7(%arg0: i32, %arg1: i32) -> (i32, i32) {
    %c0_i32 = arith.constant 0 : i32
    %c0_i32_0 = arith.constant 0 : i32
    %c0_i32_1 = arith.constant 0 : i32
    return %c0_i32, %c0_i32_0 : i32, i32
  }
  func.func @transform_8(%arg0: i32, %arg1: i32) -> (i32, i32) {
    %c0_i32 = arith.constant 0 : i32
    %c0_i32_0 = arith.constant 0 : i32
    %c0_i32_1 = arith.constant 0 : i32
    return %c0_i32, %c0_i32_0 : i32, i32
  }
  func.func @transform_9(%arg0: i32, %arg1: i32) -> (i32, i32) {
    %c0_i32 = arith.constant 0 : i32
    %c0_i32_0 = arith.constant 0 : i32
    %c0_i32_1 = arith.constant 0 : i32
    return %c0_i32, %c0_i32_0 : i32, i32
  }
  func.func @transform_10(%arg0: i32, %arg1: i32) -> (i32, i32) {
    %c0_i32 = arith.constant 0 : i32
    %c0_i32_0 = arith.constant 0 : i32
    %c0_i32_1 = arith.constant 0 : i32
    return %c0_i32, %c0_i32_0 : i32, i32
  }
  func.func @transform_11(%arg0: i32, %arg1: i32) -> (i32, i32) {
    %c0_i32 = arith.constant 0 : i32
    %c0_i32_0 = arith.constant 0 : i32
    %c0_i32_1 = arith.constant 0 : i32
    return %c0_i32, %c0_i32_0 : i32, i32
  }
  func.func @transform_12(%arg0: i32, %arg1: i32) -> (i32, i32) {
    %c0_i32 = arith.constant 0 : i32
    %c0_i32_0 = arith.constant 0 : i32
    %c0_i32_1 = arith.constant 0 : i32
    return %c0_i32, %c0_i32_0 : i32, i32
  }
  func.func @transform_13(%arg0: i32, %arg1: i32) -> (i32, i32) {
    %c0_i32 = arith.constant 0 : i32
    %c0_i32_0 = arith.constant 0 : i32
    %c0_i32_1 = arith.constant 0 : i32
    return %c0_i32, %c0_i32_0 : i32, i32
  }
  func.func @transform_14(%arg0: i32, %arg1: i32) -> (i32, i32) {
    %c0_i32 = arith.constant 0 : i32
    %c0_i32_0 = arith.constant 0 : i32
    %c0_i32_1 = arith.constant 0 : i32
    return %c0_i32, %c0_i32_0 : i32, i32
  }
  func.func @transform_15(%arg0: i32, %arg1: i32) -> (i32, i32) {
    %c0_i32 = arith.constant 0 : i32
    %c0_i32_0 = arith.constant 0 : i32
    %c0_i32_1 = arith.constant 0 : i32
    return %c0_i32, %c0_i32_0 : i32, i32
  }
  func.func @transform_16(%arg0: i32, %arg1: i32) -> (i32, i32) {
    %c0_i32 = arith.constant 0 : i32
    %c0_i32_0 = arith.constant 0 : i32
    %c0_i32_1 = arith.constant 0 : i32
    return %c0_i32, %c0_i32_0 : i32, i32
  }
  func.func @transform_17(%arg0: i32, %arg1: i32) -> (i32, i32) {
    %c0_i32 = arith.constant 0 : i32
    %c0_i32_0 = arith.constant 0 : i32
    %c0_i32_1 = arith.constant 0 : i32
    return %c0_i32, %c0_i32_0 : i32, i32
  }
  func.func @transform_18(%arg0: i32, %arg1: i32) -> (i32, i32) {
    %c0_i32 = arith.constant 0 : i32
    %c0_i32_0 = arith.constant 0 : i32
    %c0_i32_1 = arith.constant 0 : i32
    return %c0_i32, %c0_i32_0 : i32, i32
  }
  func.func @transform_19(%arg0: i32, %arg1: i32) -> (i32, i32) {
    %c0_i32 = arith.constant 0 : i32
    %c0_i32_0 = arith.constant 0 : i32
    %c0_i32_1 = arith.constant 0 : i32
    return %c0_i32, %c0_i32_0 : i32, i32
  }
  func.func @transform_20(%arg0: i32, %arg1: i32) -> (i32, i32) {
    %c0_i32 = arith.constant 0 : i32
    %c0_i32_0 = arith.constant 0 : i32
    %c0_i32_1 = arith.constant 0 : i32
    return %c0_i32, %c0_i32_0 : i32, i32
  }
  func.func @transform_21(%arg0: i32, %arg1: i32) -> (i32, i32) {
    %c0_i32 = arith.constant 0 : i32
    %c0_i32_0 = arith.constant 0 : i32
    %c0_i32_1 = arith.constant 0 : i32
    return %c0_i32, %c0_i32_0 : i32, i32
  }
  func.func @transform_22(%arg0: i32, %arg1: i32) -> (i32, i32) {
    %c0_i32 = arith.constant 0 : i32
    %c0_i32_0 = arith.constant 0 : i32
    %c0_i32_1 = arith.constant 0 : i32
    return %c0_i32, %c0_i32_0 : i32, i32
  }
  func.func @transform_23(%arg0: i32, %arg1: i32) -> (i32, i32) {
    %c0_i32 = arith.constant 0 : i32
    %c0_i32_0 = arith.constant 0 : i32
    %c0_i32_1 = arith.constant 0 : i32
    return %c0_i32, %c0_i32_0 : i32, i32
  }
  func.func @transform_24(%arg0: i32, %arg1: i32) -> (i32, i32) {
    %c0_i32 = arith.constant 0 : i32
    %c0_i32_0 = arith.constant 0 : i32
    %c0_i32_1 = arith.constant 0 : i32
    return %c0_i32, %c0_i32_0 : i32, i32
  }
  func.func @transform_25(%arg0: i32, %arg1: i32) -> (i32, i32) {
    %c0_i32 = arith.constant 0 : i32
    %c0_i32_0 = arith.constant 0 : i32
    %c0_i32_1 = arith.constant 0 : i32
    return %c0_i32, %c0_i32_0 : i32, i32
  }
  func.func @transform_26(%arg0: i32, %arg1: i32) -> (i32, i32) {
    %c0_i32 = arith.constant 0 : i32
    %c0_i32_0 = arith.constant 0 : i32
    %c0_i32_1 = arith.constant 0 : i32
    return %c0_i32, %c0_i32_0 : i32, i32
  }
  func.func @transform_27(%arg0: i32, %arg1: i32) -> (i32, i32, i32) {
    %c0_i32 = arith.constant 0 : i32
    %c0_i32_0 = arith.constant 0 : i32
    return %arg0, %arg1, %c0_i32 : i32, i32, i32
  }
}

module attributes {stable_mosaic.version = 11 : i64} {
  func.func @_enc_layer_kernel(%arg0: i32, %arg1: i32, %arg2: memref<1x8x128xf32, #tpu.memory_space<vmem>>, %arg3: memref<1x8x128xf32, #tpu.memory_space<vmem>>, %arg4: memref<1x1x8xf32, #tpu.memory_space<vmem>>, %arg5: memref<128x128xbf16, #tpu.memory_space<vmem>>, %arg6: memref<1x128xf32, #tpu.memory_space<vmem>>, %arg7: memref<128x256xbf16, #tpu.memory_space<vmem>>, %arg8: memref<1x256xf32, #tpu.memory_space<vmem>>, %arg9: memref<128x128xbf16, #tpu.memory_space<vmem>>, %arg10: memref<1x128xf32, #tpu.memory_space<vmem>>, %arg11: memref<1x128xf32, #tpu.memory_space<vmem>>, %arg12: memref<1x128xf32, #tpu.memory_space<vmem>>, %arg13: memref<128x256xbf16, #tpu.memory_space<vmem>>, %arg14: memref<1x256xf32, #tpu.memory_space<vmem>>, %arg15: memref<256x128xbf16, #tpu.memory_space<vmem>>, %arg16: memref<1x128xf32, #tpu.memory_space<vmem>>, %arg17: memref<1x128xf32, #tpu.memory_space<vmem>>, %arg18: memref<1x128xf32, #tpu.memory_space<vmem>>, %arg19: memref<1x8x128xf32, #tpu.memory_space<vmem>>) attributes {dimension_semantics = [#tpu.dimension_semantics<parallel>, #tpu.dimension_semantics<parallel>], iteration_bounds = array<i64: 2, 1>, scalar_prefetch = 0 : i64, scratch_operands = 0 : i64, tpu.core_type = #tpu.core_type<tc>, window_params = [{transform_indices = @transform_0, window_bounds = array<i64: 1, 8, 128>}, {transform_indices = @transform_1, window_bounds = array<i64: 1, 8, 128>}, {transform_indices = @transform_2, window_bounds = array<i64: 1, 1, 8>}, {pipeline_mode = #tpu.pipeline_mode<synchronous>, transform_indices = @transform_3, window_bounds = array<i64: 128, 128>}, {pipeline_mode = #tpu.pipeline_mode<synchronous>, transform_indices = @transform_4, window_bounds = array<i64: 1, 128>}, {pipeline_mode = #tpu.pipeline_mode<synchronous>, transform_indices = @transform_5, window_bounds = array<i64: 128, 256>}, {pipeline_mode = #tpu.pipeline_mode<synchronous>, transform_indices = @transform_6, window_bounds = array<i64: 1, 256>}, {pipeline_mode = #tpu.pipeline_mode<synchronous>, transform_indices = @transform_7, window_bounds = array<i64: 128, 128>}, {pipeline_mode = #tpu.pipeline_mode<synchronous>, transform_indices = @transform_8, window_bounds = array<i64: 1, 128>}, {pipeline_mode = #tpu.pipeline_mode<synchronous>, transform_indices = @transform_9, window_bounds = array<i64: 1, 128>}, {pipeline_mode = #tpu.pipeline_mode<synchronous>, transform_indices = @transform_10, window_bounds = array<i64: 1, 128>}, {pipeline_mode = #tpu.pipeline_mode<synchronous>, transform_indices = @transform_11, window_bounds = array<i64: 128, 256>}, {pipeline_mode = #tpu.pipeline_mode<synchronous>, transform_indices = @transform_12, window_bounds = array<i64: 1, 256>}, {pipeline_mode = #tpu.pipeline_mode<synchronous>, transform_indices = @transform_13, window_bounds = array<i64: 256, 128>}, {pipeline_mode = #tpu.pipeline_mode<synchronous>, transform_indices = @transform_14, window_bounds = array<i64: 1, 128>}, {pipeline_mode = #tpu.pipeline_mode<synchronous>, transform_indices = @transform_15, window_bounds = array<i64: 1, 128>}, {pipeline_mode = #tpu.pipeline_mode<synchronous>, transform_indices = @transform_16, window_bounds = array<i64: 1, 128>}, {transform_indices = @transform_17, window_bounds = array<i64: 1, 8, 128>}]} {
    %c0 = arith.constant 0 : index
    %c0_0 = arith.constant 0 : index
    %c0_1 = arith.constant 0 : index
    %0 = vector.load %arg2[%c0, %c0_0, %c0_1] : memref<1x8x128xf32, #tpu.memory_space<vmem>>, vector<1x8x128xf32>
    %1 = vector.shape_cast %0 : vector<1x8x128xf32> to vector<8x128xf32>
    %c0_2 = arith.constant 0 : index
    %c0_3 = arith.constant 0 : index
    %c0_4 = arith.constant 0 : index
    %2 = vector.load %arg3[%c0_2, %c0_3, %c0_4] : memref<1x8x128xf32, #tpu.memory_space<vmem>>, vector<1x8x128xf32>
    %3 = vector.shape_cast %2 : vector<1x8x128xf32> to vector<8x128xf32>
    %c0_5 = arith.constant 0 : index
    %c0_6 = arith.constant 0 : index
    %c0_7 = arith.constant 0 : index
    %4 = vector.load %arg4[%c0_5, %c0_6, %c0_7] : memref<1x1x8xf32, #tpu.memory_space<vmem>>, vector<1x1x8xf32>
    %5 = vector.shape_cast %4 : vector<1x1x8xf32> to vector<1x8xf32>
    %6 = vector.shape_cast %5 : vector<1x8xf32> to vector<1x8xf32>
    %7 = vector.broadcast %6 : vector<1x8xf32> to vector<8x8xf32>
    %cst = arith.constant -1.000000e+30 : f32
    %8 = vector.broadcast %cst : f32 to vector<8x8xf32>
    %9 = arith.mulf %7, %8 : vector<8x8xf32>
    %c0_8 = arith.constant 0 : index
    %c0_9 = arith.constant 0 : index
    %10 = vector.load %arg5[%c0_8, %c0_9] : memref<128x128xbf16, #tpu.memory_space<vmem>>, vector<128x128xbf16>
    %c0_10 = arith.constant 0 : index
    %c0_11 = arith.constant 0 : index
    %11 = vector.load %arg6[%c0_10, %c0_11] : memref<1x128xf32, #tpu.memory_space<vmem>>, vector<1x128xf32>
    %c0_12 = arith.constant 0 : index
    %c0_13 = arith.constant 0 : index
    %12 = vector.load %arg7[%c0_12, %c0_13] : memref<128x256xbf16, #tpu.memory_space<vmem>>, vector<128x256xbf16>
    %c0_14 = arith.constant 0 : index
    %c0_15 = arith.constant 0 : index
    %13 = vector.load %arg8[%c0_14, %c0_15] : memref<1x256xf32, #tpu.memory_space<vmem>>, vector<1x256xf32>
    %c0_16 = arith.constant 0 : index
    %c0_17 = arith.constant 0 : index
    %14 = vector.load %arg9[%c0_16, %c0_17] : memref<128x128xbf16, #tpu.memory_space<vmem>>, vector<128x128xbf16>
    %c0_18 = arith.constant 0 : index
    %c0_19 = arith.constant 0 : index
    %15 = vector.load %arg10[%c0_18, %c0_19] : memref<1x128xf32, #tpu.memory_space<vmem>>, vector<1x128xf32>
    %c0_20 = arith.constant 0 : index
    %c0_21 = arith.constant 0 : index
    %16 = vector.load %arg11[%c0_20, %c0_21] : memref<1x128xf32, #tpu.memory_space<vmem>>, vector<1x128xf32>
    %c0_22 = arith.constant 0 : index
    %c0_23 = arith.constant 0 : index
    %17 = vector.load %arg12[%c0_22, %c0_23] : memref<1x128xf32, #tpu.memory_space<vmem>>, vector<1x128xf32>
    %18 = arith.truncf %1 : vector<8x128xf32> to vector<8x128xbf16>
    %cst_24 = arith.constant dense<0.000000e+00> : vector<8x128xf32>
    %19 = tpu.matmul %18, %10, %cst_24 {dimension_numbers = #tpu.dot_dimension_numbers<[1], [0], [0], [1], [0, 0, 1, 1], [], []>} : vector<8x128xbf16>, vector<128x128xbf16>, vector<8x128xf32> -> vector<8x128xf32>
    %20 = vector.broadcast %11 : vector<1x128xf32> to vector<8x128xf32>
    %21 = arith.addf %19, %20 : vector<8x128xf32>
    %22 = arith.truncf %3 : vector<8x128xf32> to vector<8x128xbf16>
    %cst_25 = arith.constant dense<0.000000e+00> : vector<8x256xf32>
    %23 = tpu.matmul %22, %12, %cst_25 {dimension_numbers = #tpu.dot_dimension_numbers<[1], [0], [0], [1], [0, 0, 1, 1], [], []>} : vector<8x128xbf16>, vector<128x256xbf16>, vector<8x256xf32> -> vector<8x256xf32>
    %24 = vector.broadcast %13 : vector<1x256xf32> to vector<8x256xf32>
    %25 = arith.addf %23, %24 : vector<8x256xf32>
    %26 = vector.extract_strided_slice %25 {offsets = [0, 0], sizes = [8, 128], strides = [1, 1]} : vector<8x256xf32> to vector<8x128xf32>
    %27 = vector.extract_strided_slice %25 {offsets = [0, 128], sizes = [8, 128], strides = [1, 1]} : vector<8x256xf32> to vector<8x128xf32>
    %28 = vector.shape_cast %21 : vector<8x128xf32> to vector<8x4x32xf32>
    %29 = tpu.transpose %28, [1, 0, 2] : vector<8x4x32xf32> -> vector<4x8x32xf32>
    %30 = arith.truncf %29 : vector<4x8x32xf32> to vector<4x8x32xbf16>
    %31 = vector.shape_cast %26 : vector<8x128xf32> to vector<8x4x32xf32>
    %32 = tpu.transpose %31, [1, 0, 2] : vector<8x4x32xf32> -> vector<4x8x32xf32>
    %33 = arith.truncf %32 : vector<4x8x32xf32> to vector<4x8x32xbf16>
    %34 = vector.shape_cast %27 : vector<8x128xf32> to vector<8x4x32xf32>
    %35 = tpu.transpose %34, [1, 0, 2] : vector<8x4x32xf32> -> vector<4x8x32xf32>
    %36 = arith.truncf %35 : vector<4x8x32xf32> to vector<4x8x32xbf16>
    %cst_26 = arith.constant dense<0.000000e+00> : vector<4x8x8xf32>
    %37 = tpu.matmul %30, %33, %cst_26 {dimension_numbers = #tpu.dot_dimension_numbers<[2], [2], [1], [1], [0, 0, 0, 1, 1, 1], [0], [0]>} : vector<4x8x32xbf16>, vector<4x8x32xbf16>, vector<4x8x8xf32> -> vector<4x8x8xf32>
    %cst_27 = arith.constant 0.176776692 : f32
    %38 = vector.broadcast %cst_27 : f32 to vector<4x8x8xf32>
    %39 = arith.mulf %37, %38 : vector<4x8x8xf32>
    %40 = vector.shape_cast %9 : vector<8x8xf32> to vector<1x8x8xf32>
    %41 = vector.broadcast %40 : vector<1x8x8xf32> to vector<4x8x8xf32>
    %42 = arith.addf %39, %41 : vector<4x8x8xf32>
    %cst_28 = arith.constant dense<0xFF800000> : vector<4x8xf32>
    %43 = vector.multi_reduction <maximumf>, %42, %cst_28 [2] : vector<4x8x8xf32> to vector<4x8xf32>
    %44 = vector.shape_cast %43 : vector<4x8xf32> to vector<4x8x1xf32>
    %45 = vector.broadcast %44 : vector<4x8x1xf32> to vector<4x8x8xf32>
    %46 = arith.subf %42, %45 : vector<4x8x8xf32>
    %47 = math.exp %46 : vector<4x8x8xf32>
    %cst_29 = arith.constant dense<0.000000e+00> : vector<4x8xf32>
    %48 = vector.multi_reduction <add>, %47, %cst_29 [2] : vector<4x8x8xf32> to vector<4x8xf32>
    %49 = vector.shape_cast %48 : vector<4x8xf32> to vector<4x8x1xf32>
    %50 = tpu.reciprocal %49 {approx = true} : vector<4x8x1xf32> -> vector<4x8x1xf32>
    %51 = vector.broadcast %50 : vector<4x8x1xf32> to vector<4x8x8xf32>
    %52 = arith.mulf %47, %51 : vector<4x8x8xf32>
    %53 = arith.truncf %52 : vector<4x8x8xf32> to vector<4x8x8xbf16>
    %cst_30 = arith.constant dense<0.000000e+00> : vector<4x8x32xf32>
    %54 = tpu.matmul %53, %36, %cst_30 {dimension_numbers = #tpu.dot_dimension_numbers<[2], [1], [1], [2], [0, 0, 0, 1, 1, 2], [0], [0]>} : vector<4x8x8xbf16>, vector<4x8x32xbf16>, vector<4x8x32xf32> -> vector<4x8x32xf32>
    %55 = tpu.transpose %54, [1, 0, 2] : vector<4x8x32xf32> -> vector<8x4x32xf32>
    %56 = vector.shape_cast %55 : vector<8x4x32xf32> to vector<8x128xf32>
    %57 = arith.truncf %56 : vector<8x128xf32> to vector<8x128xbf16>
    %cst_31 = arith.constant dense<0.000000e+00> : vector<8x128xf32>
    %58 = tpu.matmul %57, %14, %cst_31 {dimension_numbers = #tpu.dot_dimension_numbers<[1], [0], [0], [1], [0, 0, 1, 1], [], []>} : vector<8x128xbf16>, vector<128x128xbf16>, vector<8x128xf32> -> vector<8x128xf32>
    %59 = vector.broadcast %15 : vector<1x128xf32> to vector<8x128xf32>
    %60 = arith.addf %58, %59 : vector<8x128xf32>
    %61 = arith.addf %60, %1 : vector<8x128xf32>
    %cst_32 = arith.constant dense<0.000000e+00> : vector<8xf32>
    %62 = vector.multi_reduction <add>, %61, %cst_32 [1] : vector<8x128xf32> to vector<8xf32>
    %63 = vector.shape_cast %62 : vector<8xf32> to vector<8x1xf32>
    %cst_33 = arith.constant 1.280000e+02 : f32
    %64 = vector.broadcast %cst_33 : f32 to vector<8x1xf32>
    %65 = arith.divf %63, %64 : vector<8x1xf32>
    %66 = vector.broadcast %65 : vector<8x1xf32> to vector<8x128xf32>
    %67 = arith.subf %61, %66 : vector<8x128xf32>
    %68 = arith.mulf %67, %67 : vector<8x128xf32>
    %cst_34 = arith.constant dense<0.000000e+00> : vector<8xf32>
    %69 = vector.multi_reduction <add>, %68, %cst_34 [1] : vector<8x128xf32> to vector<8xf32>
    %70 = vector.shape_cast %69 : vector<8xf32> to vector<8x1xf32>
    %cst_35 = arith.constant 1.280000e+02 : f32
    %71 = vector.broadcast %cst_35 : f32 to vector<8x1xf32>
    %72 = arith.divf %70, %71 : vector<8x1xf32>
    %73 = vector.broadcast %65 : vector<8x1xf32> to vector<8x128xf32>
    %74 = arith.subf %61, %73 : vector<8x128xf32>
    %cst_36 = arith.constant 9.99999974E-6 : f32
    %75 = vector.broadcast %cst_36 : f32 to vector<8x1xf32>
    %76 = arith.addf %72, %75 : vector<8x1xf32>
    %77 = math.rsqrt %76 : vector<8x1xf32>
    %78 = vector.broadcast %77 : vector<8x1xf32> to vector<8x128xf32>
    %79 = arith.mulf %74, %78 : vector<8x128xf32>
    %80 = vector.broadcast %16 : vector<1x128xf32> to vector<8x128xf32>
    %81 = arith.mulf %79, %80 : vector<8x128xf32>
    %82 = vector.broadcast %17 : vector<1x128xf32> to vector<8x128xf32>
    %83 = arith.addf %81, %82 : vector<8x128xf32>
    %c0_37 = arith.constant 0 : index
    %c0_38 = arith.constant 0 : index
    %84 = vector.load %arg13[%c0_37, %c0_38] : memref<128x256xbf16, #tpu.memory_space<vmem>>, vector<128x256xbf16>
    %c0_39 = arith.constant 0 : index
    %c0_40 = arith.constant 0 : index
    %85 = vector.load %arg14[%c0_39, %c0_40] : memref<1x256xf32, #tpu.memory_space<vmem>>, vector<1x256xf32>
    %c0_41 = arith.constant 0 : index
    %c0_42 = arith.constant 0 : index
    %86 = vector.load %arg15[%c0_41, %c0_42] : memref<256x128xbf16, #tpu.memory_space<vmem>>, vector<256x128xbf16>
    %c0_43 = arith.constant 0 : index
    %c0_44 = arith.constant 0 : index
    %87 = vector.load %arg16[%c0_43, %c0_44] : memref<1x128xf32, #tpu.memory_space<vmem>>, vector<1x128xf32>
    %c0_45 = arith.constant 0 : index
    %c0_46 = arith.constant 0 : index
    %88 = vector.load %arg17[%c0_45, %c0_46] : memref<1x128xf32, #tpu.memory_space<vmem>>, vector<1x128xf32>
    %c0_47 = arith.constant 0 : index
    %c0_48 = arith.constant 0 : index
    %89 = vector.load %arg18[%c0_47, %c0_48] : memref<1x128xf32, #tpu.memory_space<vmem>>, vector<1x128xf32>
    %90 = arith.truncf %83 : vector<8x128xf32> to vector<8x128xbf16>
    %cst_49 = arith.constant dense<0.000000e+00> : vector<8x256xf32>
    %91 = tpu.matmul %90, %84, %cst_49 {dimension_numbers = #tpu.dot_dimension_numbers<[1], [0], [0], [1], [0, 0, 1, 1], [], []>} : vector<8x128xbf16>, vector<128x256xbf16>, vector<8x256xf32> -> vector<8x256xf32>
    %92 = vector.broadcast %85 : vector<1x256xf32> to vector<8x256xf32>
    %93 = arith.addf %91, %92 : vector<8x256xf32>
    %cst_50 = arith.constant 0.000000e+00 : f32
    %94 = vector.broadcast %cst_50 : f32 to vector<8x256xf32>
    %95 = arith.maximumf %93, %94 : vector<8x256xf32>
    %96 = arith.truncf %95 : vector<8x256xf32> to vector<8x256xbf16>
    %cst_51 = arith.constant dense<0.000000e+00> : vector<8x128xf32>
    %97 = tpu.matmul %96, %86, %cst_51 {dimension_numbers = #tpu.dot_dimension_numbers<[1], [0], [0], [1], [0, 0, 1, 1], [], []>} : vector<8x256xbf16>, vector<256x128xbf16>, vector<8x128xf32> -> vector<8x128xf32>
    %98 = vector.broadcast %87 : vector<1x128xf32> to vector<8x128xf32>
    %99 = arith.addf %97, %98 : vector<8x128xf32>
    %100 = arith.addf %99, %83 : vector<8x128xf32>
    %cst_52 = arith.constant dense<0.000000e+00> : vector<8xf32>
    %101 = vector.multi_reduction <add>, %100, %cst_52 [1] : vector<8x128xf32> to vector<8xf32>
    %102 = vector.shape_cast %101 : vector<8xf32> to vector<8x1xf32>
    %cst_53 = arith.constant 1.280000e+02 : f32
    %103 = vector.broadcast %cst_53 : f32 to vector<8x1xf32>
    %104 = arith.divf %102, %103 : vector<8x1xf32>
    %105 = vector.broadcast %104 : vector<8x1xf32> to vector<8x128xf32>
    %106 = arith.subf %100, %105 : vector<8x128xf32>
    %107 = arith.mulf %106, %106 : vector<8x128xf32>
    %cst_54 = arith.constant dense<0.000000e+00> : vector<8xf32>
    %108 = vector.multi_reduction <add>, %107, %cst_54 [1] : vector<8x128xf32> to vector<8xf32>
    %109 = vector.shape_cast %108 : vector<8xf32> to vector<8x1xf32>
    %cst_55 = arith.constant 1.280000e+02 : f32
    %110 = vector.broadcast %cst_55 : f32 to vector<8x1xf32>
    %111 = arith.divf %109, %110 : vector<8x1xf32>
    %112 = vector.broadcast %104 : vector<8x1xf32> to vector<8x128xf32>
    %113 = arith.subf %100, %112 : vector<8x128xf32>
    %cst_56 = arith.constant 9.99999974E-6 : f32
    %114 = vector.broadcast %cst_56 : f32 to vector<8x1xf32>
    %115 = arith.addf %111, %114 : vector<8x1xf32>
    %116 = math.rsqrt %115 : vector<8x1xf32>
    %117 = vector.broadcast %116 : vector<8x1xf32> to vector<8x128xf32>
    %118 = arith.mulf %113, %117 : vector<8x128xf32>
    %119 = vector.broadcast %88 : vector<1x128xf32> to vector<8x128xf32>
    %120 = arith.mulf %118, %119 : vector<8x128xf32>
    %121 = vector.broadcast %89 : vector<1x128xf32> to vector<8x128xf32>
    %122 = arith.addf %120, %121 : vector<8x128xf32>
    %c0_57 = arith.constant 0 : index
    %c0_58 = arith.constant 0 : index
    %c0_59 = arith.constant 0 : index
    %123 = vector.load %arg19[%c0_57, %c0_58, %c0_59] : memref<1x8x128xf32, #tpu.memory_space<vmem>>, vector<1x8x128xf32>
    %124 = vector.shape_cast %123 : vector<1x8x128xf32> to vector<8x128xf32>
    %125 = vector.shape_cast %122 : vector<8x128xf32> to vector<1x8x128xf32>
    tpu.vector_store %arg19[%c0_57, %c0_58, %c0_59], %125 {strides = array<i32>} : memref<1x8x128xf32, #tpu.memory_space<vmem>>, vector<1x8x128xf32>,
    return
  }
  func.func @transform_0(%arg0: i32, %arg1: i32) -> (i32, i32, i32) {
    %c0_i32 = arith.constant 0 : i32
    %c0_i32_0 = arith.constant 0 : i32
    return %arg0, %arg1, %c0_i32 : i32, i32, i32
  }
  func.func @transform_1(%arg0: i32, %arg1: i32) -> (i32, i32, i32) {
    %c0_i32 = arith.constant 0 : i32
    %c0_i32_0 = arith.constant 0 : i32
    %c0_i32_1 = arith.constant 0 : i32
    return %arg0, %c0_i32, %c0_i32_0 : i32, i32, i32
  }
  func.func @transform_2(%arg0: i32, %arg1: i32) -> (i32, i32, i32) {
    %c0_i32 = arith.constant 0 : i32
    %c0_i32_0 = arith.constant 0 : i32
    %c0_i32_1 = arith.constant 0 : i32
    return %arg0, %c0_i32, %c0_i32_0 : i32, i32, i32
  }
  func.func @transform_3(%arg0: i32, %arg1: i32) -> (i32, i32) {
    %c0_i32 = arith.constant 0 : i32
    %c0_i32_0 = arith.constant 0 : i32
    %c0_i32_1 = arith.constant 0 : i32
    return %c0_i32, %c0_i32_0 : i32, i32
  }
  func.func @transform_4(%arg0: i32, %arg1: i32) -> (i32, i32) {
    %c0_i32 = arith.constant 0 : i32
    %c0_i32_0 = arith.constant 0 : i32
    %c0_i32_1 = arith.constant 0 : i32
    return %c0_i32, %c0_i32_0 : i32, i32
  }
  func.func @transform_5(%arg0: i32, %arg1: i32) -> (i32, i32) {
    %c0_i32 = arith.constant 0 : i32
    %c0_i32_0 = arith.constant 0 : i32
    %c0_i32_1 = arith.constant 0 : i32
    return %c0_i32, %c0_i32_0 : i32, i32
  }
  func.func @transform_6(%arg0: i32, %arg1: i32) -> (i32, i32) {
    %c0_i32 = arith.constant 0 : i32
    %c0_i32_0 = arith.constant 0 : i32
    %c0_i32_1 = arith.constant 0 : i32
    return %c0_i32, %c0_i32_0 : i32, i32
  }
  func.func @transform_7(%arg0: i32, %arg1: i32) -> (i32, i32) {
    %c0_i32 = arith.constant 0 : i32
    %c0_i32_0 = arith.constant 0 : i32
    %c0_i32_1 = arith.constant 0 : i32
    return %c0_i32, %c0_i32_0 : i32, i32
  }
  func.func @transform_8(%arg0: i32, %arg1: i32) -> (i32, i32) {
    %c0_i32 = arith.constant 0 : i32
    %c0_i32_0 = arith.constant 0 : i32
    %c0_i32_1 = arith.constant 0 : i32
    return %c0_i32, %c0_i32_0 : i32, i32
  }
  func.func @transform_9(%arg0: i32, %arg1: i32) -> (i32, i32) {
    %c0_i32 = arith.constant 0 : i32
    %c0_i32_0 = arith.constant 0 : i32
    %c0_i32_1 = arith.constant 0 : i32
    return %c0_i32, %c0_i32_0 : i32, i32
  }
  func.func @transform_10(%arg0: i32, %arg1: i32) -> (i32, i32) {
    %c0_i32 = arith.constant 0 : i32
    %c0_i32_0 = arith.constant 0 : i32
    %c0_i32_1 = arith.constant 0 : i32
    return %c0_i32, %c0_i32_0 : i32, i32
  }
  func.func @transform_11(%arg0: i32, %arg1: i32) -> (i32, i32) {
    %c0_i32 = arith.constant 0 : i32
    %c0_i32_0 = arith.constant 0 : i32
    %c0_i32_1 = arith.constant 0 : i32
    return %c0_i32, %c0_i32_0 : i32, i32
  }
  func.func @transform_12(%arg0: i32, %arg1: i32) -> (i32, i32) {
    %c0_i32 = arith.constant 0 : i32
    %c0_i32_0 = arith.constant 0 : i32
    %c0_i32_1 = arith.constant 0 : i32
    return %c0_i32, %c0_i32_0 : i32, i32
  }
  func.func @transform_13(%arg0: i32, %arg1: i32) -> (i32, i32) {
    %c0_i32 = arith.constant 0 : i32
    %c0_i32_0 = arith.constant 0 : i32
    %c0_i32_1 = arith.constant 0 : i32
    return %c0_i32, %c0_i32_0 : i32, i32
  }
  func.func @transform_14(%arg0: i32, %arg1: i32) -> (i32, i32) {
    %c0_i32 = arith.constant 0 : i32
    %c0_i32_0 = arith.constant 0 : i32
    %c0_i32_1 = arith.constant 0 : i32
    return %c0_i32, %c0_i32_0 : i32, i32
  }
  func.func @transform_15(%arg0: i32, %arg1: i32) -> (i32, i32) {
    %c0_i32 = arith.constant 0 : i32
    %c0_i32_0 = arith.constant 0 : i32
    %c0_i32_1 = arith.constant 0 : i32
    return %c0_i32, %c0_i32_0 : i32, i32
  }
  func.func @transform_16(%arg0: i32, %arg1: i32) -> (i32, i32) {
    %c0_i32 = arith.constant 0 : i32
    %c0_i32_0 = arith.constant 0 : i32
    %c0_i32_1 = arith.constant 0 : i32
    return %c0_i32, %c0_i32_0 : i32, i32
  }
  func.func @transform_17(%arg0: i32, %arg1: i32) -> (i32, i32, i32) {
    %c0_i32 = arith.constant 0 : i32
    %c0_i32_0 = arith.constant 0 : i32
    return %arg0, %arg1, %c0_i32 : i32, i32, i32
  }
}

</mosaic_0001>

<llo_original>
// kernel: transformer_forward.9
$region0: #{transformer_forward.9}
  #allocation0 [shape = 'u32[]', space=smem, size = 0x4, offset = 0x4, fixed_abs, tag = 'smem constant byte address 0x4 - core index']
  #allocation1 [shape = 'u32[72,128]{1,0:T(1,128)}', space=vmem, size = 0x9000, scoped, tag = 'internal scratch']
  %s0 = inlined_call_operand.vmem [shape: bf16[16,128], index: 0, kind: input, shape index: {}]
  %s1 = inlined_call_operand.vmem [shape: bf16[128,128], index: 1, kind: input, shape index: {}]
  %s2 = inlined_call_operand.vmem [shape: f32[1,128], index: 2, kind: input, shape index: {}]
  %s3 = inlined_call_operand.hbm [shape: f32[16,128], index: 3, kind: output, shape index: {}]
  %s4 = sld [smem:[#allocation0]]
  $region22: #{transformer_forward.9} parent=0
    _
  %s6 = ssub.s32 1, %s4
  %s7 = scalar_select 0, %s6, %s4
  $region1: #{transformer_forward.9} parent=0
    #allocation2 [shape = 'u8[8192]{0}', space=vmem, size = 0x2000, scoped, tag = 'output window, operand 0, single buffered']
    #allocation3 [shape = 's32[1]{0}', space=sflag, size = 0x4, scoped, tag = 'scoped memory for transformer_forward.9']
    %8 = vsyncpa [#allocation3], 0
    // Predicated region
    $region2: #{transformer_forward.9} parent=1 // pred_check
      _
    $region3: #{transformer_forward.9} parent=1 // pred_check_branch
      %10 = sbr.rel (0) target = $region5
    $region4: #{transformer_forward.9} parent=1 // pred_region
      _
    $region5: #{transformer_forward.9} parent=1 // pred_fallthru
      _
    // Predicated region
    $region6: #{transformer_forward.9} parent=1 // pred_check
      _
    $region7: #{transformer_forward.9} parent=1 // pred_check_branch
      %12 = sbr.rel (0) target = $region9
    $region8: #{transformer_forward.9} parent=1 // pred_region
      _
    $region9: #{transformer_forward.9} parent=1 // pred_fallthru
      _
    // Predicated region
    $region10: #{transformer_forward.9} parent=1 // pred_check
      _
    $region11: #{transformer_forward.9} parent=1 // pred_check_branch
      %14 = sbr.rel (0) target = $region13
    $region12: #{transformer_forward.9} parent=1 // pred_region
      _
    $region13: #{transformer_forward.9} parent=1 // pred_fallthru
      _
    %v15 = vld [vmem:[%s0] sm:$0xf]
    %v16 = vld [vmem:[%s0 + $0x4] sm:$0xf]
    %v17 = vld [vmem:[%s1] sm:$0xf]
    %v18 = vld [vmem:[%s1 + $0x4] sm:$0xf]
    %v19 = vld [vmem:[%s1 + $0x8] sm:$0xf]
    %v20 = vld [vmem:[%s1 + $0xc] sm:$0xf]
    %v21 = vld [vmem:[%s1 + $0x10] sm:$0xf]
    %v22 = vld [vmem:[%s1 + $0x14] sm:$0xf]
    %v23 = vld [vmem:[%s1 + $0x18] sm:$0xf]
    %v24 = vld [vmem:[%s1 + $0x1c] sm:$0xf]
    %v25 = vld [vmem:[%s1 + $0x20] sm:$0xf]
    %v26 = vld [vmem:[%s1 + $0x24] sm:$0xf]
    %v27 = vld [vmem:[%s1 + $0x28] sm:$0xf]
    %v28 = vld [vmem:[%s1 + $0x2c] sm:$0xf]
    %v29 = vld [vmem:[%s1 + $0x30] sm:$0xf]
    %v30 = vld [vmem:[%s1 + $0x34] sm:$0xf]
    %v31 = vld [vmem:[%s1 + $0x38] sm:$0xf]
    %v32 = vld [vmem:[%s1 + $0x3c] sm:$0xf]
    %v33 = vld [vmem:[%s2] sm:$0x1]
    %v35 = vperm.slane %v33, 0
    %v39 = vunpack.c.l.b16 %v15
    %v40 = vunpack.c.l.b16 %v16
    %v41 = vpack.c.b16 %v40, %v39
    %v59 = vunpack.c.l.b16 %v17
    %v60 = vunpack.c.l.b16 %v18
    %v61 = vunpack.c.l.b16 %v19
    %v62 = vunpack.c.l.b16 %v20
    %v63 = vunpack.c.l.b16 %v21
    %v64 = vunpack.c.l.b16 %v22
    %v65 = vunpack.c.l.b16 %v23
    %v66 = vunpack.c.l.b16 %v24
    %v67 = vunpack.c.l.b16 %v25
    %v68 = vunpack.c.l.b16 %v26
    %v69 = vunpack.c.l.b16 %v27
    %v70 = vunpack.c.l.b16 %v28
    %v71 = vunpack.c.l.b16 %v29
    %v72 = vunpack.c.l.b16 %v30
    %v73 = vunpack.c.l.b16 %v31
    %v74 = vunpack.c.l.b16 %v32
    %v75 = vpack.c.b16 %v60, %v59
    %v76 = vpack.c.b16 %v62, %v61
    %v77 = vpack.c.b16 %v64, %v63
    %v78 = vpack.c.b16 %v66, %v65
    %v79 = vpack.c.b16 %v68, %v67
    %v80 = vpack.c.b16 %v70, %v69
    %v81 = vpack.c.b16 %v72, %v71
    %v82 = vpack.c.b16 %v74, %v73
    %91 = vmatpush.bf16.msra.mxu0 %v82
    %92 = vmatpush.bf16.msra.mxu0 %v81
    %93 = vmatpush.bf16.msra.mxu0 %v80
    %94 = vmatpush.bf16.msra.mxu0 %v79
    %95 = vmatpush.bf16.msra.mxu0 %v78
    %96 = vmatpush.bf16.msra.mxu0 %v77
    %97 = vmatpush.bf16.msra.mxu0 %v76
    %98 = vmatpush.bf16.msra.mxu0 %v75
    %99 = vmatmul.bf16.gmra.mxu0 %v41
    %v100 = vpop.f32.mrf.mxu0
    %v101 = vadd.f32 %v35, %v100
    %v102 = vpop.f32.mrf.mxu0
    %v103 = vadd.f32 %v35, %v102
    %104 = vdwg.mxu0
    %105 = vst [vmem:[#allocation2] sm:$0xff] %v101
    %106 = vst [vmem:[#allocation2 + $0x8] sm:$0xff] %v103
    // Predicated region
    $region14: #{transformer_forward.9} parent=1 // pred_check
      _
    $region15: #{transformer_forward.9} parent=1 // pred_check_branch
      %108 = sbr.rel (0) target = $region17
    $region16: #{transformer_forward.9} parent=1 // pred_region
      %110 = vsyncadd [#allocation3], 0
      %s111 = sshll.u32 [#allocation2], 4
      %s112 = int_to_ptr.vmem [resolvable:$true] %s111
      %s113 = sshll.u32 %s3, 4
      %s114 = int_to_ptr.hbm [resolvable:$true] %s113
      %119 = dma.vmem_to_hbm [thread:$0]  %s112, 256, %s114, [#allocation3], 128, 128, 8
    $region17: #{transformer_forward.9} parent=1 // pred_fallthru
      _
    // Predicated region
    $region18: #{transformer_forward.9} parent=1 // pred_check
      _
    $region19: #{transformer_forward.9} parent=1 // pred_check_branch
      %121 = sbr.rel (0) target = $region21
    $region20: #{transformer_forward.9} parent=1 // pred_region
      %123 = dma.done [#allocation3], 256
    $region21: #{transformer_forward.9} parent=1 // pred_fallthru
      _
    %124 = vsyncpa [#allocation3], 1

// kernel: transformer_forward.5
$region0: #{transformer_forward.5}
  #allocation0 [shape = 'u32[]', space=smem, size = 0x4, offset = 0x4, fixed_abs, tag = 'smem constant byte address 0x4 - core index']
  #allocation1 [shape = 'u32[72,128]{1,0:T(1,128)}', space=vmem, size = 0x9000, scoped, tag = 'internal scratch']
  %s0 = inlined_call_operand.vmem [shape: f32[2,8,128], index: 0, kind: input, shape index: {}, may-alias: {0,1}]
  %s1 = inlined_call_operand.vmem [shape: f32[2,8,128], index: 1, kind: input, shape index: {}, may-alias: {0,1}]
  %s2 = inlined_call_operand.vmem [shape: f32[2,1,8], index: 2, kind: input, shape index: {}]
  %s3 = inlined_call_operand.vmem [shape: bf16[128,128], index: 3, kind: input, shape index: {}]
  %s4 = inlined_call_operand.vmem [shape: f32[1,128], index: 4, kind: input, shape index: {}]
  %s5 = inlined_call_operand.vmem [shape: bf16[128,256], index: 5, kind: input, shape index: {}]
  %s6 = inlined_call_operand.vmem [shape: f32[1,256], index: 6, kind: input, shape index: {}]
  %s7 = inlined_call_operand.vmem [shape: bf16[128,128], index: 7, kind: input, shape index: {}]
  %s8 = inlined_call_operand.vmem [shape: f32[1,128], index: 8, kind: input, shape index: {}]
  %s9 = inlined_call_operand.vmem [shape: f32[1,128], index: 9, kind: input, shape index: {}]
  %s10 = inlined_call_operand.vmem [shape: f32[1,128], index: 10, kind: input, shape index: {}]
  %s11 = inlined_call_operand.vmem [shape: bf16[128,256], index: 11, kind: input, shape index: {}]
  %s12 = inlined_call_operand.vmem [shape: f32[1,256], index: 12, kind: input, shape index: {}]
  %s13 = inlined_call_operand.vmem [shape: bf16[256,128], index: 13, kind: input, shape index: {}]
  %s14 = inlined_call_operand.vmem [shape: f32[1,128], index: 14, kind: input, shape index: {}]
  %s15 = inlined_call_operand.vmem [shape: f32[1,128], index: 15, kind: input, shape index: {}]
  %s16 = inlined_call_operand.vmem [shape: f32[1,128], index: 16, kind: input, shape index: {}]
  %s17 = inlined_call_operand.vmem [shape: f32[2,8,128], index: 17, kind: output, shape index: {}]
  %s18 = sld [smem:[#allocation0]]
  $region101: #{transformer_forward.5} parent=0
    _
  %s20 = ssub.s32 1, %s18
  %s21 = scalar_select 0, %s20, %s18
  loop: start=0, step=1, limit=4
  $region2: #{transformer_forward.5} parent=0 // loop_pre_header
    _
  $region3: #{transformer_forward.5} parent=0 // loop_header
    %s23 = sphi 0, %s27
    %p24 = scmp.ge.s32.totalorder %s23, 4
    %s30 = sphi 0, %s42
    %s31 = sphi 0, %s38
    %s32 = sphi 0, %s30
    %s33 = sphi 0, %s31
    %s34 = sphi 0, %s32
    %s35 = sphi 0, %s33
    %s47 = sphi 0, %s49
    %s50 = sphi 0, %s47
    %s51 = sphi 0, %s50
    %s67 = sphi 0, %s51
    %s73 = sphi 0, %s75
    %s76 = sphi 0, %s73
    %s77 = sphi 0, %s76
    %s93 = sphi 0, %s77
    %s99 = sphi 0, %s101
    %s102 = sphi 0, %s99
    %s103 = sphi 0, %s102
    %s119 = sphi 0, %s103
    %s123 = sphi 0, %s123
    %s125 = sphi 0, %s123
    %s126 = sphi 0, %s125
    %s140 = sphi 0, %s126
    %s144 = sphi 0, %s144
    %s146 = sphi 0, %s144
    %s147 = sphi 0, %s146
    %s161 = sphi 0, %s147
    %s165 = sphi 0, %s165
    %s167 = sphi 0, %s165
    %s168 = sphi 0, %s167
    %s182 = sphi 0, %s168
    %s186 = sphi 0, %s186
    %s188 = sphi 0, %s186
    %s189 = sphi 0, %s188
    %s203 = sphi 0, %s189
    %s207 = sphi 0, %s207
    %s209 = sphi 0, %s207
    %s210 = sphi 0, %s209
    %s224 = sphi 0, %s210
    %s228 = sphi 0, %s228
    %s230 = sphi 0, %s228
    %s231 = sphi 0, %s230
    %s245 = sphi 0, %s231
    %s249 = sphi 0, %s249
    %s251 = sphi 0, %s249
    %s252 = sphi 0, %s251
    %s266 = sphi 0, %s252
    %s270 = sphi 0, %s270
    %s272 = sphi 0, %s270
    %s273 = sphi 0, %s272
    %s287 = sphi 0, %s273
    %s291 = sphi 0, %s291
    %s293 = sphi 0, %s291
    %s294 = sphi 0, %s293
    %s308 = sphi 0, %s294
    %s312 = sphi 0, %s312
    %s314 = sphi 0, %s312
    %s315 = sphi 0, %s314
    %s329 = sphi 0, %s315
    %s333 = sphi 0, %s333
    %s335 = sphi 0, %s333
    %s336 = sphi 0, %s335
    %s350 = sphi 0, %s336
    %s354 = sphi 0, %s354
    %s356 = sphi 0, %s354
    %s357 = sphi 0, %s356
    %s371 = sphi 0, %s357
    %s375 = sphi 0, %s375
    %s377 = sphi 0, %s375
    %s378 = sphi 0, %s377
    %s392 = sphi 0, %s378
    %s396 = sphi 0, %s396
    %s398 = sphi 0, %s396
    %s399 = sphi 0, %s398
    %s413 = sphi 0, %s399
    %s421 = sphi 0, %s423
    %s424 = sphi 0, %s421
    %s425 = sphi 0, %s424
    %s441 = sphi 0, %s425
  $region4: #{transformer_forward.5} parent=0 // loop_header_branch
    %26 = sbr.rel (%p24) target = $region8
  $region5: #{transformer_forward.5} parent=0 // loop_body
    %s28 = ssub.s32 %s23, 1
    %s29 = ssub.s32 %s23, 2
    %s36 = sadd.s32 1, %s31
    %p37 = scmp.ge.s32.totalorder %s36, 1
    %s38 = scalar_select %p37, 0, %s36
    %s39 = sadd.s32 1, %s30
    %s40 = scalar_select %p37, %s39, %s30
    %p41 = scmp.ge.s32.totalorder %s40, 2
    %s42 = scalar_select %p41, 0, %s40
    %s43 = ssub.s32 %s30, %s42
    %s44 = ssub.s32 %s31, %s38
    %s45 = sor.u32 %s43, %s44
    %p46 = scmp.eq.s32.totalorder %s45, 0
    %s48 = sadd.s32 %s47, 1
    %s49 = scalar_select %p46, %s47, %s48
    %p52 = pneg %p46
    %p53 = scmp.eq.s32.totalorder %s23, 1
    %p54 = por %p52, %p53
    %p55 = scmp.ne.s32.totalorder %s47, %s50
    %p56 = scmp.eq.s32.totalorder %s23, 0
    %p57 = por %p55, %p56
    %p58 = scmp.ne.s32.totalorder %s47, %s50
    %p59 = scmp.eq.s32.totalorder %s28, 1
    %p60 = por %p58, %p59
    %p61 = scmp.ne.s32.totalorder %s50, %s51
    %p62 = scmp.eq.s32.totalorder %s28, 0
    %p63 = por %p61, %p62
    %p64 = scmp.ne.s32.totalorder %s50, %s51
    %p65 = scmp.eq.s32.totalorder %s29, 1
    %p66 = por %p64, %p65
    %p68 = scmp.ne.s32.totalorder %s51, %s67
    %p69 = scmp.eq.s32.totalorder %s29, 0
    %p70 = por %p68, %p69
    %s71 = ssub.s32 %s30, %s42
    %p72 = scmp.eq.s32.totalorder %s71, 0
    %s74 = sadd.s32 %s73, 1
    %s75 = scalar_select %p72, %s73, %s74
    %p78 = pneg %p72
    %p79 = scmp.eq.s32.totalorder %s23, 1
    %p80 = por %p78, %p79
    %p81 = scmp.ne.s32.totalorder %s73, %s76
    %p82 = scmp.eq.s32.totalorder %s23, 0
    %p83 = por %p81, %p82
    %p84 = scmp.ne.s32.totalorder %s73, %s76
    %p85 = scmp.eq.s32.totalorder %s28, 1
    %p86 = por %p84, %p85
    %p87 = scmp.ne.s32.totalorder %s76, %s77
    %p88 = scmp.eq.s32.totalorder %s28, 0
    %p89 = por %p87, %p88
    %p90 = scmp.ne.s32.totalorder %s76, %s77
    %p91 = scmp.eq.s32.totalorder %s29, 1
    %p92 = por %p90, %p91
    %p94 = scmp.ne.s32.totalorder %s77, %s93
    %p95 = scmp.eq.s32.totalorder %s29, 0
    %p96 = por %p94, %p95
    %s97 = ssub.s32 %s30, %s42
    %p98 = scmp.eq.s32.totalorder %s97, 0
    %s100 = sadd.s32 %s99, 1
    %s101 = scalar_select %p98, %s99, %s100
    %p104 = pneg %p98
    %p105 = scmp.eq.s32.totalorder %s23, 1
    %p106 = por %p104, %p105
    %p107 = scmp.ne.s32.totalorder %s99, %s102
    %p108 = scmp.eq.s32.totalorder %s23, 0
    %p109 = por %p107, %p108
    %p110 = scmp.ne.s32.totalorder %s99, %s102
    %p111 = scmp.eq.s32.totalorder %s28, 1
    %p112 = por %p110, %p111
    %p113 = scmp.ne.s32.totalorder %s102, %s103
    %p114 = scmp.eq.s32.totalorder %s28, 0
    %p115 = por %p113, %p114
    %p116 = scmp.ne.s32.totalorder %s102, %s103
    %p117 = scmp.eq.s32.totalorder %s29, 1
    %p118 = por %p116, %p117
    %p120 = scmp.ne.s32.totalorder %s103, %s119
    %p121 = scmp.eq.s32.totalorder %s29, 0
    %p122 = por %p120, %p121
    %s124 = sadd.s32 %s123, 1
    %p127 = scmp.eq.s32.totalorder %s23, 1
    %p128 = scmp.ne.s32.totalorder %s123, %s125
    %p129 = scmp.eq.s32.totalorder %s23, 0
    %p130 = por %p128, %p129
    %p131 = scmp.ne.s32.totalorder %s123, %s125
    %p132 = scmp.eq.s32.totalorder %s28, 1
    %p133 = por %p131, %p132
    %p134 = scmp.ne.s32.totalorder %s125, %s126
    %p135 = scmp.eq.s32.totalorder %s28, 0
    %p136 = por %p134, %p135
    %p137 = scmp.ne.s32.totalorder %s125, %s126
    %p138 = scmp.eq.s32.totalorder %s29, 1
    %p139 = por %p137, %p138
    %p141 = scmp.ne.s32.totalorder %s126, %s140
    %p142 = scmp.eq.s32.totalorder %s29, 0
    %p143 = por %p141, %p142
    %s145 = sadd.s32 %s144, 1
    %p148 = scmp.eq.s32.totalorder %s23, 1
    %p149 = scmp.ne.s32.totalorder %s144, %s146
    %p150 = scmp.eq.s32.totalorder %s23, 0
    %p151 = por %p149, %p150
    %p152 = scmp.ne.s32.totalorder %s144, %s146
    %p153 = scmp.eq.s32.totalorder %s28, 1
    %p154 = por %p152, %p153
    %p155 = scmp.ne.s32.totalorder %s146, %s147
    %p156 = scmp.eq.s32.totalorder %s28, 0
    %p157 = por %p155, %p156
    %p158 = scmp.ne.s32.totalorder %s146, %s147
    %p159 = scmp.eq.s32.totalorder %s29, 1
    %p160 = por %p158, %p159
    %p162 = scmp.ne.s32.totalorder %s147, %s161
    %p163 = scmp.eq.s32.totalorder %s29, 0
    %p164 = por %p162, %p163
    %s166 = sadd.s32 %s165, 1
    %p169 = scmp.eq.s32.totalorder %s23, 1
    %p170 = scmp.ne.s32.totalorder %s165, %s167
    %p171 = scmp.eq.s32.totalorder %s23, 0
    %p172 = por %p170, %p171
    %p173 = scmp.ne.s32.totalorder %s165, %s167
    %p174 = scmp.eq.s32.totalorder %s28, 1
    %p175 = por %p173, %p174
    %p176 = scmp.ne.s32.totalorder %s167, %s168
    %p177 = scmp.eq.s32.totalorder %s28, 0
    %p178 = por %p176, %p177
    %p179 = scmp.ne.s32.totalorder %s167, %s168
    %p180 = scmp.eq.s32.totalorder %s29, 1
    %p181 = por %p179, %p180
    %p183 = scmp.ne.s32.totalorder %s168, %s182
    %p184 = scmp.eq.s32.totalorder %s29, 0
    %p185 = por %p183, %p184
    %s187 = sadd.s32 %s186, 1
    %p190 = scmp.eq.s32.totalorder %s23, 1
    %p191 = scmp.ne.s32.totalorder %s186, %s188
    %p192 = scmp.eq.s32.totalorder %s23, 0
    %p193 = por %p191, %p192
    %p194 = scmp.ne.s32.totalorder %s186, %s188
    %p195 = scmp.eq.s32.totalorder %s28, 1
    %p196 = por %p194, %p195
    %p197 = scmp.ne.s32.totalorder %s188, %s189
    %p198 = scmp.eq.s32.totalorder %s28, 0
    %p199 = por %p197, %p198
    %p200 = scmp.ne.s32.totalorder %s188, %s189
    %p201 = scmp.eq.s32.totalorder %s29, 1
    %p202 = por %p200, %p201
    %p204 = scmp.ne.s32.totalorder %s189, %s203
    %p205 = scmp.eq.s32.totalorder %s29, 0
    %p206 = por %p204, %p205
    %s208 = sadd.s32 %s207, 1
    %p211 = scmp.eq.s32.totalorder %s23, 1
    %p212 = scmp.ne.s32.totalorder %s207, %s209
    %p213 = scmp.eq.s32.totalorder %s23, 0
    %p214 = por %p212, %p213
    %p215 = scmp.ne.s32.totalorder %s207, %s209
    %p216 = scmp.eq.s32.totalorder %s28, 1
    %p217 = por %p215, %p216
    %p218 = scmp.ne.s32.totalorder %s209, %s210
    %p219 = scmp.eq.s32.totalorder %s28, 0
    %p220 = por %p218, %p219
    %p221 = scmp.ne.s32.totalorder %s209, %s210
    %p222 = scmp.eq.s32.totalorder %s29, 1
    %p223 = por %p221, %p222
    %p225 = scmp.ne.s32.totalorder %s210, %s224
    %p226 = scmp.eq.s32.totalorder %s29, 0
    %p227 = por %p225, %p226
    %s229 = sadd.s32 %s228, 1
    %p232 = scmp.eq.s32.totalorder %s23, 1
    %p233 = scmp.ne.s32.totalorder %s228, %s230
    %p234 = scmp.eq.s32.totalorder %s23, 0
    %p235 = por %p233, %p234
    %p236 = scmp.ne.s32.totalorder %s228, %s230
    %p237 = scmp.eq.s32.totalorder %s28, 1
    %p238 = por %p236, %p237
    %p239 = scmp.ne.s32.totalorder %s230, %s231
    %p240 = scmp.eq.s32.totalorder %s28, 0
    %p241 = por %p239, %p240
    %p242 = scmp.ne.s32.totalorder %s230, %s231
    %p243 = scmp.eq.s32.totalorder %s29, 1
    %p244 = por %p242, %p243
    %p246 = scmp.ne.s32.totalorder %s231, %s245
    %p247 = scmp.eq.s32.totalorder %s29, 0
    %p248 = por %p246, %p247
    %s250 = sadd.s32 %s249, 1
    %p253 = scmp.eq.s32.totalorder %s23, 1
    %p254 = scmp.ne.s32.totalorder %s249, %s251
    %p255 = scmp.eq.s32.totalorder %s23, 0
    %p256 = por %p254, %p255
    %p257 = scmp.ne.s32.totalorder %s249, %s251
    %p258 = scmp.eq.s32.totalorder %s28, 1
    %p259 = por %p257, %p258
    %p260 = scmp.ne.s32.totalorder %s251, %s252
    %p261 = scmp.eq.s32.totalorder %s28, 0
    %p262 = por %p260, %p261
    %p263 = scmp.ne.s32.totalorder %s251, %s252
    %p264 = scmp.eq.s32.totalorder %s29, 1
    %p265 = por %p263, %p264
    %p267 = scmp.ne.s32.totalorder %s252, %s266
    %p268 = scmp.eq.s32.totalorder %s29, 0
    %p269 = por %p267, %p268
    %s271 = sadd.s32 %s270, 1
    %p274 = scmp.eq.s32.totalorder %s23, 1
    %p275 = scmp.ne.s32.totalorder %s270, %s272
    %p276 = scmp.eq.s32.totalorder %s23, 0
    %p277 = por %p275, %p276
    %p278 = scmp.ne.s32.totalorder %s270, %s272
    %p279 = scmp.eq.s32.totalorder %s28, 1
    %p280 = por %p278, %p279
    %p281 = scmp.ne.s32.totalorder %s272, %s273
    %p282 = scmp.eq.s32.totalorder %s28, 0
    %p283 = por %p281, %p282
    %p284 = scmp.ne.s32.totalorder %s272, %s273
    %p285 = scmp.eq.s32.totalorder %s29, 1
    %p286 = por %p284, %p285
    %p288 = scmp.ne.s32.totalorder %s273, %s287
    %p289 = scmp.eq.s32.totalorder %s29, 0
    %p290 = por %p288, %p289
    %s292 = sadd.s32 %s291, 1
    %p295 = scmp.eq.s32.totalorder %s23, 1
    %p296 = scmp.ne.s32.totalorder %s291, %s293
    %p297 = scmp.eq.s32.totalorder %s23, 0
    %p298 = por %p296, %p297
    %p299 = scmp.ne.s32.totalorder %s291, %s293
    %p300 = scmp.eq.s32.totalorder %s28, 1
    %p301 = por %p299, %p300
    %p302 = scmp.ne.s32.totalorder %s293, %s294
    %p303 = scmp.eq.s32.totalorder %s28, 0
    %p304 = por %p302, %p303
    %p305 = scmp.ne.s32.totalorder %s293, %s294
    %p306 = scmp.eq.s32.totalorder %s29, 1
    %p307 = por %p305, %p306
    %p309 = scmp.ne.s32.totalorder %s294, %s308
    %p310 = scmp.eq.s32.totalorder %s29, 0
    %p311 = por %p309, %p310
    %s313 = sadd.s32 %s312, 1
    %p316 = scmp.eq.s32.totalorder %s23, 1
    %p317 = scmp.ne.s32.totalorder %s312, %s314
    %p318 = scmp.eq.s32.totalorder %s23, 0
    %p319 = por %p317, %p318
    %p320 = scmp.ne.s32.totalorder %s312, %s314
    %p321 = scmp.eq.s32.totalorder %s28, 1
    %p322 = por %p320, %p321
    %p323 = scmp.ne.s32.totalorder %s314, %s315
    %p324 = scmp.eq.s32.totalorder %s28, 0
    %p325 = por %p323, %p324
    %p326 = scmp.ne.s32.totalorder %s314, %s315
    %p327 = scmp.eq.s32.totalorder %s29, 1
    %p328 = por %p326, %p327
    %p330 = scmp.ne.s32.totalorder %s315, %s329
    %p331 = scmp.eq.s32.totalorder %s29, 0
    %p332 = por %p330, %p331
    %s334 = sadd.s32 %s333, 1
    %p337 = scmp.eq.s32.totalorder %s23, 1
    %p338 = scmp.ne.s32.totalorder %s333, %s335
    %p339 = scmp.eq.s32.totalorder %s23, 0
    %p340 = por %p338, %p339
    %p341 = scmp.ne.s32.totalorder %s333, %s335
    %p342 = scmp.eq.s32.totalorder %s28, 1
    %p343 = por %p341, %p342
    %p344 = scmp.ne.s32.totalorder %s335, %s336
    %p345 = scmp.eq.s32.totalorder %s28, 0
    %p346 = por %p344, %p345
    %p347 = scmp.ne.s32.totalorder %s335, %s336
    %p348 = scmp.eq.s32.totalorder %s29, 1
    %p349 = por %p347, %p348
    %p351 = scmp.ne.s32.totalorder %s336, %s350
    %p352 = scmp.eq.s32.totalorder %s29, 0
    %p353 = por %p351, %p352
    %s355 = sadd.s32 %s354, 1
    %p358 = scmp.eq.s32.totalorder %s23, 1
    %p359 = scmp.ne.s32.totalorder %s354, %s356
    %p360 = scmp.eq.s32.totalorder %s23, 0
    %p361 = por %p359, %p360
    %p362 = scmp.ne.s32.totalorder %s354, %s356
    %p363 = scmp.eq.s32.totalorder %s28, 1
    %p364 = por %p362, %p363
    %p365 = scmp.ne.s32.totalorder %s356, %s357
    %p366 = scmp.eq.s32.totalorder %s28, 0
    %p367 = por %p365, %p366
    %p368 = scmp.ne.s32.totalorder %s356, %s357
    %p369 = scmp.eq.s32.totalorder %s29, 1
    %p370 = por %p368, %p369
    %p372 = scmp.ne.s32.totalorder %s357, %s371
    %p373 = scmp.eq.s32.totalorder %s29, 0
    %p374 = por %p372, %p373
    %s376 = sadd.s32 %s375, 1
    %p379 = scmp.eq.s32.totalorder %s23, 1
    %p380 = scmp.ne.s32.totalorder %s375, %s377
    %p381 = scmp.eq.s32.totalorder %s23, 0
    %p382 = por %p380, %p381
    %p383 = scmp.ne.s32.totalorder %s375, %s377
    %p384 = scmp.eq.s32.totalorder %s28, 1
    %p385 = por %p383, %p384
    %p386 = scmp.ne.s32.totalorder %s377, %s378
    %p387 = scmp.eq.s32.totalorder %s28, 0
    %p388 = por %p386, %p387
    %p389 = scmp.ne.s32.totalorder %s377, %s378
    %p390 = scmp.eq.s32.totalorder %s29, 1
    %p391 = por %p389, %p390
    %p393 = scmp.ne.s32.totalorder %s378, %s392
    %p394 = scmp.eq.s32.totalorder %s29, 0
    %p395 = por %p393, %p394
    %s397 = sadd.s32 %s396, 1
    %p400 = scmp.eq.s32.totalorder %s23, 1
    %p401 = scmp.ne.s32.totalorder %s396, %s398
    %p402 = scmp.eq.s32.totalorder %s23, 0
    %p403 = por %p401, %p402
    %p404 = scmp.ne.s32.totalorder %s396, %s398
    %p405 = scmp.eq.s32.totalorder %s28, 1
    %p406 = por %p404, %p405
    %p407 = scmp.ne.s32.totalorder %s398, %s399
    %p408 = scmp.eq.s32.totalorder %s28, 0
    %p409 = por %p407, %p408
    %p410 = scmp.ne.s32.totalorder %s398, %s399
    %p411 = scmp.eq.s32.totalorder %s29, 1
    %p412 = por %p410, %p411
    %p414 = scmp.ne.s32.totalorder %s399, %s413
    %p415 = scmp.eq.s32.totalorder %s29, 0
    %p416 = por %p414, %p415
    %s417 = ssub.s32 %s30, %s42
    %s418 = ssub.s32 %s31, %s38
    %s419 = sor.u32 %s417, %s418
    %p420 = scmp.eq.s32.totalorder %s419, 0
    %s422 = sadd.s32 %s421, 1
    %s423 = scalar_select %p420, %s421, %s422
    %p426 = pneg %p420
    %p427 = scmp.eq.s32.totalorder %s23, 1
    %p428 = por %p426, %p427
    %p429 = scmp.ne.s32.totalorder %s421, %s424
    %p430 = scmp.eq.s32.totalorder %s23, 0
    %p431 = por %p429, %p430
    %p432 = scmp.ne.s32.totalorder %s421, %s424
    %p433 = scmp.eq.s32.totalorder %s28, 1
    %p434 = por %p432, %p433
    %p435 = scmp.ne.s32.totalorder %s424, %s425
    %p436 = scmp.eq.s32.totalorder %s28, 0
    %p437 = por %p435, %p436
    %p438 = scmp.ne.s32.totalorder %s424, %s425
    %p439 = scmp.eq.s32.totalorder %s29, 1
    %p440 = por %p438, %p439
    %p442 = scmp.ne.s32.totalorder %s425, %s441
    %p443 = scmp.eq.s32.totalorder %s29, 0
    %p444 = por %p442, %p443
    %p445 = scmp.le.s32.totalorder 1, %s23
    %p446 = scmp.lt.s32.totalorder %s23, 3
    %p447 = pnand %p445, %p446
    %p448 = pneg %p447
    // Predicated region
    $region9: #{transformer_forward.5} parent=5 // pred_check
      _
    $region10: #{transformer_forward.5} parent=5 // pred_check_branch
      %450 = sbr.rel (%p447) target = $region12
    $region11: #{transformer_forward.5} parent=5 // pred_region
      %s451 = ssub.s32 %s23, 1
      // Predicated region
      $region13: #{transformer_forward.5} parent=11 // pred_check
        %p452 = pneg %p136
      $region14: #{transformer_forward.5} parent=11 // pred_check_branch
        %454 = sbr.rel (%p452) target = $region16
      $region15: #{transformer_forward.5} parent=11 // pred_region
        _
      $region16: #{transformer_forward.5} parent=11 // pred_fallthru
        _
      // Predicated region
      $region17: #{transformer_forward.5} parent=11 // pred_check
        %p455 = pneg %p157
      $region18: #{transformer_forward.5} parent=11 // pred_check_branch
        %457 = sbr.rel (%p455) target = $region20
      $region19: #{transformer_forward.5} parent=11 // pred_region
        _
      $region20: #{transformer_forward.5} parent=11 // pred_fallthru
        _
      // Predicated region
      $region21: #{transformer_forward.5} parent=11 // pred_check
        %p458 = pneg %p178
      $region22: #{transformer_forward.5} parent=11 // pred_check_branch
        %460 = sbr.rel (%p458) target = $region24
      $region23: #{transformer_forward.5} parent=11 // pred_region
        _
      $region24: #{transformer_forward.5} parent=11 // pred_fallthru
        _
      // Predicated region
      $region25: #{transformer_forward.5} parent=11 // pred_check
        %p461 = pneg %p199
      $region26: #{transformer_forward.5} parent=11 // pred_check_branch
        %463 = sbr.rel (%p461) target = $region28
      $region27: #{transformer_forward.5} parent=11 // pred_region
        _
      $region28: #{transformer_forward.5} parent=11 // pred_fallthru
        _
      // Predicated region
      $region29: #{transformer_forward.5} parent=11 // pred_check
        %p464 = pneg %p220
      $region30: #{transformer_forward.5} parent=11 // pred_check_branch
        %466 = sbr.rel (%p464) target = $region32
      $region31: #{transformer_forward.5} parent=11 // pred_region
        _
      $region32: #{transformer_forward.5} parent=11 // pred_fallthru
        _
      // Predicated region
      $region33: #{transformer_forward.5} parent=11 // pred_check
        %p467 = pneg %p241
      $region34: #{transformer_forward.5} parent=11 // pred_check_branch
        %469 = sbr.rel (%p467) target = $region36
      $region35: #{transformer_forward.5} parent=11 // pred_region
        _
      $region36: #{transformer_forward.5} parent=11 // pred_fallthru
        _
      // Predicated region
      $region37: #{transformer_forward.5} parent=11 // pred_check
        %p470 = pneg %p262
      $region38: #{transformer_forward.5} parent=11 // pred_check_branch
        %472 = sbr.rel (%p470) target = $region40
      $region39: #{transformer_forward.5} parent=11 // pred_region
        _
      $region40: #{transformer_forward.5} parent=11 // pred_fallthru
        _
      // Predicated region
      $region41: #{transformer_forward.5} parent=11 // pred_check
        %p473 = pneg %p283
      $region42: #{transformer_forward.5} parent=11 // pred_check_branch
        %475 = sbr.rel (%p473) target = $region44
      $region43: #{transformer_forward.5} parent=11 // pred_region
        _
      $region44: #{transformer_forward.5} parent=11 // pred_fallthru
        _
      // Predicated region
      $region45: #{transformer_forward.5} parent=11 // pred_check
        %p476 = pneg %p304
      $region46: #{transformer_forward.5} parent=11 // pred_check_branch
        %478 = sbr.rel (%p476) target = $region48
      $region47: #{transformer_forward.5} parent=11 // pred_region
        _
      $region48: #{transformer_forward.5} parent=11 // pred_fallthru
        _
      // Predicated region
      $region49: #{transformer_forward.5} parent=11 // pred_check
        %p479 = pneg %p325
      $region50: #{transformer_forward.5} parent=11 // pred_check_branch
        %481 = sbr.rel (%p479) target = $region52
      $region51: #{transformer_forward.5} parent=11 // pred_region
        _
      $region52: #{transformer_forward.5} parent=11 // pred_fallthru
        _
      // Predicated region
      $region53: #{transformer_forward.5} parent=11 // pred_check
        %p482 = pneg %p346
      $region54: #{transformer_forward.5} parent=11 // pred_check_branch
        %484 = sbr.rel (%p482) target = $region56
      $region55: #{transformer_forward.5} parent=11 // pred_region
        _
      $region56: #{transformer_forward.5} parent=11 // pred_fallthru
        _
      // Predicated region
      $region57: #{transformer_forward.5} parent=11 // pred_check
        %p485 = pneg %p367
      $region58: #{transformer_forward.5} parent=11 // pred_check_branch
        %487 = sbr.rel (%p485) target = $region60
      $region59: #{transformer_forward.5} parent=11 // pred_region
        _
      $region60: #{transformer_forward.5} parent=11 // pred_fallthru
        _
      // Predicated region
      $region61: #{transformer_forward.5} parent=11 // pred_check
        %p488 = pneg %p388
      $region62: #{transformer_forward.5} parent=11 // pred_check_branch
        %490 = sbr.rel (%p488) target = $region64
      $region63: #{transformer_forward.5} parent=11 // pred_region
        _
      $region64: #{transformer_forward.5} parent=11 // pred_fallthru
        _
      // Predicated region
      $region65: #{transformer_forward.5} parent=11 // pred_check
        %p491 = pneg %p409
      $region66: #{transformer_forward.5} parent=11 // pred_check_branch
        %493 = sbr.rel (%p491) target = $region68
      $region67: #{transformer_forward.5} parent=11 // pred_region
        _
      $region68: #{transformer_forward.5} parent=11 // pred_fallthru
        _
    $region12: #{transformer_forward.5} parent=5 // pred_fallthru
      _
    %p494 = scmp.lt.s32.totalorder %s23, 2
    // Predicated region
    $region69: #{transformer_forward.5} parent=5 // pred_check
      %p495 = pneg %p494
    $region70: #{transformer_forward.5} parent=5 // pred_check_branch
      %497 = sbr.rel (%p495) target = $region72
    $region71: #{transformer_forward.5} parent=5 // pred_region
      // Predicated region
      $region73: #{transformer_forward.5} parent=71 // pred_check
        %p498 = pneg %p57
      $region74: #{transformer_forward.5} parent=71 // pred_check_branch
        %500 = sbr.rel (%p498) target = $region76
      $region75: #{transformer_forward.5} parent=71 // pred_region
        %p501 = scmp.lt.s32.totalorder %s30, 1
        %s502 = scalar_select %p501, %s30, 1
        %p503 = scmp.lt.s32.totalorder %s31, 0
        %s504 = scalar_select %p503, %s31, 0
        %s505 = sadd.s32 %s504, %s502
        %s506 = smul.addr %s505, 8
        %s507 = scalar_lea.vmem %s0, %s506
      $region76: #{transformer_forward.5} parent=71 // pred_fallthru
        _
      // Predicated region
      $region77: #{transformer_forward.5} parent=71 // pred_check
        %p508 = pneg %p83
      $region78: #{transformer_forward.5} parent=71 // pred_check_branch
        %510 = sbr.rel (%p508) target = $region80
      $region79: #{transformer_forward.5} parent=71 // pred_region
        %p511 = scmp.lt.s32.totalorder %s30, 1
        %s512 = scalar_select %p511, %s30, 1
        %s513 = smul.addr %s512, 8
        %s514 = scalar_lea.vmem %s1, %s513
      $region80: #{transformer_forward.5} parent=71 // pred_fallthru
        _
      // Predicated region
      $region81: #{transformer_forward.5} parent=71 // pred_check
        %p515 = pneg %p109
      $region82: #{transformer_forward.5} parent=71 // pred_check_branch
        %517 = sbr.rel (%p515) target = $region84
      $region83: #{transformer_forward.5} parent=71 // pred_region
        %p518 = scmp.lt.s32.totalorder %s30, 1
        %s519 = scalar_select %p518, %s30, 1
        %s520 = scalar_lea.vmem %s2, %s519
      $region84: #{transformer_forward.5} parent=71 // pred_fallthru
        _
    $region72: #{transformer_forward.5} parent=5 // pred_fallthru
      _
    %p521 = scmp.le.s32.totalorder 1, %s23
    %p522 = scmp.lt.s32.totalorder %s23, 3
    %p523 = pnand %p521, %p522
    %p524 = pneg %p523
    // Predicated region
    $region85: #{transformer_forward.5} parent=5 // pred_check
      _
    $region86: #{transformer_forward.5} parent=5 // pred_check_branch
      %526 = sbr.rel (%p523) target = $region88
    $region87: #{transformer_forward.5} parent=5 // pred_region
      %s527 = ssub.s32 %s23, 1
      %p528 = scmp.lt.s32.totalorder %s32, 1
      %s529 = scalar_select %p528, %s32, 1
      %p530 = scmp.lt.s32.totalorder %s33, 0
      %s531 = scalar_select %p530, %s33, 0
      %s532 = sadd.s32 %s531, %s529
      %s533 = smul.addr %s532, 8
      %s534 = scalar_lea.vmem %s0, %s533
      %p535 = pneg %p63
      %p536 = pneg %p60
      %p537 = scmp.lt.s32.totalorder %s32, 1
      %s538 = scalar_select %p537, %s32, 1
      %s539 = smul.addr %s538, 8
      %s540 = scalar_lea.vmem %s1, %s539
      %p541 = pneg %p89
      %p542 = pneg %p86
      %p543 = scmp.lt.s32.totalorder %s32, 1
      %s544 = scalar_select %p543, %s32, 1
      %s545 = scalar_lea.vmem %s2, %s544
      %p546 = pneg %p115
      %p547 = pneg %p112
      %p548 = pneg %p136
      %p549 = pneg %p133
      %p550 = pneg %p157
      %p551 = pneg %p154
      %p552 = pneg %p178
      %p553 = pneg %p175
      %p554 = pneg %p199
      %p555 = pneg %p196
      %p556 = pneg %p220
      %p557 = pneg %p217
      %p558 = pneg %p241
      %p559 = pneg %p238
      %p560 = pneg %p262
      %p561 = pneg %p259
      %p562 = pneg %p283
      %p563 = pneg %p280
      %p564 = pneg %p304
      %p565 = pneg %p301
      %p566 = pneg %p325
      %p567 = pneg %p322
      %p568 = pneg %p346
      %p569 = pneg %p343
      %p570 = pneg %p367
      %p571 = pneg %p364
      %p572 = pneg %p388
      %p573 = pneg %p385
      %p574 = pneg %p409
      %p575 = pneg %p406
      %p576 = pneg %p437
      %p577 = pneg %p434
      %p578 = scmp.lt.s32.totalorder %s32, 1
      %s579 = scalar_select %p578, %s32, 1
      %p580 = scmp.lt.s32.totalorder %s33, 0
      %s581 = scalar_select %p580, %s33, 0
      %s582 = sadd.s32 %s581, %s579
      %s583 = smul.addr %s582, 8
      %s584 = scalar_lea.vmem %s17, %s583
      %p585 = scmp.lt.s32.totalorder %s32, 1
      %s586 = scalar_select %p585, %s32, 1
      %p587 = scmp.lt.s32.totalorder %s33, 0
      %s588 = scalar_select %p587, %s33, 0
      %s589 = sadd.s32 %s588, %s586
      %s590 = smul.addr %s589, 8
      %s591 = scalar_lea.vmem %s0, %s590
      %p592 = scmp.lt.s32.totalorder %s32, 1
      %s593 = scalar_select %p592, %s32, 1
      %s594 = smul.addr %s593, 8
      %s595 = scalar_lea.vmem %s1, %s594
      %p596 = scmp.lt.s32.totalorder %s32, 1
      %s597 = scalar_select %p596, %s32, 1
      %s598 = scalar_lea.vmem %s2, %s597
      %p599 = scmp.lt.s32.totalorder %s32, 1
      %s600 = scalar_select %p599, %s32, 1
      %p601 = scmp.lt.s32.totalorder %s33, 0
      %s602 = scalar_select %p601, %s33, 0
      %s603 = sadd.s32 %s602, %s600
      %s604 = smul.addr %s603, 8
      %s605 = scalar_lea.vmem %s17, %s604
      %v607 = vld [vmem:[%s591] sm:$0xff]
      %v608 = vld [vmem:[%s595] sm:$0xff]
      %v609 = vld [vmem:[%s598] sm:$0x1]
      %v611 = vperm.slane %v609, 0
      %v613 = vmul.f32 %v611, -1e+30
      %v614 = vld [vmem:[%s3] sm:$0xf]
      %v615 = vld [vmem:[%s3 + $0x4] sm:$0xf]
      %v616 = vld [vmem:[%s3 + $0x8] sm:$0xf]
      %v617 = vld [vmem:[%s3 + $0xc] sm:$0xf]
      %v618 = vld [vmem:[%s3 + $0x10] sm:$0xf]
      %v619 = vld [vmem:[%s3 + $0x14] sm:$0xf]
      %v620 = vld [vmem:[%s3 + $0x18] sm:$0xf]
      %v621 = vld [vmem:[%s3 + $0x1c] sm:$0xf]
      %v622 = vld [vmem:[%s3 + $0x20] sm:$0xf]
      %v623 = vld [vmem:[%s3 + $0x24] sm:$0xf]
      %v624 = vld [vmem:[%s3 + $0x28] sm:$0xf]
      %v625 = vld [vmem:[%s3 + $0x2c] sm:$0xf]
      %v626 = vld [vmem:[%s3 + $0x30] sm:$0xf]
      %v627 = vld [vmem:[%s3 + $0x34] sm:$0xf]
      %v628 = vld [vmem:[%s3 + $0x38] sm:$0xf]
      %v629 = vld [vmem:[%s3 + $0x3c] sm:$0xf]
      %v630 = vld [vmem:[%s4] sm:$0x1]
      %v631 = vld [vmem:[%s5] sm:$0xff]
      %v632 = vld [vmem:[%s5 + $0x8] sm:$0xff]
      %v633 = vld [vmem:[%s5 + $0x10] sm:$0xff]
      %v634 = vld [vmem:[%s5 + $0x18] sm:$0xff]
      %v635 = vld [vmem:[%s5 + $0x20] sm:$0xff]
      %v636 = vld [vmem:[%s5 + $0x28] sm:$0xff]
      %v637 = vld [vmem:[%s5 + $0x30] sm:$0xff]
      %v638 = vld [vmem:[%s5 + $0x38] sm:$0xff]
      %v639 = vld [vmem:[%s5 + $0x40] sm:$0xff]
      %v640 = vld [vmem:[%s5 + $0x48] sm:$0xff]
      %v641 = vld [vmem:[%s5 + $0x50] sm:$0xff]
      %v642 = vld [vmem:[%s5 + $0x58] sm:$0xff]
      %v643 = vld [vmem:[%s5 + $0x60] sm:$0xff]
      %v644 = vld [vmem:[%s5 + $0x68] sm:$0xff]
      %v645 = vld [vmem:[%s5 + $0x70] sm:$0xff]
      %v646 = vld [vmem:[%s5 + $0x78] sm:$0xff]
      %v647 = vld [vmem:[%s6] sm:$0x3]
      %v648 = vld [vmem:[%s7] sm:$0xf]
      %v649 = vld [vmem:[%s7 + $0x4] sm:$0xf]
      %v650 = vld [vmem:[%s7 + $0x8] sm:$0xf]
      %v651 = vld [vmem:[%s7 + $0xc] sm:$0xf]
      %v652 = vld [vmem:[%s7 + $0x10] sm:$0xf]
      %v653 = vld [vmem:[%s7 + $0x14] sm:$0xf]
      %v654 = vld [vmem:[%s7 + $0x18] sm:$0xf]
      %v655 = vld [vmem:[%s7 + $0x1c] sm:$0xf]
      %v656 = vld [vmem:[%s7 + $0x20] sm:$0xf]
      %v657 = vld [vmem:[%s7 + $0x24] sm:$0xf]
      %v658 = vld [vmem:[%s7 + $0x28] sm:$0xf]
      %v659 = vld [vmem:[%s7 + $0x2c] sm:$0xf]
      %v660 = vld [vmem:[%s7 + $0x30] sm:$0xf]
      %v661 = vld [vmem:[%s7 + $0x34] sm:$0xf]
      %v662 = vld [vmem:[%s7 + $0x38] sm:$0xf]
      %v663 = vld [vmem:[%s7 + $0x3c] sm:$0xf]
      %v664 = vld [vmem:[%s8] sm:$0x1]
      %v665 = vld [vmem:[%s9] sm:$0x1]
      %v666 = vld [vmem:[%s10] sm:$0x1]
      %v667 = vpack.c.bf16 %v607, %v607
      %v669 = vperm.slane %v630, 0
      %v687 = vunpack.c.l.b16 %v614
      %v688 = vunpack.c.l.b16 %v615
      %v689 = vunpack.c.l.b16 %v616
      %v690 = vunpack.c.l.b16 %v617
      %v691 = vunpack.c.l.b16 %v618
      %v692 = vunpack.c.l.b16 %v619
      %v693 = vunpack.c.l.b16 %v620
      %v694 = vunpack.c.l.b16 %v621
      %v695 = vunpack.c.l.b16 %v622
      %v696 = vunpack.c.l.b16 %v623
      %v697 = vunpack.c.l.b16 %v624
      %v698 = vunpack.c.l.b16 %v625
      %v699 = vunpack.c.l.b16 %v626
      %v700 = vunpack.c.l.b16 %v627
      %v701 = vunpack.c.l.b16 %v628
      %v702 = vunpack.c.l.b16 %v629
      %v703 = vpack.c.b16 %v688, %v687
      %v704 = vpack.c.b16 %v690, %v689
      %v705 = vpack.c.b16 %v692, %v691
      %v706 = vpack.c.b16 %v694, %v693
      %v707 = vpack.c.b16 %v696, %v695
      %v708 = vpack.c.b16 %v698, %v697
      %v709 = vpack.c.b16 %v700, %v699
      %v710 = vpack.c.b16 %v702, %v701
      %719 = vmatpush.bf16.msra.mxu0 %v710
      %720 = vmatpush.bf16.msra.mxu0 %v709
      %721 = vmatpush.bf16.msra.mxu0 %v708
      %722 = vmatpush.bf16.msra.mxu0 %v707
      %723 = vmatpush.bf16.msra.mxu0 %v706
      %724 = vmatpush.bf16.msra.mxu0 %v705
      %725 = vmatpush.bf16.msra.mxu0 %v704
      %726 = vmatpush.bf16.msra.mxu0 %v703
      %727 = vmatmul.bf16.gmra.mxu0 %v667
      %v728 = vpop.f32.mrf.mxu0
      %v729 = vadd.f32 %v669, %v728
      %v730 = vpop.f32.mrf.mxu0
      %731 = vdwg.mxu0
      %v732 = vpack.c.bf16 %v608, %v608
      %v734 = vperm.slane %v647, 0
      %v735 = vperm.slane %v647, 1
      %v754 = vunpack.c.l.b16 %v631
      %v755 = vunpack.c.h.b16 %v631
      %v756 = vunpack.c.l.b16 %v632
      %v757 = vunpack.c.h.b16 %v632
      %v758 = vunpack.c.l.b16 %v633
      %v759 = vunpack.c.h.b16 %v633
      %v760 = vunpack.c.l.b16 %v634
      %v761 = vunpack.c.h.b16 %v634
      %v762 = vunpack.c.l.b16 %v635
      %v763 = vunpack.c.h.b16 %v635
      %v764 = vunpack.c.l.b16 %v636
      %v765 = vunpack.c.h.b16 %v636
      %v766 = vunpack.c.l.b16 %v637
      %v767 = vunpack.c.h.b16 %v637
      %v768 = vunpack.c.l.b16 %v638
      %v769 = vunpack.c.h.b16 %v638
      %v770 = vunpack.c.l.b16 %v639
      %v771 = vunpack.c.h.b16 %v639
      %v772 = vunpack.c.l.b16 %v640
      %v773 = vunpack.c.h.b16 %v640
      %v774 = vunpack.c.l.b16 %v641
      %v775 = vunpack.c.h.b16 %v641
      %v776 = vunpack.c.l.b16 %v642
      %v777 = vunpack.c.h.b16 %v642
      %v778 = vunpack.c.l.b16 %v643
      %v779 = vunpack.c.h.b16 %v643
      %v780 = vunpack.c.l.b16 %v644
      %v781 = vunpack.c.h.b16 %v644
      %v782 = vunpack.c.l.b16 %v645
      %v783 = vunpack.c.h.b16 %v645
      %v784 = vunpack.c.l.b16 %v646
      %v785 = vunpack.c.h.b16 %v646
      %v786 = vpack.c.b16 %v756, %v754
      %v787 = vpack.c.b16 %v757, %v755
      %v788 = vpack.c.b16 %v760, %v758
      %v789 = vpack.c.b16 %v761, %v759
      %v790 = vpack.c.b16 %v764, %v762
      %v791 = vpack.c.b16 %v765, %v763
      %v792 = vpack.c.b16 %v768, %v766
      %v793 = vpack.c.b16 %v769, %v767
      %v794 = vpack.c.b16 %v772, %v770
      %v795 = vpack.c.b16 %v773, %v771
      %v796 = vpack.c.b16 %v776, %v774
      %v797 = vpack.c.b16 %v777, %v775
      %v798 = vpack.c.b16 %v780, %v778
      %v799 = vpack.c.b16 %v781, %v779
      %v800 = vpack.c.b16 %v784, %v782
      %v801 = vpack.c.b16 %v785, %v783
      %818 = vmatpush.bf16.msra.mxu0 %v800
      %819 = vmatpush.bf16.msra.mxu0 %v798
      %820 = vmatpush.bf16.msra.mxu0 %v796
      %821 = vmatpush.bf16.msra.mxu0 %v794
      %822 = vmatpush.bf16.msra.mxu0 %v792
      %823 = vmatpush.bf16.msra.mxu0 %v790
      %824 = vmatpush.bf16.msra.mxu0 %v788
      %825 = vmatpush.bf16.msra.mxu0 %v786
      %826 = vmatmul.bf16.gmra.mxu0 %v732
      %v827 = vpop.f32.mrf.mxu0
      %v828 = vadd.f32 %v734, %v827
      %v829 = vpop.f32.mrf.mxu0
      %830 = vdwg.mxu0
      %831 = vmatpush.bf16.msra.mxu0 %v801
      %832 = vmatpush.bf16.msra.mxu0 %v799
      %833 = vmatpush.bf16.msra.mxu0 %v797
      %834 = vmatpush.bf16.msra.mxu0 %v795
      %835 = vmatpush.bf16.msra.mxu0 %v793
      %836 = vmatpush.bf16.msra.mxu0 %v791
      %837 = vmatpush.bf16.msra.mxu0 %v789
      %838 = vmatpush.bf16.msra.mxu0 %v787
      %839 = vmatmul.bf16.gmra.mxu0 %v732
      %v840 = vpop.f32.mrf.mxu0
      %v841 = vadd.f32 %v735, %v840
      %v842 = vpop.f32.mrf.mxu0
      %843 = vdwg.mxu0
      %845 = vrot.lane.b32.xlu0 %v729, 96
      %v846 = vpop.permute.xlu0 %845
      %848 = vrot.lane.b32.xlu0 %v729, 64
      %v849 = vpop.permute.xlu0 %848
      %851 = vrot.lane.b32.xlu0 %v729, 32
      %v852 = vpop.permute.xlu0 %851
      %v854 = vrot.slane %v849, 4
      %vm855 = vcmask 1047556
      %v856 = vsel %vm855, %v854, %v729
      %v857 = vrot.slane %v729, 4
      %v858 = vsel %vm855, %v849, %v857
      %v860 = vunpack.c.l.s4 1983009808
      %v861 = vunpack.c.0.s8 %v860
      %v862 = vperm.slane %v856, %v861
      %v864 = vunpack.c.l.s4 1983009808
      %v865 = vunpack.c.0.s8 %v864
      %v866 = vperm.slane %v858, %v865
      %v867 = vrot.slane %v852, 4
      %v868 = vsel %vm855, %v867, %v846
      %v869 = vrot.slane %v846, 4
      %v870 = vsel %vm855, %v852, %v869
      %v872 = vunpack.c.l.s4 1983009808
      %v873 = vunpack.c.0.s8 %v872
      %v874 = vperm.slane %v868, %v873
      %v876 = vunpack.c.l.s4 1983009808
      %v877 = vunpack.c.0.s8 %v876
      %v878 = vperm.slane %v870, %v877
      %v879 = vrot.slane %v874, 4
      %v880 = vsel %vm855, %v879, %v862
      %v881 = vrot.slane %v862, 4
      %v882 = vsel %vm855, %v874, %v881
      %v884 = vunpack.c.l.s4 1934713408
      %v885 = vunpack.c.0.s8 %v884
      %v886 = vperm.slane %v880, %v885
      %v888 = vunpack.c.l.s4 1934713408
      %v889 = vunpack.c.0.s8 %v888
      %v890 = vperm.slane %v882, %v889
      %v891 = vrot.slane %v878, 4
      %v892 = vsel %vm855, %v891, %v866
      %v893 = vrot.slane %v866, 4
      %v894 = vsel %vm855, %v878, %v893
      %v896 = vunpack.c.l.s4 1934713408
      %v897 = vunpack.c.0.s8 %v896
      %v898 = vperm.slane %v892, %v897
      %v900 = vunpack.c.l.s4 1934713408
      %v901 = vunpack.c.0.s8 %v900
      %v902 = vperm.slane %v894, %v901
      %v903 = vrot.slane %v886, 4
      %v904 = vsel %vm855, 0.0, %v903
      %v905 = vrot.slane %v890, 4
      %v906 = vsel %vm855, 0.0, %v905
      %v907 = vrot.slane %v898, 4
      %v908 = vsel %vm855, 0.0, %v907
      %v909 = vrot.slane %v902, 4
      %v910 = vsel %vm855, 0.0, %v909
      %v911 = vsel %vm855, %v905, %v886
      %v913 = vunpack.c.l.s4 1983009808
      %v914 = vunpack.c.0.s8 %v913
      %v915 = vperm.slane %v911, %v914
      %v916 = vrot.slane %v906, 4
      %v917 = vsel %vm855, %v916, %v904
      %v919 = vunpack.c.l.s4 1983009808
      %v920 = vunpack.c.0.s8 %v919
      %v921 = vperm.slane %v917, %v920
      %v922 = vsel %vm855, %v909, %v898
      %v924 = vunpack.c.l.s4 1983009808
      %v925 = vunpack.c.0.s8 %v924
      %v926 = vperm.slane %v922, %v925
      %v927 = vrot.slane %v910, 4
      %v928 = vsel %vm855, %v927, %v908
      %v930 = vunpack.c.l.s4 1983009808
      %v931 = vunpack.c.0.s8 %v930
      %v932 = vperm.slane %v928, %v931
      %v933 = vrot.slane %v921, 4
      %v934 = vsel %vm855, %v933, %v915
      %v935 = vrot.slane %v915, 4
      %v936 = vsel %vm855, %v921, %v935
      %v938 = vunpack.c.l.s4 1934713408
      %v939 = vunpack.c.0.s8 %v938
      %v940 = vperm.slane %v934, %v939
      %v942 = vunpack.c.l.s4 1934713408
      %v943 = vunpack.c.0.s8 %v942
      %v944 = vperm.slane %v936, %v943
      %v945 = vrot.slane %v932, 4
      %v946 = vsel %vm855, %v945, %v926
      %v947 = vrot.slane %v926, 4
      %v948 = vsel %vm855, %v932, %v947
      %v950 = vunpack.c.l.s4 1934713408
      %v951 = vunpack.c.0.s8 %v950
      %v952 = vperm.slane %v946, %v951
      %v954 = vunpack.c.l.s4 1934713408
      %v955 = vunpack.c.0.s8 %v954
      %v956 = vperm.slane %v948, %v955
      %v957 = vrot.slane %v952, 4
      %v958 = vsel %vm855, %v957, %v940
      %v959 = vrot.slane %v940, 4
      %v960 = vsel %vm855, %v952, %v959
      %v961 = vrot.slane %v956, 4
      %v962 = vsel %vm855, %v961, %v944
      %v963 = vrot.slane %v944, 4
      %v964 = vsel %vm855, %v956, %v963
      %v965 = vpack.c.bf16 %v958, %v958
      %v966 = vpack.c.bf16 %v960, %v960
      %v967 = vpack.c.bf16 %v962, %v962
      %v968 = vpack.c.bf16 %v964, %v964
      %970 = vrot.lane.b32.xlu0 %v828, 96
      %v971 = vpop.permute.xlu0 %970
      %973 = vrot.lane.b32.xlu0 %v828, 64
      %v974 = vpop.permute.xlu0 %973
      %976 = vrot.lane.b32.xlu0 %v828, 32
      %v977 = vpop.permute.xlu0 %976
      %v979 = vrot.slane %v974, 4
      %v980 = vsel %vm855, %v979, %v828
      %v981 = vrot.slane %v828, 4
      %v982 = vsel %vm855, %v974, %v981
      %v984 = vunpack.c.l.s4 1983009808
      %v985 = vunpack.c.0.s8 %v984
      %v986 = vperm.slane %v980, %v985
      %v988 = vunpack.c.l.s4 1983009808
      %v989 = vunpack.c.0.s8 %v988
      %v990 = vperm.slane %v982, %v989
      %v991 = vrot.slane %v977, 4
      %v992 = vsel %vm855, %v991, %v971
      %v993 = vrot.slane %v971, 4
      %v994 = vsel %vm855, %v977, %v993
      %v996 = vunpack.c.l.s4 1983009808
      %v997 = vunpack.c.0.s8 %v996
      %v998 = vperm.slane %v992, %v997
      %v1000 = vunpack.c.l.s4 1983009808
      %v1001 = vunpack.c.0.s8 %v1000
      %v1002 = vperm.slane %v994, %v1001
      %v1003 = vrot.slane %v998, 4
      %v1004 = vsel %vm855, %v1003, %v986
      %v1005 = vrot.slane %v986, 4
      %v1006 = vsel %vm855, %v998, %v1005
      %v1008 = vunpack.c.l.s4 1934713408
      %v1009 = vunpack.c.0.s8 %v1008
      %v1010 = vperm.slane %v1004, %v1009
      %v1012 = vunpack.c.l.s4 1934713408
      %v1013 = vunpack.c.0.s8 %v1012
      %v1014 = vperm.slane %v1006, %v1013
      %v1015 = vrot.slane %v1002, 4
      %v1016 = vsel %vm855, %v1015, %v990
      %v1017 = vrot.slane %v990, 4
      %v1018 = vsel %vm855, %v1002, %v1017
      %v1020 = vunpack.c.l.s4 1934713408
      %v1021 = vunpack.c.0.s8 %v1020
      %v1022 = vperm.slane %v1016, %v1021
      %v1024 = vunpack.c.l.s4 1934713408
      %v1025 = vunpack.c.0.s8 %v1024
      %v1026 = vperm.slane %v1018, %v1025
      %v1027 = vrot.slane %v1010, 4
      %v1028 = vsel %vm855, 0.0, %v1027
      %v1029 = vrot.slane %v1014, 4
      %v1030 = vsel %vm855, 0.0, %v1029
      %v1031 = vrot.slane %v1022, 4
      %v1032 = vsel %vm855, 0.0, %v1031
      %v1033 = vrot.slane %v1026, 4
      %v1034 = vsel %vm855, 0.0, %v1033
      %v1035 = vsel %vm855, %v1029, %v1010
      %v1037 = vunpack.c.l.s4 1983009808
      %v1038 = vunpack.c.0.s8 %v1037
      %v1039 = vperm.slane %v1035, %v1038
      %v1040 = vrot.slane %v1030, 4
      %v1041 = vsel %vm855, %v1040, %v1028
      %v1043 = vunpack.c.l.s4 1983009808
      %v1044 = vunpack.c.0.s8 %v1043
      %v1045 = vperm.slane %v1041, %v1044
      %v1046 = vsel %vm855, %v1033, %v1022
      %v1048 = vunpack.c.l.s4 1983009808
      %v1049 = vunpack.c.0.s8 %v1048
      %v1050 = vperm.slane %v1046, %v1049
      %v1051 = vrot.slane %v1034, 4
      %v1052 = vsel %vm855, %v1051, %v1032
      %v1054 = vunpack.c.l.s4 1983009808
      %v1055 = vunpack.c.0.s8 %v1054
      %v1056 = vperm.slane %v1052, %v1055
      %v1057 = vrot.slane %v1045, 4
      %v1058 = vsel %vm855, %v1057, %v1039
      %v1059 = vrot.slane %v1039, 4
      %v1060 = vsel %vm855, %v1045, %v1059
      %v1062 = vunpack.c.l.s4 1934713408
      %v1063 = vunpack.c.0.s8 %v1062
      %v1064 = vperm.slane %v1058, %v1063
      %v1066 = vunpack.c.l.s4 1934713408
      %v1067 = vunpack.c.0.s8 %v1066
      %v1068 = vperm.slane %v1060, %v1067
      %v1069 = vrot.slane %v1056, 4
      %v1070 = vsel %vm855, %v1069, %v1050
      %v1071 = vrot.slane %v1050, 4
      %v1072 = vsel %vm855, %v1056, %v1071
      %v1074 = vunpack.c.l.s4 1934713408
      %v1075 = vunpack.c.0.s8 %v1074
      %v1076 = vperm.slane %v1070, %v1075
      %v1078 = vunpack.c.l.s4 1934713408
      %v1079 = vunpack.c.0.s8 %v1078
      %v1080 = vperm.slane %v1072, %v1079
      %v1081 = vrot.slane %v1076, 4
      %v1082 = vsel %vm855, %v1081, %v1064
      %v1083 = vrot.slane %v1064, 4
      %v1084 = vsel %vm855, %v1076, %v1083
      %v1085 = vrot.slane %v1080, 4
      %v1086 = vsel %vm855, %v1085, %v1068
      %v1087 = vrot.slane %v1068, 4
      %v1088 = vsel %vm855, %v1080, %v1087
      %v1089 = vpack.c.bf16 %v1082, %v1082
      %v1090 = vpack.c.bf16 %v1084, %v1084
      %v1091 = vpack.c.bf16 %v1086, %v1086
      %v1092 = vpack.c.bf16 %v1088, %v1088
      %1094 = vrot.lane.b32.xlu0 %v841, 96
      %v1095 = vpop.permute.xlu0 %1094
      %1097 = vrot.lane.b32.xlu0 %v841, 64
      %v1098 = vpop.permute.xlu0 %1097
      %1100 = vrot.lane.b32.xlu0 %v841, 32
      %v1101 = vpop.permute.xlu0 %1100
      %v1103 = vrot.slane %v1098, 4
      %v1104 = vsel %vm855, %v1103, %v841
      %v1105 = vrot.slane %v841, 4
      %v1106 = vsel %vm855, %v1098, %v1105
      %v1108 = vunpack.c.l.s4 1983009808
      %v1109 = vunpack.c.0.s8 %v1108
      %v1110 = vperm.slane %v1104, %v1109
      %v1112 = vunpack.c.l.s4 1983009808
      %v1113 = vunpack.c.0.s8 %v1112
      %v1114 = vperm.slane %v1106, %v1113
      %v1115 = vrot.slane %v1101, 4
      %v1116 = vsel %vm855, %v1115, %v1095
      %v1117 = vrot.slane %v1095, 4
      %v1118 = vsel %vm855, %v1101, %v1117
      %v1120 = vunpack.c.l.s4 1983009808
      %v1121 = vunpack.c.0.s8 %v1120
      %v1122 = vperm.slane %v1116, %v1121
      %v1124 = vunpack.c.l.s4 1983009808
      %v1125 = vunpack.c.0.s8 %v1124
      %v1126 = vperm.slane %v1118, %v1125
      %v1127 = vrot.slane %v1122, 4
      %v1128 = vsel %vm855, %v1127, %v1110
      %v1129 = vrot.slane %v1110, 4
      %v1130 = vsel %vm855, %v1122, %v1129
      %v1132 = vunpack.c.l.s4 1934713408
      %v1133 = vunpack.c.0.s8 %v1132
      %v1134 = vperm.slane %v1128, %v1133
      %v1136 = vunpack.c.l.s4 1934713408
      %v1137 = vunpack.c.0.s8 %v1136
      %v1138 = vperm.slane %v1130, %v1137
      %v1139 = vrot.slane %v1126, 4
      %v1140 = vsel %vm855, %v1139, %v1114
      %v1141 = vrot.slane %v1114, 4
      %v1142 = vsel %vm855, %v1126, %v1141
      %v1144 = vunpack.c.l.s4 1934713408
      %v1145 = vunpack.c.0.s8 %v1144
      %v1146 = vperm.slane %v1140, %v1145
      %v1148 = vunpack.c.l.s4 1934713408
      %v1149 = vunpack.c.0.s8 %v1148
      %v1150 = vperm.slane %v1142, %v1149
      %v1151 = vrot.slane %v1134, 4
      %v1152 = vsel %vm855, 0.0, %v1151
      %v1153 = vrot.slane %v1138, 4
      %v1154 = vsel %vm855, 0.0, %v1153
      %v1155 = vrot.slane %v1146, 4
      %v1156 = vsel %vm855, 0.0, %v1155
      %v1157 = vrot.slane %v1150, 4
      %v1158 = vsel %vm855, 0.0, %v1157
      %v1159 = vsel %vm855, %v1153, %v1134
      %v1161 = vunpack.c.l.s4 1983009808
      %v1162 = vunpack.c.0.s8 %v1161
      %v1163 = vperm.slane %v1159, %v1162
      %v1164 = vrot.slane %v1154, 4
      %v1165 = vsel %vm855, %v1164, %v1152
      %v1167 = vunpack.c.l.s4 1983009808
      %v1168 = vunpack.c.0.s8 %v1167
      %v1169 = vperm.slane %v1165, %v1168
      %v1170 = vsel %vm855, %v1157, %v1146
      %v1172 = vunpack.c.l.s4 1983009808
      %v1173 = vunpack.c.0.s8 %v1172
      %v1174 = vperm.slane %v1170, %v1173
      %v1175 = vrot.slane %v1158, 4
      %v1176 = vsel %vm855, %v1175, %v1156
      %v1178 = vunpack.c.l.s4 1983009808
      %v1179 = vunpack.c.0.s8 %v1178
      %v1180 = vperm.slane %v1176, %v1179
      %v1181 = vrot.slane %v1169, 4
      %v1182 = vsel %vm855, %v1181, %v1163
      %v1183 = vrot.slane %v1163, 4
      %v1184 = vsel %vm855, %v1169, %v1183
      %v1186 = vunpack.c.l.s4 1934713408
      %v1187 = vunpack.c.0.s8 %v1186
      %v1188 = vperm.slane %v1182, %v1187
      %v1190 = vunpack.c.l.s4 1934713408
      %v1191 = vunpack.c.0.s8 %v1190
      %v1192 = vperm.slane %v1184, %v1191
      %v1193 = vrot.slane %v1180, 4
      %v1194 = vsel %vm855, %v1193, %v1174
      %v1195 = vrot.slane %v1174, 4
      %v1196 = vsel %vm855, %v1180, %v1195
      %v1198 = vunpack.c.l.s4 1934713408
      %v1199 = vunpack.c.0.s8 %v1198
      %v1200 = vperm.slane %v1194, %v1199
      %v1202 = vunpack.c.l.s4 1934713408
      %v1203 = vunpack.c.0.s8 %v1202
      %v1204 = vperm.slane %v1196, %v1203
      %v1205 = vrot.slane %v1200, 4
      %v1206 = vsel %vm855, %v1205, %v1188
      %v1207 = vrot.slane %v1188, 4
      %v1208 = vsel %vm855, %v1200, %v1207
      %v1209 = vrot.slane %v1204, 4
      %v1210 = vsel %vm855, %v1209, %v1192
      %v1211 = vrot.slane %v1192, 4
      %v1212 = vsel %vm855, %v1204, %v1211
      %v1213 = vpack.c.bf16 %v1206, %v1206
      %v1214 = vpack.c.bf16 %v1208, %v1208
      %v1215 = vpack.c.bf16 %v1210, %v1210
      %v1216 = vpack.c.bf16 %v1212, %v1212
      %vm1217 = vcmask 261120
      %v1219 = vsel %vm1217, %v965, 0
      %v1222 = vsel %vm1217, %v1089, 0
      %1224 = vmatpush.bf16.xpose.msra.mxu0 0
      %1225 = vmatpush.bf16.xpose.msra.mxu0 0
      %1226 = vmatpush.bf16.xpose.msra.mxu0 0
      %1227 = vmatpush.bf16.xpose.msra.mxu0 0
      %1228 = vmatpush.bf16.xpose.msra.mxu0 0
      %1229 = vmatpush.bf16.xpose.msra.mxu0 0
      %1230 = vmatpush.bf16.xpose.msra.mxu0 0
      %1231 = vmatpush.bf16.xpose.msra.mxu0 %v1222
      %1232 = vmatmul.bf16.gmra.mxu0 %v1219
      %v1233 = vpop.f32.mrf.mxu0
      %v1234 = vadd.f32 0.0, %v1233
      %v1235 = vpop.f32.mrf.mxu0
      %1236 = vdwg.mxu0
      %v1238 = vsel %vm1217, %v966, 0
      %v1241 = vsel %vm1217, %v1090, 0
      %1243 = vmatpush.bf16.xpose.msra.mxu0 0
      %1244 = vmatpush.bf16.xpose.msra.mxu0 0
      %1245 = vmatpush.bf16.xpose.msra.mxu0 0
      %1246 = vmatpush.bf16.xpose.msra.mxu0 0
      %1247 = vmatpush.bf16.xpose.msra.mxu0 0
      %1248 = vmatpush.bf16.xpose.msra.mxu0 0
      %1249 = vmatpush.bf16.xpose.msra.mxu0 0
      %1250 = vmatpush.bf16.xpose.msra.mxu0 %v1241
      %1251 = vmatmul.bf16.gmra.mxu0 %v1238
      %v1252 = vpop.f32.mrf.mxu0
      %v1253 = vadd.f32 0.0, %v1252
      %v1254 = vpop.f32.mrf.mxu0
      %1255 = vdwg.mxu0
      %v1257 = vsel %vm1217, %v967, 0
      %v1260 = vsel %vm1217, %v1091, 0
      %1262 = vmatpush.bf16.xpose.msra.mxu0 0
      %1263 = vmatpush.bf16.xpose.msra.mxu0 0
      %1264 = vmatpush.bf16.xpose.msra.mxu0 0
      %1265 = vmatpush.bf16.xpose.msra.mxu0 0
      %1266 = vmatpush.bf16.xpose.msra.mxu0 0
      %1267 = vmatpush.bf16.xpose.msra.mxu0 0
      %1268 = vmatpush.bf16.xpose.msra.mxu0 0
      %1269 = vmatpush.bf16.xpose.msra.mxu0 %v1260
      %1270 = vmatmul.bf16.gmra.mxu0 %v1257
      %v1271 = vpop.f32.mrf.mxu0
      %v1272 = vadd.f32 0.0, %v1271
      %v1273 = vpop.f32.mrf.mxu0
      %1274 = vdwg.mxu0
      %v1276 = vsel %vm1217, %v968, 0
      %v1279 = vsel %vm1217, %v1092, 0
      %1281 = vmatpush.bf16.xpose.msra.mxu0 0
      %1282 = vmatpush.bf16.xpose.msra.mxu0 0
      %1283 = vmatpush.bf16.xpose.msra.mxu0 0
      %1284 = vmatpush.bf16.xpose.msra.mxu0 0
      %1285 = vmatpush.bf16.xpose.msra.mxu0 0
      %1286 = vmatpush.bf16.xpose.msra.mxu0 0
      %1287 = vmatpush.bf16.xpose.msra.mxu0 0
      %1288 = vmatpush.bf16.xpose.msra.mxu0 %v1279
      %1289 = vmatmul.bf16.gmra.mxu0 %v1276
      %v1290 = vpop.f32.mrf.mxu0
      %v1291 = vadd.f32 0.0, %v1290
      %v1292 = vpop.f32.mrf.mxu0
      %1293 = vdwg.mxu0
      %v1294 = vmul.f32 %v1234, 0.17677669
      %v1295 = vmul.f32 %v1253, 0.17677669
      %v1296 = vmul.f32 %v1272, 0.17677669
      %v1297 = vmul.f32 %v1291, 0.17677669
      %v1298 = vadd.f32 %v1294, %v613
      %v1299 = vadd.f32 %v1295, %v613
      %v1300 = vadd.f32 %v1296, %v613
      %v1301 = vadd.f32 %v1297, %v613
      %vm1302 = vcmask 64512
      %v1303 = vsel %vm1302, %v1298, -inf
      %1304 = vmax.xlane.f32.xlu0 %v1303
      %v1305 = vpop.xlane.xlu0 %1304
      %v1306 = vsel %vm1302, %v1299, -inf
      %1307 = vmax.xlane.f32.xlu0 %v1306
      %v1308 = vpop.xlane.xlu0 %1307
      %v1309 = vsel %vm1302, %v1300, -inf
      %1310 = vmax.xlane.f32.xlu0 %v1309
      %v1311 = vpop.xlane.xlu0 %1310
      %v1312 = vsel %vm1302, %v1301, -inf
      %1313 = vmax.xlane.f32.xlu0 %v1312
      %v1314 = vpop.xlane.xlu0 %1313
      %v1315 = vsub.f32 %v1298, %v1305
      %v1316 = vsub.f32 %v1299, %v1308
      %v1317 = vsub.f32 %v1300, %v1311
      %v1318 = vsub.f32 %v1301, %v1314
      %v1319 = vmul.f32 %v1315, 1.442695
      %v1320 = vpow.pop %v1319
      %v1321 = vmul.f32 %v1316, 1.442695
      %v1322 = vpow.pop %v1321
      %v1323 = vmul.f32 %v1317, 1.442695
      %v1324 = vpow.pop %v1323
      %v1325 = vmul.f32 %v1318, 1.442695
      %v1326 = vpow.pop %v1325
      %v1327 = vsel %vm1302, %v1320, 0.0
      %1328 = vadd.xlane.f32.xlu0 %v1327
      %v1329 = vpop.xlane.xlu0 %1328
      %v1330 = vsel %vm1302, %v1322, 0.0
      %1331 = vadd.xlane.f32.xlu0 %v1330
      %v1332 = vpop.xlane.xlu0 %1331
      %v1333 = vsel %vm1302, %v1324, 0.0
      %1334 = vadd.xlane.f32.xlu0 %v1333
      %v1335 = vpop.xlane.xlu0 %1334
      %v1336 = vsel %vm1302, %v1326, 0.0
      %1337 = vadd.xlane.f32.xlu0 %v1336
      %v1338 = vpop.xlane.xlu0 %1337
      %v1339 = vrcp.pop %v1329
      %v1340 = vrcp.pop %v1332
      %v1341 = vrcp.pop %v1335
      %v1342 = vrcp.pop %v1338
      %v1343 = vmul.f32 %v1320, %v1339
      %v1344 = vmul.f32 %v1322, %v1340
      %v1345 = vmul.f32 %v1324, %v1341
      %v1346 = vmul.f32 %v1326, %v1342
      %v1347 = vpack.c.bf16 %v1343, %v1343
      %v1348 = vpack.c.bf16 %v1344, %v1344
      %v1349 = vpack.c.bf16 %v1345, %v1345
      %v1350 = vpack.c.bf16 %v1346, %v1346
      %v1352 = vsel %vm1302, %v1347, 0
      %vm1354 = vcmask 1043456
      %v1356 = vsel %vm1354, %v1213, 0
      %1358 = vmatpush.bf16.msra.mxu0 0
      %1359 = vmatpush.bf16.msra.mxu0 0
      %1360 = vmatpush.bf16.msra.mxu0 0
      %1361 = vmatpush.bf16.msra.mxu0 0
      %1362 = vmatpush.bf16.msra.mxu0 0
      %1363 = vmatpush.bf16.msra.mxu0 0
      %1364 = vmatpush.bf16.msra.mxu0 0
      %1365 = vmatpush.bf16.msra.mxu0 %v1356
      %1366 = vmatmul.bf16.gmra.mxu0 %v1352
      %v1367 = vpop.f32.mrf.mxu0
      %v1368 = vadd.f32 0.0, %v1367
      %v1369 = vpop.f32.mrf.mxu0
      %1370 = vdwg.mxu0
      %v1372 = vsel %vm1302, %v1348, 0
      %v1375 = vsel %vm1354, %v1214, 0
      %1377 = vmatpush.bf16.msra.mxu0 0
      %1378 = vmatpush.bf16.msra.mxu0 0
      %1379 = vmatpush.bf16.msra.mxu0 0
      %1380 = vmatpush.bf16.msra.mxu0 0
      %1381 = vmatpush.bf16.msra.mxu0 0
      %1382 = vmatpush.bf16.msra.mxu0 0
      %1383 = vmatpush.bf16.msra.mxu0 0
      %1384 = vmatpush.bf16.msra.mxu0 %v1375
      %1385 = vmatmul.bf16.gmra.mxu0 %v1372
      %v1386 = vpop.f32.mrf.mxu0
      %v1387 = vadd.f32 0.0, %v1386
      %v1388 = vpop.f32.mrf.mxu0
      %1389 = vdwg.mxu0
      %v1391 = vsel %vm1302, %v1349, 0
      %v1394 = vsel %vm1354, %v1215, 0
      %1396 = vmatpush.bf16.msra.mxu0 0
      %1397 = vmatpush.bf16.msra.mxu0 0
      %1398 = vmatpush.bf16.msra.mxu0 0
      %1399 = vmatpush.bf16.msra.mxu0 0
      %1400 = vmatpush.bf16.msra.mxu0 0
      %1401 = vmatpush.bf16.msra.mxu0 0
      %1402 = vmatpush.bf16.msra.mxu0 0
      %1403 = vmatpush.bf16.msra.mxu0 %v1394
      %1404 = vmatmul.bf16.gmra.mxu0 %v1391
      %v1405 = vpop.f32.mrf.mxu0
      %v1406 = vadd.f32 0.0, %v1405
      %v1407 = vpop.f32.mrf.mxu0
      %1408 = vdwg.mxu0
      %v1410 = vsel %vm1302, %v1350, 0
      %v1413 = vsel %vm1354, %v1216, 0
      %1415 = vmatpush.bf16.msra.mxu0 0
      %1416 = vmatpush.bf16.msra.mxu0 0
      %1417 = vmatpush.bf16.msra.mxu0 0
      %1418 = vmatpush.bf16.msra.mxu0 0
      %1419 = vmatpush.bf16.msra.mxu0 0
      %1420 = vmatpush.bf16.msra.mxu0 0
      %1421 = vmatpush.bf16.msra.mxu0 0
      %1422 = vmatpush.bf16.msra.mxu0 %v1413
      %1423 = vmatmul.bf16.gmra.mxu0 %v1410
      %v1424 = vpop.f32.mrf.mxu0
      %v1425 = vadd.f32 0.0, %v1424
      %v1426 = vpop.f32.mrf.mxu0
      %1427 = vdwg.mxu0
      %v1428 = vrot.slane %v1406, 4
      %v1429 = vsel %vm855, %v1428, %v1368
      %v1430 = vrot.slane %v1368, 4
      %v1431 = vsel %vm855, %v1406, %v1430
      %v1433 = vunpack.c.l.s4 1983009808
      %v1434 = vunpack.c.0.s8 %v1433
      %v1435 = vperm.slane %v1429, %v1434
      %v1437 = vunpack.c.l.s4 1983009808
      %v1438 = vunpack.c.0.s8 %v1437
      %v1439 = vperm.slane %v1431, %v1438
      %v1440 = vrot.slane %v1425, 4
      %v1441 = vsel %vm855, %v1440, %v1387
      %v1442 = vrot.slane %v1387, 4
      %v1443 = vsel %vm855, %v1425, %v1442
      %v1445 = vunpack.c.l.s4 1983009808
      %v1446 = vunpack.c.0.s8 %v1445
      %v1447 = vperm.slane %v1441, %v1446
      %v1449 = vunpack.c.l.s4 1983009808
      %v1450 = vunpack.c.0.s8 %v1449
      %v1451 = vperm.slane %v1443, %v1450
      %v1452 = vrot.slane %v1447, 4
      %v1453 = vsel %vm855, %v1452, %v1435
      %v1454 = vrot.slane %v1435, 4
      %v1455 = vsel %vm855, %v1447, %v1454
      %v1457 = vunpack.c.l.s4 1934713408
      %v1458 = vunpack.c.0.s8 %v1457
      %v1459 = vperm.slane %v1453, %v1458
      %v1461 = vunpack.c.l.s4 1934713408
      %v1462 = vunpack.c.0.s8 %v1461
      %v1463 = vperm.slane %v1455, %v1462
      %v1464 = vrot.slane %v1451, 4
      %v1465 = vsel %vm855, %v1464, %v1439
      %v1466 = vrot.slane %v1439, 4
      %v1467 = vsel %vm855, %v1451, %v1466
      %v1469 = vunpack.c.l.s4 1934713408
      %v1470 = vunpack.c.0.s8 %v1469
      %v1471 = vperm.slane %v1465, %v1470
      %v1473 = vunpack.c.l.s4 1934713408
      %v1474 = vunpack.c.0.s8 %v1473
      %v1475 = vperm.slane %v1467, %v1474
      %v1476 = vrot.slane %v1459, 4
      %v1477 = vsel %vm855, 0.0, %v1476
      %v1478 = vrot.slane %v1463, 4
      %v1479 = vsel %vm855, 0.0, %v1478
      %v1480 = vrot.slane %v1471, 4
      %v1481 = vsel %vm855, 0.0, %v1480
      %v1482 = vrot.slane %v1475, 4
      %v1483 = vsel %vm855, 0.0, %v1482
      %v1484 = vsel %vm855, %v1478, %v1459
      %v1486 = vunpack.c.l.s4 1983009808
      %v1487 = vunpack.c.0.s8 %v1486
      %v1488 = vperm.slane %v1484, %v1487
      %v1489 = vrot.slane %v1479, 4
      %v1490 = vsel %vm855, %v1489, %v1477
      %v1492 = vunpack.c.l.s4 1983009808
      %v1493 = vunpack.c.0.s8 %v1492
      %v1494 = vperm.slane %v1490, %v1493
      %v1495 = vsel %vm855, %v1482, %v1471
      %v1497 = vunpack.c.l.s4 1983009808
      %v1498 = vunpack.c.0.s8 %v1497
      %v1499 = vperm.slane %v1495, %v1498
      %v1500 = vrot.slane %v1483, 4
      %v1501 = vsel %vm855, %v1500, %v1481
      %v1503 = vunpack.c.l.s4 1983009808
      %v1504 = vunpack.c.0.s8 %v1503
      %v1505 = vperm.slane %v1501, %v1504
      %v1506 = vrot.slane %v1494, 4
      %v1507 = vsel %vm855, %v1506, %v1488
      %v1508 = vrot.slane %v1488, 4
      %v1509 = vsel %vm855, %v1494, %v1508
      %v1511 = vunpack.c.l.s4 1934713408
      %v1512 = vunpack.c.0.s8 %v1511
      %v1513 = vperm.slane %v1507, %v1512
      %v1515 = vunpack.c.l.s4 1934713408
      %v1516 = vunpack.c.0.s8 %v1515
      %v1517 = vperm.slane %v1509, %v1516
      %v1518 = vrot.slane %v1505, 4
      %v1519 = vsel %vm855, %v1518, %v1499
      %v1520 = vrot.slane %v1499, 4
      %v1521 = vsel %vm855, %v1505, %v1520
      %v1523 = vunpack.c.l.s4 1934713408
      %v1524 = vunpack.c.0.s8 %v1523
      %v1525 = vperm.slane %v1519, %v1524
      %v1527 = vunpack.c.l.s4 1934713408
      %v1528 = vunpack.c.0.s8 %v1527
      %v1529 = vperm.slane %v1521, %v1528
      %v1530 = vrot.slane %v1525, 4
      %v1531 = vsel %vm855, %v1530, %v1513
      %v1532 = vrot.slane %v1513, 4
      %v1533 = vsel %vm855, %v1525, %v1532
      %v1534 = vrot.slane %v1529, 4
      %v1535 = vsel %vm855, %v1534, %v1517
      %v1536 = vrot.slane %v1517, 4
      %v1537 = vsel %vm855, %v1529, %v1536
      %1539 = vrot.lane.b32.xlu0 %v1533, 32
      %v1540 = vpop.permute.xlu0 %1539
      %1543 = vrot.lane.b32.xlu0 %v1535, 64
      %v1544 = vpop.permute.xlu0 %1543
      %1547 = vrot.lane.b32.xlu0 %v1537, 96
      %v1548 = vpop.permute.xlu0 %1547
      %v1550 = vsel %vm1217, %v1531, %v1540
      %vm1551 = vcmask 523264
      %v1552 = vsel %vm1551, %v1550, %v1544
      %vm1553 = vcmask 785408
      %v1554 = vsel %vm1553, %v1552, %v1548
      %v1555 = vpack.c.bf16 %v1554, %v1554
      %v1557 = vperm.slane %v664, 0
      %v1575 = vunpack.c.l.b16 %v648
      %v1576 = vunpack.c.l.b16 %v649
      %v1577 = vunpack.c.l.b16 %v650
      %v1578 = vunpack.c.l.b16 %v651
      %v1579 = vunpack.c.l.b16 %v652
      %v1580 = vunpack.c.l.b16 %v653
      %v1581 = vunpack.c.l.b16 %v654
      %v1582 = vunpack.c.l.b16 %v655
      %v1583 = vunpack.c.l.b16 %v656
      %v1584 = vunpack.c.l.b16 %v657
      %v1585 = vunpack.c.l.b16 %v658
      %v1586 = vunpack.c.l.b16 %v659
      %v1587 = vunpack.c.l.b16 %v660
      %v1588 = vunpack.c.l.b16 %v661
      %v1589 = vunpack.c.l.b16 %v662
      %v1590 = vunpack.c.l.b16 %v663
      %v1591 = vpack.c.b16 %v1576, %v1575
      %v1592 = vpack.c.b16 %v1578, %v1577
      %v1593 = vpack.c.b16 %v1580, %v1579
      %v1594 = vpack.c.b16 %v1582, %v1581
      %v1595 = vpack.c.b16 %v1584, %v1583
      %v1596 = vpack.c.b16 %v1586, %v1585
      %v1597 = vpack.c.b16 %v1588, %v1587
      %v1598 = vpack.c.b16 %v1590, %v1589
      %1607 = vmatpush.bf16.msra.mxu0 %v1598
      %1608 = vmatpush.bf16.msra.mxu0 %v1597
      %1609 = vmatpush.bf16.msra.mxu0 %v1596
      %1610 = vmatpush.bf16.msra.mxu0 %v1595
      %1611 = vmatpush.bf16.msra.mxu0 %v1594
      %1612 = vmatpush.bf16.msra.mxu0 %v1593
      %1613 = vmatpush.bf16.msra.mxu0 %v1592
      %1614 = vmatpush.bf16.msra.mxu0 %v1591
      %1615 = vmatmul.bf16.gmra.mxu0 %v1555
      %v1616 = vpop.f32.mrf.mxu0
      %v1617 = vadd.f32 %v1557, %v1616
      %v1618 = vpop.f32.mrf.mxu0
      %1619 = vdwg.mxu0
      %v1620 = vadd.f32 %v1617, %v607
      %1621 = vadd.xlane.f32.xlu0 %v1620
      %v1622 = vpop.xlane.xlu0 %1621
      %v1623 = vrcp.pop 128.0
      %v1624 = vmul.f32 128.0, %v1623
      %v1625 = vsub.f32 1.0, %v1624
      %v1626 = vmul.f32 %v1623, %v1625
      %v1627 = vadd.f32 %v1623, %v1626
      %vm1628 = vweird.f32 %v1623
      %v1629 = vsel %vm1628, %v1623, %v1627
      %v1630 = vmul.f32 %v1622, %v1629
      %v1631 = vsub.f32 %v1620, %v1630
      %v1632 = vmul.f32 %v1631, %v1631
      %1633 = vadd.xlane.f32.xlu0 %v1632
      %v1634 = vpop.xlane.xlu0 %1633
      %v1635 = vmul.f32 %v1634, %v1629
      %v1636 = vadd.f32 %v1635, 1e-05
      %v1637 = vrsqrt.pop %v1636
      %v1638 = vmul.f32 %v1637, %v1636
      %v1639 = vmul.f32 %v1638, %v1637
      %v1640 = vmul.f32 0.5, %v1639
      %v1641 = vsub.f32 1.5, %v1640
      %v1642 = vmul.f32 %v1637, %v1641
      %vm1643 = vweird.f32 %v1636
      %vm1644 = vweird.f32 %v1637
      %vm1645 = vmor %vm1643, %vm1644
      %v1646 = vsel %vm1645, %v1637, %v1642
      %v1647 = vmul.f32 %v1631, %v1646
      %v1649 = vperm.slane %v665, 0
      %v1651 = vmul.f32 %v1647, %v1649
      %v1653 = vperm.slane %v666, 0
      %v1655 = vadd.f32 %v1651, %v1653
      %v1656 = vld [vmem:[%s11] sm:$0xff]
      %v1657 = vld [vmem:[%s11 + $0x8] sm:$0xff]
      %v1658 = vld [vmem:[%s11 + $0x10] sm:$0xff]
      %v1659 = vld [vmem:[%s11 + $0x18] sm:$0xff]
      %v1660 = vld [vmem:[%s11 + $0x20] sm:$0xff]
      %v1661 = vld [vmem:[%s11 + $0x28] sm:$0xff]
      %v1662 = vld [vmem:[%s11 + $0x30] sm:$0xff]
      %v1663 = vld [vmem:[%s11 + $0x38] sm:$0xff]
      %v1664 = vld [vmem:[%s11 + $0x40] sm:$0xff]
      %v1665 = vld [vmem:[%s11 + $0x48] sm:$0xff]
      %v1666 = vld [vmem:[%s11 + $0x50] sm:$0xff]
      %v1667 = vld [vmem:[%s11 + $0x58] sm:$0xff]
      %v1668 = vld [vmem:[%s11 + $0x60] sm:$0xff]
      %v1669 = vld [vmem:[%s11 + $0x68] sm:$0xff]
      %v1670 = vld [vmem:[%s11 + $0x70] sm:$0xff]
      %v1671 = vld [vmem:[%s11 + $0x78] sm:$0xff]
      %v1672 = vld [vmem:[%s12] sm:$0x3]
      %v1673 = vld [vmem:[%s13] sm:$0xf]
      %v1674 = vld [vmem:[%s13 + $0x4] sm:$0xf]
      %v1675 = vld [vmem:[%s13 + $0x8] sm:$0xf]
      %v1676 = vld [vmem:[%s13 + $0xc] sm:$0xf]
      %v1677 = vld [vmem:[%s13 + $0x10] sm:$0xf]
      %v1678 = vld [vmem:[%s13 + $0x14] sm:$0xf]
      %v1679 = vld [vmem:[%s13 + $0x18] sm:$0xf]
      %v1680 = vld [vmem:[%s13 + $0x1c] sm:$0xf]
      %v1681 = vld [vmem:[%s13 + $0x20] sm:$0xf]
      %v1682 = vld [vmem:[%s13 + $0x24] sm:$0xf]
      %v1683 = vld [vmem:[%s13 + $0x28] sm:$0xf]
      %v1684 = vld [vmem:[%s13 + $0x2c] sm:$0xf]
      %v1685 = vld [vmem:[%s13 + $0x30] sm:$0xf]
      %v1686 = vld [vmem:[%s13 + $0x34] sm:$0xf]
      %v1687 = vld [vmem:[%s13 + $0x38] sm:$0xf]
      %v1688 = vld [vmem:[%s13 + $0x3c] sm:$0xf]
      %v1689 = vld [vmem:[%s13 + $0x40] sm:$0xf]
      %v1690 = vld [vmem:[%s13 + $0x44] sm:$0xf]
      %v1691 = vld [vmem:[%s13 + $0x48] sm:$0xf]
      %v1692 = vld [vmem:[%s13 + $0x4c] sm:$0xf]
      %v1693 = vld [vmem:[%s13 + $0x50] sm:$0xf]
      %v1694 = vld [vmem:[%s13 + $0x54] sm:$0xf]
      %v1695 = vld [vmem:[%s13 + $0x58] sm:$0xf]
      %v1696 = vld [vmem:[%s13 + $0x5c] sm:$0xf]
      %v1697 = vld [vmem:[%s13 + $0x60] sm:$0xf]
      %v1698 = vld [vmem:[%s13 + $0x64] sm:$0xf]
      %v1699 = vld [vmem:[%s13 + $0x68] sm:$0xf]
      %v1700 = vld [vmem:[%s13 + $0x6c] sm:$0xf]
      %v1701 = vld [vmem:[%s13 + $0x70] sm:$0xf]
      %v1702 = vld [vmem:[%s13 + $0x74] sm:$0xf]
      %v1703 = vld [vmem:[%s13 + $0x78] sm:$0xf]
      %v1704 = vld [vmem:[%s13 + $0x7c] sm:$0xf]
      %v1705 = vld [vmem:[%s14] sm:$0x1]
      %v1706 = vld [vmem:[%s15] sm:$0x1]
      %v1707 = vld [vmem:[%s16] sm:$0x1]
      %v1708 = vpack.c.bf16 %v1655, %v1655
      %v1710 = vperm.slane %v1672, 0
      %v1711 = vperm.slane %v1672, 1
      %v1730 = vunpack.c.l.b16 %v1656
      %v1731 = vunpack.c.h.b16 %v1656
      %v1732 = vunpack.c.l.b16 %v1657
      %v1733 = vunpack.c.h.b16 %v1657
      %v1734 = vunpack.c.l.b16 %v1658
      %v1735 = vunpack.c.h.b16 %v1658
      %v1736 = vunpack.c.l.b16 %v1659
      %v1737 = vunpack.c.h.b16 %v1659
      %v1738 = vunpack.c.l.b16 %v1660
      %v1739 = vunpack.c.h.b16 %v1660
      %v1740 = vunpack.c.l.b16 %v1661
      %v1741 = vunpack.c.h.b16 %v1661
      %v1742 = vunpack.c.l.b16 %v1662
      %v1743 = vunpack.c.h.b16 %v1662
      %v1744 = vunpack.c.l.b16 %v1663
      %v1745 = vunpack.c.h.b16 %v1663
      %v1746 = vunpack.c.l.b16 %v1664
      %v1747 = vunpack.c.h.b16 %v1664
      %v1748 = vunpack.c.l.b16 %v1665
      %v1749 = vunpack.c.h.b16 %v1665
      %v1750 = vunpack.c.l.b16 %v1666
      %v1751 = vunpack.c.h.b16 %v1666
      %v1752 = vunpack.c.l.b16 %v1667
      %v1753 = vunpack.c.h.b16 %v1667
      %v1754 = vunpack.c.l.b16 %v1668
      %v1755 = vunpack.c.h.b16 %v1668
      %v1756 = vunpack.c.l.b16 %v1669
      %v1757 = vunpack.c.h.b16 %v1669
      %v1758 = vunpack.c.l.b16 %v1670
      %v1759 = vunpack.c.h.b16 %v1670
      %v1760 = vunpack.c.l.b16 %v1671
      %v1761 = vunpack.c.h.b16 %v1671
      %v1762 = vpack.c.b16 %v1732, %v1730
      %v1763 = vpack.c.b16 %v1733, %v1731
      %v1764 = vpack.c.b16 %v1736, %v1734
      %v1765 = vpack.c.b16 %v1737, %v1735
      %v1766 = vpack.c.b16 %v1740, %v1738
      %v1767 = vpack.c.b16 %v1741, %v1739
      %v1768 = vpack.c.b16 %v1744, %v1742
      %v1769 = vpack.c.b16 %v1745, %v1743
      %v1770 = vpack.c.b16 %v1748, %v1746
      %v1771 = vpack.c.b16 %v1749, %v1747
      %v1772 = vpack.c.b16 %v1752, %v1750
      %v1773 = vpack.c.b16 %v1753, %v1751
      %v1774 = vpack.c.b16 %v1756, %v1754
      %v1775 = vpack.c.b16 %v1757, %v1755
      %v1776 = vpack.c.b16 %v1760, %v1758
      %v1777 = vpack.c.b16 %v1761, %v1759
      %1794 = vmatpush.bf16.msra.mxu0 %v1776
      %1795 = vmatpush.bf16.msra.mxu0 %v1774
      %1796 = vmatpush.bf16.msra.mxu0 %v1772
      %1797 = vmatpush.bf16.msra.mxu0 %v1770
      %1798 = vmatpush.bf16.msra.mxu0 %v1768
      %1799 = vmatpush.bf16.msra.mxu0 %v1766
      %1800 = vmatpush.bf16.msra.mxu0 %v1764
      %1801 = vmatpush.bf16.msra.mxu0 %v1762
      %1802 = vmatmul.bf16.gmra.mxu0 %v1708
      %v1803 = vpop.f32.mrf.mxu0
      %v1804 = vadd.f32 %v1710, %v1803
      %v1805 = vpop.f32.mrf.mxu0
      %1806 = vdwg.mxu0
      %1807 = vmatpush.bf16.msra.mxu0 %v1777
      %1808 = vmatpush.bf16.msra.mxu0 %v1775
      %1809 = vmatpush.bf16.msra.mxu0 %v1773
      %1810 = vmatpush.bf16.msra.mxu0 %v1771
      %1811 = vmatpush.bf16.msra.mxu0 %v1769
      %1812 = vmatpush.bf16.msra.mxu0 %v1767
      %1813 = vmatpush.bf16.msra.mxu0 %v1765
      %1814 = vmatpush.bf16.msra.mxu0 %v1763
      %1815 = vmatmul.bf16.gmra.mxu0 %v1708
      %v1816 = vpop.f32.mrf.mxu0
      %v1817 = vadd.f32 %v1711, %v1816
      %v1818 = vpop.f32.mrf.mxu0
      %1819 = vdwg.mxu0
      %v1820 = vmax.f32 %v1804, 0.0
      %v1821 = vmax.f32 %v1817, 0.0
      %v1822 = vpack.c.bf16 %v1820, %v1820
      %v1823 = vpack.c.bf16 %v1821, %v1821
      %v1825 = vperm.slane %v1705, 0
      %v1859 = vunpack.c.l.b16 %v1673
      %v1860 = vunpack.c.l.b16 %v1674
      %v1861 = vunpack.c.l.b16 %v1675
      %v1862 = vunpack.c.l.b16 %v1676
      %v1863 = vunpack.c.l.b16 %v1677
      %v1864 = vunpack.c.l.b16 %v1678
      %v1865 = vunpack.c.l.b16 %v1679
      %v1866 = vunpack.c.l.b16 %v1680
      %v1867 = vunpack.c.l.b16 %v1681
      %v1868 = vunpack.c.l.b16 %v1682
      %v1869 = vunpack.c.l.b16 %v1683
      %v1870 = vunpack.c.l.b16 %v1684
      %v1871 = vunpack.c.l.b16 %v1685
      %v1872 = vunpack.c.l.b16 %v1686
      %v1873 = vunpack.c.l.b16 %v1687
      %v1874 = vunpack.c.l.b16 %v1688
      %v1875 = vunpack.c.l.b16 %v1689
      %v1876 = vunpack.c.l.b16 %v1690
      %v1877 = vunpack.c.l.b16 %v1691
      %v1878 = vunpack.c.l.b16 %v1692
      %v1879 = vunpack.c.l.b16 %v1693
      %v1880 = vunpack.c.l.b16 %v1694
      %v1881 = vunpack.c.l.b16 %v1695
      %v1882 = vunpack.c.l.b16 %v1696
      %v1883 = vunpack.c.l.b16 %v1697
      %v1884 = vunpack.c.l.b16 %v1698
      %v1885 = vunpack.c.l.b16 %v1699
      %v1886 = vunpack.c.l.b16 %v1700
      %v1887 = vunpack.c.l.b16 %v1701
      %v1888 = vunpack.c.l.b16 %v1702
      %v1889 = vunpack.c.l.b16 %v1703
      %v1890 = vunpack.c.l.b16 %v1704
      %v1891 = vpack.c.b16 %v1860, %v1859
      %v1892 = vpack.c.b16 %v1862, %v1861
      %v1893 = vpack.c.b16 %v1864, %v1863
      %v1894 = vpack.c.b16 %v1866, %v1865
      %v1895 = vpack.c.b16 %v1868, %v1867
      %v1896 = vpack.c.b16 %v1870, %v1869
      %v1897 = vpack.c.b16 %v1872, %v1871
      %v1898 = vpack.c.b16 %v1874, %v1873
      %v1899 = vpack.c.b16 %v1876, %v1875
      %v1900 = vpack.c.b16 %v1878, %v1877
      %v1901 = vpack.c.b16 %v1880, %v1879
      %v1902 = vpack.c.b16 %v1882, %v1881
      %v1903 = vpack.c.b16 %v1884, %v1883
      %v1904 = vpack.c.b16 %v1886, %v1885
      %v1905 = vpack.c.b16 %v1888, %v1887
      %v1906 = vpack.c.b16 %v1890, %v1889
      %1923 = vmatpush.bf16.msra.mxu0 %v1898
      %1924 = vmatpush.bf16.msra.mxu0 %v1897
      %1925 = vmatpush.bf16.msra.mxu0 %v1896
      %1926 = vmatpush.bf16.msra.mxu0 %v1895
      %1927 = vmatpush.bf16.msra.mxu0 %v1894
      %1928 = vmatpush.bf16.msra.mxu0 %v1893
      %1929 = vmatpush.bf16.msra.mxu0 %v1892
      %1930 = vmatpush.bf16.msra.mxu0 %v1891
      %1931 = vmatmul.bf16.gmra.mxu0 %v1822
      %v1932 = vpop.f32.mrf.mxu0
      %v1933 = vadd.f32 %v1825, %v1932
      %v1934 = vpop.f32.mrf.mxu0
      %1935 = vdwg.mxu0
      %1936 = vmatpush.bf16.msra.mxu0 %v1906
      %1937 = vmatpush.bf16.msra.mxu0 %v1905
      %1938 = vmatpush.bf16.msra.mxu0 %v1904
      %1939 = vmatpush.bf16.msra.mxu0 %v1903
      %1940 = vmatpush.bf16.msra.mxu0 %v1902
      %1941 = vmatpush.bf16.msra.mxu0 %v1901
      %1942 = vmatpush.bf16.msra.mxu0 %v1900
      %1943 = vmatpush.bf16.msra.mxu0 %v1899
      %1944 = vmatmul.bf16.gmra.mxu0 %v1823
      %v1945 = vpop.f32.mrf.mxu0
      %v1946 = vadd.f32 %v1933, %v1945
      %v1947 = vpop.f32.mrf.mxu0
      %1948 = vdwg.mxu0
      %v1949 = vadd.f32 %v1946, %v1655
      %1950 = vadd.xlane.f32.xlu0 %v1949
      %v1951 = vpop.xlane.xlu0 %1950
      %v1952 = vmul.f32 %v1951, %v1629
      %v1953 = vsub.f32 %v1949, %v1952
      %v1954 = vmul.f32 %v1953, %v1953
      %1955 = vadd.xlane.f32.xlu0 %v1954
      %v1956 = vpop.xlane.xlu0 %1955
      %v1957 = vmul.f32 %v1956, %v1629
      %v1958 = vadd.f32 %v1957, 1e-05
      %v1959 = vrsqrt.pop %v1958
      %v1960 = vmul.f32 %v1959, %v1958
      %v1961 = vmul.f32 %v1960, %v1959
      %v1962 = vmul.f32 0.5, %v1961
      %v1963 = vsub.f32 1.5, %v1962
      %v1964 = vmul.f32 %v1959, %v1963
      %vm1965 = vweird.f32 %v1958
      %vm1966 = vweird.f32 %v1959
      %vm1967 = vmor %vm1965, %vm1966
      %v1968 = vsel %vm1967, %v1959, %v1964
      %v1969 = vmul.f32 %v1953, %v1968
      %v1971 = vperm.slane %v1706, 0
      %v1973 = vmul.f32 %v1969, %v1971
      %v1975 = vperm.slane %v1707, 0
      %v1977 = vadd.f32 %v1973, %v1975
      %1978 = vst [vmem:[%s605] sm:$0xff] %v1977
      %p1979 = scmp.lt.s32.totalorder %s32, 1
      %s1980 = scalar_select %p1979, %s32, 1
      %p1981 = scmp.lt.s32.totalorder %s33, 0
      %s1982 = scalar_select %p1981, %s33, 0
      %s1983 = sadd.s32 %s1982, %s1980
      %s1984 = smul.addr %s1983, 8
      %s1985 = scalar_lea.vmem %s17, %s1984
      // Predicated region
      $region89: #{transformer_forward.5} parent=87 // pred_check
        %p1986 = pneg %p434
      $region90: #{transformer_forward.5} parent=87 // pred_check_branch
        %1988 = sbr.rel (%p1986) target = $region92
      $region91: #{transformer_forward.5} parent=87 // pred_region
        _
      $region92: #{transformer_forward.5} parent=87 // pred_fallthru
        _
    $region88: #{transformer_forward.5} parent=5 // pred_fallthru
      _
    %p1989 = scmp.le.s32.totalorder 2, %s23
    // Predicated region
    $region93: #{transformer_forward.5} parent=5 // pred_check
      %p1990 = pneg %p1989
    $region94: #{transformer_forward.5} parent=5 // pred_check_branch
      %1992 = sbr.rel (%p1990) target = $region96
    $region95: #{transformer_forward.5} parent=5 // pred_region
      %s1993 = ssub.s32 %s23, 2
      // Predicated region
      $region97: #{transformer_forward.5} parent=95 // pred_check
        %p1994 = pneg %p440
      $region98: #{transformer_forward.5} parent=95 // pred_check_branch
        %1996 = sbr.rel (%p1994) target = $region100
      $region99: #{transformer_forward.5} parent=95 // pred_region
        %p1997 = scmp.lt.s32.totalorder %s34, 1
        %s1998 = scalar_select %p1997, %s34, 1
        %p1999 = scmp.lt.s32.totalorder %s35, 0
        %s2000 = scalar_select %p1999, %s35, 0
        %s2001 = sadd.s32 %s2000, %s1998
        %s2002 = smul.addr %s2001, 8
        %s2003 = scalar_lea.vmem %s17, %s2002
      $region100: #{transformer_forward.5} parent=95 // pred_fallthru
        _
    $region96: #{transformer_forward.5} parent=5 // pred_fallthru
      _
  $region6: #{transformer_forward.5} parent=0 // loop_footer
    %s27 = sadd.s32 1, %s23
  $region7: #{transformer_forward.5} parent=0 // loop_footer_branch
    %22 = sbr.rel target = $region3
  $region8: #{transformer_forward.5} parent=0 // loop_exit
    _

// kernel: transformer_forward.7
$region0: #{transformer_forward.7}
  #allocation0 [shape = 'u32[]', space=smem, size = 0x4, offset = 0x4, fixed_abs, tag = 'smem constant byte address 0x4 - core index']
  #allocation1 [shape = 'u32[72,128]{1,0:T(1,128)}', space=vmem, size = 0x9000, scoped, tag = 'internal scratch']
  %s0 = inlined_call_operand.vmem [shape: f32[2,8,128], index: 0, kind: input, shape index: {}, may-alias: {0,1}]
  %s1 = inlined_call_operand.vmem [shape: f32[2,8,128], index: 1, kind: input, shape index: {}, may-alias: {0,1}]
  %s2 = inlined_call_operand.vmem [shape: f32[2,8,128], index: 2, kind: input, shape index: {}]
  %s3 = inlined_call_operand.vmem [shape: f32[2,1,8], index: 3, kind: input, shape index: {}]
  %s4 = inlined_call_operand.vmem [shape: f32[2,1,8], index: 4, kind: input, shape index: {}]
  %s5 = inlined_call_operand.vmem [shape: bf16[128,128], index: 5, kind: input, shape index: {}]
  %s6 = inlined_call_operand.vmem [shape: f32[1,128], index: 6, kind: input, shape index: {}]
  %s7 = inlined_call_operand.vmem [shape: bf16[128,256], index: 7, kind: input, shape index: {}]
  %s8 = inlined_call_operand.vmem [shape: f32[1,256], index: 8, kind: input, shape index: {}]
  %s9 = inlined_call_operand.vmem [shape: bf16[128,128], index: 9, kind: input, shape index: {}]
  %s10 = inlined_call_operand.vmem [shape: f32[1,128], index: 10, kind: input, shape index: {}]
  %s11 = inlined_call_operand.vmem [shape: f32[1,128], index: 11, kind: input, shape index: {}]
  %s12 = inlined_call_operand.vmem [shape: f32[1,128], index: 12, kind: input, shape index: {}]
  %s13 = inlined_call_operand.vmem [shape: bf16[128,128], index: 13, kind: input, shape index: {}]
  %s14 = inlined_call_operand.vmem [shape: f32[1,128], index: 14, kind: input, shape index: {}]
  %s15 = inlined_call_operand.vmem [shape: bf16[128,256], index: 15, kind: input, shape index: {}]
  %s16 = inlined_call_operand.vmem [shape: f32[1,256], index: 16, kind: input, shape index: {}]
  %s17 = inlined_call_operand.vmem [shape: bf16[128,128], index: 17, kind: input, shape index: {}]
  %s18 = inlined_call_operand.vmem [shape: f32[1,128], index: 18, kind: input, shape index: {}]
  %s19 = inlined_call_operand.vmem [shape: f32[1,128], index: 19, kind: input, shape index: {}]
  %s20 = inlined_call_operand.vmem [shape: f32[1,128], index: 20, kind: input, shape index: {}]
  %s21 = inlined_call_operand.vmem [shape: bf16[128,256], index: 21, kind: input, shape index: {}]
  %s22 = inlined_call_operand.vmem [shape: f32[1,256], index: 22, kind: input, shape index: {}]
  %s23 = inlined_call_operand.vmem [shape: bf16[256,128], index: 23, kind: input, shape index: {}]
  %s24 = inlined_call_operand.vmem [shape: f32[1,128], index: 24, kind: input, shape index: {}]
  %s25 = inlined_call_operand.vmem [shape: f32[1,128], index: 25, kind: input, shape index: {}]
  %s26 = inlined_call_operand.vmem [shape: f32[1,128], index: 26, kind: input, shape index: {}]
  %s27 = inlined_call_operand.vmem [shape: f32[2,8,128], index: 27, kind: output, shape index: {}]
  %s28 = sld [smem:[#allocation0]]
  $region141: #{transformer_forward.7} parent=0
    _
  %s30 = ssub.s32 1, %s28
  %s31 = scalar_select 0, %s30, %s28
  loop: start=0, step=1, limit=4
  $region2: #{transformer_forward.7} parent=0 // loop_pre_header
    _
  $region3: #{transformer_forward.7} parent=0 // loop_header
    %s33 = sphi 0, %s37
    %p34 = scmp.ge.s32.totalorder %s33, 4
    %s40 = sphi 0, %s52
    %s41 = sphi 0, %s48
    %s42 = sphi 0, %s40
    %s43 = sphi 0, %s41
    %s44 = sphi 0, %s42
    %s45 = sphi 0, %s43
    %s57 = sphi 0, %s59
    %s60 = sphi 0, %s57
    %s61 = sphi 0, %s60
    %s77 = sphi 0, %s61
    %s83 = sphi 0, %s85
    %s86 = sphi 0, %s83
    %s87 = sphi 0, %s86
    %s103 = sphi 0, %s87
    %s109 = sphi 0, %s111
    %s112 = sphi 0, %s109
    %s113 = sphi 0, %s112
    %s129 = sphi 0, %s113
    %s135 = sphi 0, %s137
    %s138 = sphi 0, %s135
    %s139 = sphi 0, %s138
    %s155 = sphi 0, %s139
    %s161 = sphi 0, %s163
    %s164 = sphi 0, %s161
    %s165 = sphi 0, %s164
    %s181 = sphi 0, %s165
    %s185 = sphi 0, %s185
    %s187 = sphi 0, %s185
    %s188 = sphi 0, %s187
    %s202 = sphi 0, %s188
    %s206 = sphi 0, %s206
    %s208 = sphi 0, %s206
    %s209 = sphi 0, %s208
    %s223 = sphi 0, %s209
    %s227 = sphi 0, %s227
    %s229 = sphi 0, %s227
    %s230 = sphi 0, %s229
    %s244 = sphi 0, %s230
    %s248 = sphi 0, %s248
    %s250 = sphi 0, %s248
    %s251 = sphi 0, %s250
    %s265 = sphi 0, %s251
    %s269 = sphi 0, %s269
    %s271 = sphi 0, %s269
    %s272 = sphi 0, %s271
    %s286 = sphi 0, %s272
    %s290 = sphi 0, %s290
    %s292 = sphi 0, %s290
    %s293 = sphi 0, %s292
    %s307 = sphi 0, %s293
    %s311 = sphi 0, %s311
    %s313 = sphi 0, %s311
    %s314 = sphi 0, %s313
    %s328 = sphi 0, %s314
    %s332 = sphi 0, %s332
    %s334 = sphi 0, %s332
    %s335 = sphi 0, %s334
    %s349 = sphi 0, %s335
    %s353 = sphi 0, %s353
    %s355 = sphi 0, %s353
    %s356 = sphi 0, %s355
    %s370 = sphi 0, %s356
    %s374 = sphi 0, %s374
    %s376 = sphi 0, %s374
    %s377 = sphi 0, %s376
    %s391 = sphi 0, %s377
    %s395 = sphi 0, %s395
    %s397 = sphi 0, %s395
    %s398 = sphi 0, %s397
    %s412 = sphi 0, %s398
    %s416 = sphi 0, %s416
    %s418 = sphi 0, %s416
    %s419 = sphi 0, %s418
    %s433 = sphi 0, %s419
    %s437 = sphi 0, %s437
    %s439 = sphi 0, %s437
    %s440 = sphi 0, %s439
    %s454 = sphi 0, %s440
    %s458 = sphi 0, %s458
    %s460 = sphi 0, %s458
    %s461 = sphi 0, %s460
    %s475 = sphi 0, %s461
    %s479 = sphi 0, %s479
    %s481 = sphi 0, %s479
    %s482 = sphi 0, %s481
    %s496 = sphi 0, %s482
    %s500 = sphi 0, %s500
    %s502 = sphi 0, %s500
    %s503 = sphi 0, %s502
    %s517 = sphi 0, %s503
    %s521 = sphi 0, %s521
    %s523 = sphi 0, %s521
    %s524 = sphi 0, %s523
    %s538 = sphi 0, %s524
    %s542 = sphi 0, %s542
    %s544 = sphi 0, %s542
    %s545 = sphi 0, %s544
    %s559 = sphi 0, %s545
    %s563 = sphi 0, %s563
    %s565 = sphi 0, %s563
    %s566 = sphi 0, %s565
    %s580 = sphi 0, %s566
    %s584 = sphi 0, %s584
    %s586 = sphi 0, %s584
    %s587 = sphi 0, %s586
    %s601 = sphi 0, %s587
    %s605 = sphi 0, %s605
    %s607 = sphi 0, %s605
    %s608 = sphi 0, %s607
    %s622 = sphi 0, %s608
    %s626 = sphi 0, %s626
    %s628 = sphi 0, %s626
    %s629 = sphi 0, %s628
    %s643 = sphi 0, %s629
    %s651 = sphi 0, %s653
    %s654 = sphi 0, %s651
    %s655 = sphi 0, %s654
    %s671 = sphi 0, %s655
  $region4: #{transformer_forward.7} parent=0 // loop_header_branch
    %36 = sbr.rel (%p34) target = $region8
  $region5: #{transformer_forward.7} parent=0 // loop_body
    %s38 = ssub.s32 %s33, 1
    %s39 = ssub.s32 %s33, 2
    %s46 = sadd.s32 1, %s41
    %p47 = scmp.ge.s32.totalorder %s46, 1
    %s48 = scalar_select %p47, 0, %s46
    %s49 = sadd.s32 1, %s40
    %s50 = scalar_select %p47, %s49, %s40
    %p51 = scmp.ge.s32.totalorder %s50, 2
    %s52 = scalar_select %p51, 0, %s50
    %s53 = ssub.s32 %s40, %s52
    %s54 = ssub.s32 %s41, %s48
    %s55 = sor.u32 %s53, %s54
    %p56 = scmp.eq.s32.totalorder %s55, 0
    %s58 = sadd.s32 %s57, 1
    %s59 = scalar_select %p56, %s57, %s58
    %p62 = pneg %p56
    %p63 = scmp.eq.s32.totalorder %s33, 1
    %p64 = por %p62, %p63
    %p65 = scmp.ne.s32.totalorder %s57, %s60
    %p66 = scmp.eq.s32.totalorder %s33, 0
    %p67 = por %p65, %p66
    %p68 = scmp.ne.s32.totalorder %s57, %s60
    %p69 = scmp.eq.s32.totalorder %s38, 1
    %p70 = por %p68, %p69
    %p71 = scmp.ne.s32.totalorder %s60, %s61
    %p72 = scmp.eq.s32.totalorder %s38, 0
    %p73 = por %p71, %p72
    %p74 = scmp.ne.s32.totalorder %s60, %s61
    %p75 = scmp.eq.s32.totalorder %s39, 1
    %p76 = por %p74, %p75
    %p78 = scmp.ne.s32.totalorder %s61, %s77
    %p79 = scmp.eq.s32.totalorder %s39, 0
    %p80 = por %p78, %p79
    %s81 = ssub.s32 %s40, %s52
    %p82 = scmp.eq.s32.totalorder %s81, 0
    %s84 = sadd.s32 %s83, 1
    %s85 = scalar_select %p82, %s83, %s84
    %p88 = pneg %p82
    %p89 = scmp.eq.s32.totalorder %s33, 1
    %p90 = por %p88, %p89
    %p91 = scmp.ne.s32.totalorder %s83, %s86
    %p92 = scmp.eq.s32.totalorder %s33, 0
    %p93 = por %p91, %p92
    %p94 = scmp.ne.s32.totalorder %s83, %s86
    %p95 = scmp.eq.s32.totalorder %s38, 1
    %p96 = por %p94, %p95
    %p97 = scmp.ne.s32.totalorder %s86, %s87
    %p98 = scmp.eq.s32.totalorder %s38, 0
    %p99 = por %p97, %p98
    %p100 = scmp.ne.s32.totalorder %s86, %s87
    %p101 = scmp.eq.s32.totalorder %s39, 1
    %p102 = por %p100, %p101
    %p104 = scmp.ne.s32.totalorder %s87, %s103
    %p105 = scmp.eq.s32.totalorder %s39, 0
    %p106 = por %p104, %p105
    %s107 = ssub.s32 %s40, %s52
    %p108 = scmp.eq.s32.totalorder %s107, 0
    %s110 = sadd.s32 %s109, 1
    %s111 = scalar_select %p108, %s109, %s110
    %p114 = pneg %p108
    %p115 = scmp.eq.s32.totalorder %s33, 1
    %p116 = por %p114, %p115
    %p117 = scmp.ne.s32.totalorder %s109, %s112
    %p118 = scmp.eq.s32.totalorder %s33, 0
    %p119 = por %p117, %p118
    %p120 = scmp.ne.s32.totalorder %s109, %s112
    %p121 = scmp.eq.s32.totalorder %s38, 1
    %p122 = por %p120, %p121
    %p123 = scmp.ne.s32.totalorder %s112, %s113
    %p124 = scmp.eq.s32.totalorder %s38, 0
    %p125 = por %p123, %p124
    %p126 = scmp.ne.s32.totalorder %s112, %s113
    %p127 = scmp.eq.s32.totalorder %s39, 1
    %p128 = por %p126, %p127
    %p130 = scmp.ne.s32.totalorder %s113, %s129
    %p131 = scmp.eq.s32.totalorder %s39, 0
    %p132 = por %p130, %p131
    %s133 = ssub.s32 %s40, %s52
    %p134 = scmp.eq.s32.totalorder %s133, 0
    %s136 = sadd.s32 %s135, 1
    %s137 = scalar_select %p134, %s135, %s136
    %p140 = pneg %p134
    %p141 = scmp.eq.s32.totalorder %s33, 1
    %p142 = por %p140, %p141
    %p143 = scmp.ne.s32.totalorder %s135, %s138
    %p144 = scmp.eq.s32.totalorder %s33, 0
    %p145 = por %p143, %p144
    %p146 = scmp.ne.s32.totalorder %s135, %s138
    %p147 = scmp.eq.s32.totalorder %s38, 1
    %p148 = por %p146, %p147
    %p149 = scmp.ne.s32.totalorder %s138, %s139
    %p150 = scmp.eq.s32.totalorder %s38, 0
    %p151 = por %p149, %p150
    %p152 = scmp.ne.s32.totalorder %s138, %s139
    %p153 = scmp.eq.s32.totalorder %s39, 1
    %p154 = por %p152, %p153
    %p156 = scmp.ne.s32.totalorder %s139, %s155
    %p157 = scmp.eq.s32.totalorder %s39, 0
    %p158 = por %p156, %p157
    %s159 = ssub.s32 %s40, %s52
    %p160 = scmp.eq.s32.totalorder %s159, 0
    %s162 = sadd.s32 %s161, 1
    %s163 = scalar_select %p160, %s161, %s162
    %p166 = pneg %p160
    %p167 = scmp.eq.s32.totalorder %s33, 1
    %p168 = por %p166, %p167
    %p169 = scmp.ne.s32.totalorder %s161, %s164
    %p170 = scmp.eq.s32.totalorder %s33, 0
    %p171 = por %p169, %p170
    %p172 = scmp.ne.s32.totalorder %s161, %s164
    %p173 = scmp.eq.s32.totalorder %s38, 1
    %p174 = por %p172, %p173
    %p175 = scmp.ne.s32.totalorder %s164, %s165
    %p176 = scmp.eq.s32.totalorder %s38, 0
    %p177 = por %p175, %p176
    %p178 = scmp.ne.s32.totalorder %s164, %s165
    %p179 = scmp.eq.s32.totalorder %s39, 1
    %p180 = por %p178, %p179
    %p182 = scmp.ne.s32.totalorder %s165, %s181
    %p183 = scmp.eq.s32.totalorder %s39, 0
    %p184 = por %p182, %p183
    %s186 = sadd.s32 %s185, 1
    %p189 = scmp.eq.s32.totalorder %s33, 1
    %p190 = scmp.ne.s32.totalorder %s185, %s187
    %p191 = scmp.eq.s32.totalorder %s33, 0
    %p192 = por %p190, %p191
    %p193 = scmp.ne.s32.totalorder %s185, %s187
    %p194 = scmp.eq.s32.totalorder %s38, 1
    %p195 = por %p193, %p194
    %p196 = scmp.ne.s32.totalorder %s187, %s188
    %p197 = scmp.eq.s32.totalorder %s38, 0
    %p198 = por %p196, %p197
    %p199 = scmp.ne.s32.totalorder %s187, %s188
    %p200 = scmp.eq.s32.totalorder %s39, 1
    %p201 = por %p199, %p200
    %p203 = scmp.ne.s32.totalorder %s188, %s202
    %p204 = scmp.eq.s32.totalorder %s39, 0
    %p205 = por %p203, %p204
    %s207 = sadd.s32 %s206, 1
    %p210 = scmp.eq.s32.totalorder %s33, 1
    %p211 = scmp.ne.s32.totalorder %s206, %s208
    %p212 = scmp.eq.s32.totalorder %s33, 0
    %p213 = por %p211, %p212
    %p214 = scmp.ne.s32.totalorder %s206, %s208
    %p215 = scmp.eq.s32.totalorder %s38, 1
    %p216 = por %p214, %p215
    %p217 = scmp.ne.s32.totalorder %s208, %s209
    %p218 = scmp.eq.s32.totalorder %s38, 0
    %p219 = por %p217, %p218
    %p220 = scmp.ne.s32.totalorder %s208, %s209
    %p221 = scmp.eq.s32.totalorder %s39, 1
    %p222 = por %p220, %p221
    %p224 = scmp.ne.s32.totalorder %s209, %s223
    %p225 = scmp.eq.s32.totalorder %s39, 0
    %p226 = por %p224, %p225
    %s228 = sadd.s32 %s227, 1
    %p231 = scmp.eq.s32.totalorder %s33, 1
    %p232 = scmp.ne.s32.totalorder %s227, %s229
    %p233 = scmp.eq.s32.totalorder %s33, 0
    %p234 = por %p232, %p233
    %p235 = scmp.ne.s32.totalorder %s227, %s229
    %p236 = scmp.eq.s32.totalorder %s38, 1
    %p237 = por %p235, %p236
    %p238 = scmp.ne.s32.totalorder %s229, %s230
    %p239 = scmp.eq.s32.totalorder %s38, 0
    %p240 = por %p238, %p239
    %p241 = scmp.ne.s32.totalorder %s229, %s230
    %p242 = scmp.eq.s32.totalorder %s39, 1
    %p243 = por %p241, %p242
    %p245 = scmp.ne.s32.totalorder %s230, %s244
    %p246 = scmp.eq.s32.totalorder %s39, 0
    %p247 = por %p245, %p246
    %s249 = sadd.s32 %s248, 1
    %p252 = scmp.eq.s32.totalorder %s33, 1
    %p253 = scmp.ne.s32.totalorder %s248, %s250
    %p254 = scmp.eq.s32.totalorder %s33, 0
    %p255 = por %p253, %p254
    %p256 = scmp.ne.s32.totalorder %s248, %s250
    %p257 = scmp.eq.s32.totalorder %s38, 1
    %p258 = por %p256, %p257
    %p259 = scmp.ne.s32.totalorder %s250, %s251
    %p260 = scmp.eq.s32.totalorder %s38, 0
    %p261 = por %p259, %p260
    %p262 = scmp.ne.s32.totalorder %s250, %s251
    %p263 = scmp.eq.s32.totalorder %s39, 1
    %p264 = por %p262, %p263
    %p266 = scmp.ne.s32.totalorder %s251, %s265
    %p267 = scmp.eq.s32.totalorder %s39, 0
    %p268 = por %p266, %p267
    %s270 = sadd.s32 %s269, 1
    %p273 = scmp.eq.s32.totalorder %s33, 1
    %p274 = scmp.ne.s32.totalorder %s269, %s271
    %p275 = scmp.eq.s32.totalorder %s33, 0
    %p276 = por %p274, %p275
    %p277 = scmp.ne.s32.totalorder %s269, %s271
    %p278 = scmp.eq.s32.totalorder %s38, 1
    %p279 = por %p277, %p278
    %p280 = scmp.ne.s32.totalorder %s271, %s272
    %p281 = scmp.eq.s32.totalorder %s38, 0
    %p282 = por %p280, %p281
    %p283 = scmp.ne.s32.totalorder %s271, %s272
    %p284 = scmp.eq.s32.totalorder %s39, 1
    %p285 = por %p283, %p284
    %p287 = scmp.ne.s32.totalorder %s272, %s286
    %p288 = scmp.eq.s32.totalorder %s39, 0
    %p289 = por %p287, %p288
    %s291 = sadd.s32 %s290, 1
    %p294 = scmp.eq.s32.totalorder %s33, 1
    %p295 = scmp.ne.s32.totalorder %s290, %s292
    %p296 = scmp.eq.s32.totalorder %s33, 0
    %p297 = por %p295, %p296
    %p298 = scmp.ne.s32.totalorder %s290, %s292
    %p299 = scmp.eq.s32.totalorder %s38, 1
    %p300 = por %p298, %p299
    %p301 = scmp.ne.s32.totalorder %s292, %s293
    %p302 = scmp.eq.s32.totalorder %s38, 0
    %p303 = por %p301, %p302
    %p304 = scmp.ne.s32.totalorder %s292, %s293
    %p305 = scmp.eq.s32.totalorder %s39, 1
    %p306 = por %p304, %p305
    %p308 = scmp.ne.s32.totalorder %s293, %s307
    %p309 = scmp.eq.s32.totalorder %s39, 0
    %p310 = por %p308, %p309
    %s312 = sadd.s32 %s311, 1
    %p315 = scmp.eq.s32.totalorder %s33, 1
    %p316 = scmp.ne.s32.totalorder %s311, %s313
    %p317 = scmp.eq.s32.totalorder %s33, 0
    %p318 = por %p316, %p317
    %p319 = scmp.ne.s32.totalorder %s311, %s313
    %p320 = scmp.eq.s32.totalorder %s38, 1
    %p321 = por %p319, %p320
    %p322 = scmp.ne.s32.totalorder %s313, %s314
    %p323 = scmp.eq.s32.totalorder %s38, 0
    %p324 = por %p322, %p323
    %p325 = scmp.ne.s32.totalorder %s313, %s314
    %p326 = scmp.eq.s32.totalorder %s39, 1
    %p327 = por %p325, %p326
    %p329 = scmp.ne.s32.totalorder %s314, %s328
    %p330 = scmp.eq.s32.totalorder %s39, 0
    %p331 = por %p329, %p330
    %s333 = sadd.s32 %s332, 1
    %p336 = scmp.eq.s32.totalorder %s33, 1
    %p337 = scmp.ne.s32.totalorder %s332, %s334
    %p338 = scmp.eq.s32.totalorder %s33, 0
    %p339 = por %p337, %p338
    %p340 = scmp.ne.s32.totalorder %s332, %s334
    %p341 = scmp.eq.s32.totalorder %s38, 1
    %p342 = por %p340, %p341
    %p343 = scmp.ne.s32.totalorder %s334, %s335
    %p344 = scmp.eq.s32.totalorder %s38, 0
    %p345 = por %p343, %p344
    %p346 = scmp.ne.s32.totalorder %s334, %s335
    %p347 = scmp.eq.s32.totalorder %s39, 1
    %p348 = por %p346, %p347
    %p350 = scmp.ne.s32.totalorder %s335, %s349
    %p351 = scmp.eq.s32.totalorder %s39, 0
    %p352 = por %p350, %p351
    %s354 = sadd.s32 %s353, 1
    %p357 = scmp.eq.s32.totalorder %s33, 1
    %p358 = scmp.ne.s32.totalorder %s353, %s355
    %p359 = scmp.eq.s32.totalorder %s33, 0
    %p360 = por %p358, %p359
    %p361 = scmp.ne.s32.totalorder %s353, %s355
    %p362 = scmp.eq.s32.totalorder %s38, 1
    %p363 = por %p361, %p362
    %p364 = scmp.ne.s32.totalorder %s355, %s356
    %p365 = scmp.eq.s32.totalorder %s38, 0
    %p366 = por %p364, %p365
    %p367 = scmp.ne.s32.totalorder %s355, %s356
    %p368 = scmp.eq.s32.totalorder %s39, 1
    %p369 = por %p367, %p368
    %p371 = scmp.ne.s32.totalorder %s356, %s370
    %p372 = scmp.eq.s32.totalorder %s39, 0
    %p373 = por %p371, %p372
    %s375 = sadd.s32 %s374, 1
    %p378 = scmp.eq.s32.totalorder %s33, 1
    %p379 = scmp.ne.s32.totalorder %s374, %s376
    %p380 = scmp.eq.s32.totalorder %s33, 0
    %p381 = por %p379, %p380
    %p382 = scmp.ne.s32.totalorder %s374, %s376
    %p383 = scmp.eq.s32.totalorder %s38, 1
    %p384 = por %p382, %p383
    %p385 = scmp.ne.s32.totalorder %s376, %s377
    %p386 = scmp.eq.s32.totalorder %s38, 0
    %p387 = por %p385, %p386
    %p388 = scmp.ne.s32.totalorder %s376, %s377
    %p389 = scmp.eq.s32.totalorder %s39, 1
    %p390 = por %p388, %p389
    %p392 = scmp.ne.s32.totalorder %s377, %s391
    %p393 = scmp.eq.s32.totalorder %s39, 0
    %p394 = por %p392, %p393
    %s396 = sadd.s32 %s395, 1
    %p399 = scmp.eq.s32.totalorder %s33, 1
    %p400 = scmp.ne.s32.totalorder %s395, %s397
    %p401 = scmp.eq.s32.totalorder %s33, 0
    %p402 = por %p400, %p401
    %p403 = scmp.ne.s32.totalorder %s395, %s397
    %p404 = scmp.eq.s32.totalorder %s38, 1
    %p405 = por %p403, %p404
    %p406 = scmp.ne.s32.totalorder %s397, %s398
    %p407 = scmp.eq.s32.totalorder %s38, 0
    %p408 = por %p406, %p407
    %p409 = scmp.ne.s32.totalorder %s397, %s398
    %p410 = scmp.eq.s32.totalorder %s39, 1
    %p411 = por %p409, %p410
    %p413 = scmp.ne.s32.totalorder %s398, %s412
    %p414 = scmp.eq.s32.totalorder %s39, 0
    %p415 = por %p413, %p414
    %s417 = sadd.s32 %s416, 1
    %p420 = scmp.eq.s32.totalorder %s33, 1
    %p421 = scmp.ne.s32.totalorder %s416, %s418
    %p422 = scmp.eq.s32.totalorder %s33, 0
    %p423 = por %p421, %p422
    %p424 = scmp.ne.s32.totalorder %s416, %s418
    %p425 = scmp.eq.s32.totalorder %s38, 1
    %p426 = por %p424, %p425
    %p427 = scmp.ne.s32.totalorder %s418, %s419
    %p428 = scmp.eq.s32.totalorder %s38, 0
    %p429 = por %p427, %p428
    %p430 = scmp.ne.s32.totalorder %s418, %s419
    %p431 = scmp.eq.s32.totalorder %s39, 1
    %p432 = por %p430, %p431
    %p434 = scmp.ne.s32.totalorder %s419, %s433
    %p435 = scmp.eq.s32.totalorder %s39, 0
    %p436 = por %p434, %p435
    %s438 = sadd.s32 %s437, 1
    %p441 = scmp.eq.s32.totalorder %s33, 1
    %p442 = scmp.ne.s32.totalorder %s437, %s439
    %p443 = scmp.eq.s32.totalorder %s33, 0
    %p444 = por %p442, %p443
    %p445 = scmp.ne.s32.totalorder %s437, %s439
    %p446 = scmp.eq.s32.totalorder %s38, 1
    %p447 = por %p445, %p446
    %p448 = scmp.ne.s32.totalorder %s439, %s440
    %p449 = scmp.eq.s32.totalorder %s38, 0
    %p450 = por %p448, %p449
    %p451 = scmp.ne.s32.totalorder %s439, %s440
    %p452 = scmp.eq.s32.totalorder %s39, 1
    %p453 = por %p451, %p452
    %p455 = scmp.ne.s32.totalorder %s440, %s454
    %p456 = scmp.eq.s32.totalorder %s39, 0
    %p457 = por %p455, %p456
    %s459 = sadd.s32 %s458, 1
    %p462 = scmp.eq.s32.totalorder %s33, 1
    %p463 = scmp.ne.s32.totalorder %s458, %s460
    %p464 = scmp.eq.s32.totalorder %s33, 0
    %p465 = por %p463, %p464
    %p466 = scmp.ne.s32.totalorder %s458, %s460
    %p467 = scmp.eq.s32.totalorder %s38, 1
    %p468 = por %p466, %p467
    %p469 = scmp.ne.s32.totalorder %s460, %s461
    %p470 = scmp.eq.s32.totalorder %s38, 0
    %p471 = por %p469, %p470
    %p472 = scmp.ne.s32.totalorder %s460, %s461
    %p473 = scmp.eq.s32.totalorder %s39, 1
    %p474 = por %p472, %p473
    %p476 = scmp.ne.s32.totalorder %s461, %s475
    %p477 = scmp.eq.s32.totalorder %s39, 0
    %p478 = por %p476, %p477
    %s480 = sadd.s32 %s479, 1
    %p483 = scmp.eq.s32.totalorder %s33, 1
    %p484 = scmp.ne.s32.totalorder %s479, %s481
    %p485 = scmp.eq.s32.totalorder %s33, 0
    %p486 = por %p484, %p485
    %p487 = scmp.ne.s32.totalorder %s479, %s481
    %p488 = scmp.eq.s32.totalorder %s38, 1
    %p489 = por %p487, %p488
    %p490 = scmp.ne.s32.totalorder %s481, %s482
    %p491 = scmp.eq.s32.totalorder %s38, 0
    %p492 = por %p490, %p491
    %p493 = scmp.ne.s32.totalorder %s481, %s482
    %p494 = scmp.eq.s32.totalorder %s39, 1
    %p495 = por %p493, %p494
    %p497 = scmp.ne.s32.totalorder %s482, %s496
    %p498 = scmp.eq.s32.totalorder %s39, 0
    %p499 = por %p497, %p498
    %s501 = sadd.s32 %s500, 1
    %p504 = scmp.eq.s32.totalorder %s33, 1
    %p505 = scmp.ne.s32.totalorder %s500, %s502
    %p506 = scmp.eq.s32.totalorder %s33, 0
    %p507 = por %p505, %p506
    %p508 = scmp.ne.s32.totalorder %s500, %s502
    %p509 = scmp.eq.s32.totalorder %s38, 1
    %p510 = por %p508, %p509
    %p511 = scmp.ne.s32.totalorder %s502, %s503
    %p512 = scmp.eq.s32.totalorder %s38, 0
    %p513 = por %p511, %p512
    %p514 = scmp.ne.s32.totalorder %s502, %s503
    %p515 = scmp.eq.s32.totalorder %s39, 1
    %p516 = por %p514, %p515
    %p518 = scmp.ne.s32.totalorder %s503, %s517
    %p519 = scmp.eq.s32.totalorder %s39, 0
    %p520 = por %p518, %p519
    %s522 = sadd.s32 %s521, 1
    %p525 = scmp.eq.s32.totalorder %s33, 1
    %p526 = scmp.ne.s32.totalorder %s521, %s523
    %p527 = scmp.eq.s32.totalorder %s33, 0
    %p528 = por %p526, %p527
    %p529 = scmp.ne.s32.totalorder %s521, %s523
    %p530 = scmp.eq.s32.totalorder %s38, 1
    %p531 = por %p529, %p530
    %p532 = scmp.ne.s32.totalorder %s523, %s524
    %p533 = scmp.eq.s32.totalorder %s38, 0
    %p534 = por %p532, %p533
    %p535 = scmp.ne.s32.totalorder %s523, %s524
    %p536 = scmp.eq.s32.totalorder %s39, 1
    %p537 = por %p535, %p536
    %p539 = scmp.ne.s32.totalorder %s524, %s538
    %p540 = scmp.eq.s32.totalorder %s39, 0
    %p541 = por %p539, %p540
    %s543 = sadd.s32 %s542, 1
    %p546 = scmp.eq.s32.totalorder %s33, 1
    %p547 = scmp.ne.s32.totalorder %s542, %s544
    %p548 = scmp.eq.s32.totalorder %s33, 0
    %p549 = por %p547, %p548
    %p550 = scmp.ne.s32.totalorder %s542, %s544
    %p551 = scmp.eq.s32.totalorder %s38, 1
    %p552 = por %p550, %p551
    %p553 = scmp.ne.s32.totalorder %s544, %s545
    %p554 = scmp.eq.s32.totalorder %s38, 0
    %p555 = por %p553, %p554
    %p556 = scmp.ne.s32.totalorder %s544, %s545
    %p557 = scmp.eq.s32.totalorder %s39, 1
    %p558 = por %p556, %p557
    %p560 = scmp.ne.s32.totalorder %s545, %s559
    %p561 = scmp.eq.s32.totalorder %s39, 0
    %p562 = por %p560, %p561
    %s564 = sadd.s32 %s563, 1
    %p567 = scmp.eq.s32.totalorder %s33, 1
    %p568 = scmp.ne.s32.totalorder %s563, %s565
    %p569 = scmp.eq.s32.totalorder %s33, 0
    %p570 = por %p568, %p569
    %p571 = scmp.ne.s32.totalorder %s563, %s565
    %p572 = scmp.eq.s32.totalorder %s38, 1
    %p573 = por %p571, %p572
    %p574 = scmp.ne.s32.totalorder %s565, %s566
    %p575 = scmp.eq.s32.totalorder %s38, 0
    %p576 = por %p574, %p575
    %p577 = scmp.ne.s32.totalorder %s565, %s566
    %p578 = scmp.eq.s32.totalorder %s39, 1
    %p579 = por %p577, %p578
    %p581 = scmp.ne.s32.totalorder %s566, %s580
    %p582 = scmp.eq.s32.totalorder %s39, 0
    %p583 = por %p581, %p582
    %s585 = sadd.s32 %s584, 1
    %p588 = scmp.eq.s32.totalorder %s33, 1
    %p589 = scmp.ne.s32.totalorder %s584, %s586
    %p590 = scmp.eq.s32.totalorder %s33, 0
    %p591 = por %p589, %p590
    %p592 = scmp.ne.s32.totalorder %s584, %s586
    %p593 = scmp.eq.s32.totalorder %s38, 1
    %p594 = por %p592, %p593
    %p595 = scmp.ne.s32.totalorder %s586, %s587
    %p596 = scmp.eq.s32.totalorder %s38, 0
    %p597 = por %p595, %p596
    %p598 = scmp.ne.s32.totalorder %s586, %s587
    %p599 = scmp.eq.s32.totalorder %s39, 1
    %p600 = por %p598, %p599
    %p602 = scmp.ne.s32.totalorder %s587, %s601
    %p603 = scmp.eq.s32.totalorder %s39, 0
    %p604 = por %p602, %p603
    %s606 = sadd.s32 %s605, 1
    %p609 = scmp.eq.s32.totalorder %s33, 1
    %p610 = scmp.ne.s32.totalorder %s605, %s607
    %p611 = scmp.eq.s32.totalorder %s33, 0
    %p612 = por %p610, %p611
    %p613 = scmp.ne.s32.totalorder %s605, %s607
    %p614 = scmp.eq.s32.totalorder %s38, 1
    %p615 = por %p613, %p614
    %p616 = scmp.ne.s32.totalorder %s607, %s608
    %p617 = scmp.eq.s32.totalorder %s38, 0
    %p618 = por %p616, %p617
    %p619 = scmp.ne.s32.totalorder %s607, %s608
    %p620 = scmp.eq.s32.totalorder %s39, 1
    %p621 = por %p619, %p620
    %p623 = scmp.ne.s32.totalorder %s608, %s622
    %p624 = scmp.eq.s32.totalorder %s39, 0
    %p625 = por %p623, %p624
    %s627 = sadd.s32 %s626, 1
    %p630 = scmp.eq.s32.totalorder %s33, 1
    %p631 = scmp.ne.s32.totalorder %s626, %s628
    %p632 = scmp.eq.s32.totalorder %s33, 0
    %p633 = por %p631, %p632
    %p634 = scmp.ne.s32.totalorder %s626, %s628
    %p635 = scmp.eq.s32.totalorder %s38, 1
    %p636 = por %p634, %p635
    %p637 = scmp.ne.s32.totalorder %s628, %s629
    %p638 = scmp.eq.s32.totalorder %s38, 0
    %p639 = por %p637, %p638
    %p640 = scmp.ne.s32.totalorder %s628, %s629
    %p641 = scmp.eq.s32.totalorder %s39, 1
    %p642 = por %p640, %p641
    %p644 = scmp.ne.s32.totalorder %s629, %s643
    %p645 = scmp.eq.s32.totalorder %s39, 0
    %p646 = por %p644, %p645
    %s647 = ssub.s32 %s40, %s52
    %s648 = ssub.s32 %s41, %s48
    %s649 = sor.u32 %s647, %s648
    %p650 = scmp.eq.s32.totalorder %s649, 0
    %s652 = sadd.s32 %s651, 1
    %s653 = scalar_select %p650, %s651, %s652
    %p656 = pneg %p650
    %p657 = scmp.eq.s32.totalorder %s33, 1
    %p658 = por %p656, %p657
    %p659 = scmp.ne.s32.totalorder %s651, %s654
    %p660 = scmp.eq.s32.totalorder %s33, 0
    %p661 = por %p659, %p660
    %p662 = scmp.ne.s32.totalorder %s651, %s654
    %p663 = scmp.eq.s32.totalorder %s38, 1
    %p664 = por %p662, %p663
    %p665 = scmp.ne.s32.totalorder %s654, %s655
    %p666 = scmp.eq.s32.totalorder %s38, 0
    %p667 = por %p665, %p666
    %p668 = scmp.ne.s32.totalorder %s654, %s655
    %p669 = scmp.eq.s32.totalorder %s39, 1
    %p670 = por %p668, %p669
    %p672 = scmp.ne.s32.totalorder %s655, %s671
    %p673 = scmp.eq.s32.totalorder %s39, 0
    %p674 = por %p672, %p673
    %p675 = scmp.le.s32.totalorder 1, %s33
    %p676 = scmp.lt.s32.totalorder %s33, 3
    %p677 = pnand %p675, %p676
    %p678 = pneg %p677
    // Predicated region
    $region9: #{transformer_forward.7} parent=5 // pred_check
      _
    $region10: #{transformer_forward.7} parent=5 // pred_check_branch
      %680 = sbr.rel (%p677) target = $region12
    $region11: #{transformer_forward.7} parent=5 // pred_region
      %s681 = ssub.s32 %s33, 1
      // Predicated region
      $region13: #{transformer_forward.7} parent=11 // pred_check
        %p682 = pneg %p198
      $region14: #{transformer_forward.7} parent=11 // pred_check_branch
        %684 = sbr.rel (%p682) target = $region16
      $region15: #{transformer_forward.7} parent=11 // pred_region
        _
      $region16: #{transformer_forward.7} parent=11 // pred_fallthru
        _
      // Predicated region
      $region17: #{transformer_forward.7} parent=11 // pred_check
        %p685 = pneg %p219
      $region18: #{transformer_forward.7} parent=11 // pred_check_branch
        %687 = sbr.rel (%p685) target = $region20
      $region19: #{transformer_forward.7} parent=11 // pred_region
        _
      $region20: #{transformer_forward.7} parent=11 // pred_fallthru
        _
      // Predicated region
      $region21: #{transformer_forward.7} parent=11 // pred_check
        %p688 = pneg %p240
      $region22: #{transformer_forward.7} parent=11 // pred_check_branch
        %690 = sbr.rel (%p688) target = $region24
      $region23: #{transformer_forward.7} parent=11 // pred_region
        _
      $region24: #{transformer_forward.7} parent=11 // pred_fallthru
        _
      // Predicated region
      $region25: #{transformer_forward.7} parent=11 // pred_check
        %p691 = pneg %p261
      $region26: #{transformer_forward.7} parent=11 // pred_check_branch
        %693 = sbr.rel (%p691) target = $region28
      $region27: #{transformer_forward.7} parent=11 // pred_region
        _
      $region28: #{transformer_forward.7} parent=11 // pred_fallthru
        _
      // Predicated region
      $region29: #{transformer_forward.7} parent=11 // pred_check
        %p694 = pneg %p282
      $region30: #{transformer_forward.7} parent=11 // pred_check_branch
        %696 = sbr.rel (%p694) target = $region32
      $region31: #{transformer_forward.7} parent=11 // pred_region
        _
      $region32: #{transformer_forward.7} parent=11 // pred_fallthru
        _
      // Predicated region
      $region33: #{transformer_forward.7} parent=11 // pred_check
        %p697 = pneg %p303
      $region34: #{transformer_forward.7} parent=11 // pred_check_branch
        %699 = sbr.rel (%p697) target = $region36
      $region35: #{transformer_forward.7} parent=11 // pred_region
        _
      $region36: #{transformer_forward.7} parent=11 // pred_fallthru
        _
      // Predicated region
      $region37: #{transformer_forward.7} parent=11 // pred_check
        %p700 = pneg %p324
      $region38: #{transformer_forward.7} parent=11 // pred_check_branch
        %702 = sbr.rel (%p700) target = $region40
      $region39: #{transformer_forward.7} parent=11 // pred_region
        _
      $region40: #{transformer_forward.7} parent=11 // pred_fallthru
        _
      // Predicated region
      $region41: #{transformer_forward.7} parent=11 // pred_check
        %p703 = pneg %p345
      $region42: #{transformer_forward.7} parent=11 // pred_check_branch
        %705 = sbr.rel (%p703) target = $region44
      $region43: #{transformer_forward.7} parent=11 // pred_region
        _
      $region44: #{transformer_forward.7} parent=11 // pred_fallthru
        _
      // Predicated region
      $region45: #{transformer_forward.7} parent=11 // pred_check
        %p706 = pneg %p366
      $region46: #{transformer_forward.7} parent=11 // pred_check_branch
        %708 = sbr.rel (%p706) target = $region48
      $region47: #{transformer_forward.7} parent=11 // pred_region
        _
      $region48: #{transformer_forward.7} parent=11 // pred_fallthru
        _
      // Predicated region
      $region49: #{transformer_forward.7} parent=11 // pred_check
        %p709 = pneg %p387
      $region50: #{transformer_forward.7} parent=11 // pred_check_branch
        %711 = sbr.rel (%p709) target = $region52
      $region51: #{transformer_forward.7} parent=11 // pred_region
        _
      $region52: #{transformer_forward.7} parent=11 // pred_fallthru
        _
      // Predicated region
      $region53: #{transformer_forward.7} parent=11 // pred_check
        %p712 = pneg %p408
      $region54: #{transformer_forward.7} parent=11 // pred_check_branch
        %714 = sbr.rel (%p712) target = $region56
      $region55: #{transformer_forward.7} parent=11 // pred_region
        _
      $region56: #{transformer_forward.7} parent=11 // pred_fallthru
        _
      // Predicated region
      $region57: #{transformer_forward.7} parent=11 // pred_check
        %p715 = pneg %p429
      $region58: #{transformer_forward.7} parent=11 // pred_check_branch
        %717 = sbr.rel (%p715) target = $region60
      $region59: #{transformer_forward.7} parent=11 // pred_region
        _
      $region60: #{transformer_forward.7} parent=11 // pred_fallthru
        _
      // Predicated region
      $region61: #{transformer_forward.7} parent=11 // pred_check
        %p718 = pneg %p450
      $region62: #{transformer_forward.7} parent=11 // pred_check_branch
        %720 = sbr.rel (%p718) target = $region64
      $region63: #{transformer_forward.7} parent=11 // pred_region
        _
      $region64: #{transformer_forward.7} parent=11 // pred_fallthru
        _
      // Predicated region
      $region65: #{transformer_forward.7} parent=11 // pred_check
        %p721 = pneg %p471
      $region66: #{transformer_forward.7} parent=11 // pred_check_branch
        %723 = sbr.rel (%p721) target = $region68
      $region67: #{transformer_forward.7} parent=11 // pred_region
        _
      $region68: #{transformer_forward.7} parent=11 // pred_fallthru
        _
      // Predicated region
      $region69: #{transformer_forward.7} parent=11 // pred_check
        %p724 = pneg %p492
      $region70: #{transformer_forward.7} parent=11 // pred_check_branch
        %726 = sbr.rel (%p724) target = $region72
      $region71: #{transformer_forward.7} parent=11 // pred_region
        _
      $region72: #{transformer_forward.7} parent=11 // pred_fallthru
        _
      // Predicated region
      $region73: #{transformer_forward.7} parent=11 // pred_check
        %p727 = pneg %p513
      $region74: #{transformer_forward.7} parent=11 // pred_check_branch
        %729 = sbr.rel (%p727) target = $region76
      $region75: #{transformer_forward.7} parent=11 // pred_region
        _
      $region76: #{transformer_forward.7} parent=11 // pred_fallthru
        _
      // Predicated region
      $region77: #{transformer_forward.7} parent=11 // pred_check
        %p730 = pneg %p534
      $region78: #{transformer_forward.7} parent=11 // pred_check_branch
        %732 = sbr.rel (%p730) target = $region80
      $region79: #{transformer_forward.7} parent=11 // pred_region
        _
      $region80: #{transformer_forward.7} parent=11 // pred_fallthru
        _
      // Predicated region
      $region81: #{transformer_forward.7} parent=11 // pred_check
        %p733 = pneg %p555
      $region82: #{transformer_forward.7} parent=11 // pred_check_branch
        %735 = sbr.rel (%p733) target = $region84
      $region83: #{transformer_forward.7} parent=11 // pred_region
        _
      $region84: #{transformer_forward.7} parent=11 // pred_fallthru
        _
      // Predicated region
      $region85: #{transformer_forward.7} parent=11 // pred_check
        %p736 = pneg %p576
      $region86: #{transformer_forward.7} parent=11 // pred_check_branch
        %738 = sbr.rel (%p736) target = $region88
      $region87: #{transformer_forward.7} parent=11 // pred_region
        _
      $region88: #{transformer_forward.7} parent=11 // pred_fallthru
        _
      // Predicated region
      $region89: #{transformer_forward.7} parent=11 // pred_check
        %p739 = pneg %p597
      $region90: #{transformer_forward.7} parent=11 // pred_check_branch
        %741 = sbr.rel (%p739) target = $region92
      $region91: #{transformer_forward.7} parent=11 // pred_region
        _
      $region92: #{transformer_forward.7} parent=11 // pred_fallthru
        _
      // Predicated region
      $region93: #{transformer_forward.7} parent=11 // pred_check
        %p742 = pneg %p618
      $region94: #{transformer_forward.7} parent=11 // pred_check_branch
        %744 = sbr.rel (%p742) target = $region96
      $region95: #{transformer_forward.7} parent=11 // pred_region
        _
      $region96: #{transformer_forward.7} parent=11 // pred_fallthru
        _
      // Predicated region
      $region97: #{transformer_forward.7} parent=11 // pred_check
        %p745 = pneg %p639
      $region98: #{transformer_forward.7} parent=11 // pred_check_branch
        %747 = sbr.rel (%p745) target = $region100
      $region99: #{transformer_forward.7} parent=11 // pred_region
        _
      $region100: #{transformer_forward.7} parent=11 // pred_fallthru
        _
    $region12: #{transformer_forward.7} parent=5 // pred_fallthru
      _
    %p748 = scmp.lt.s32.totalorder %s33, 2
    // Predicated region
    $region101: #{transformer_forward.7} parent=5 // pred_check
      %p749 = pneg %p748
    $region102: #{transformer_forward.7} parent=5 // pred_check_branch
      %751 = sbr.rel (%p749) target = $region104
    $region103: #{transformer_forward.7} parent=5 // pred_region
      // Predicated region
      $region105: #{transformer_forward.7} parent=103 // pred_check
        %p752 = pneg %p67
      $region106: #{transformer_forward.7} parent=103 // pred_check_branch
        %754 = sbr.rel (%p752) target = $region108
      $region107: #{transformer_forward.7} parent=103 // pred_region
        %p755 = scmp.lt.s32.totalorder %s40, 1
        %s756 = scalar_select %p755, %s40, 1
        %p757 = scmp.lt.s32.totalorder %s41, 0
        %s758 = scalar_select %p757, %s41, 0
        %s759 = sadd.s32 %s758, %s756
        %s760 = smul.addr %s759, 8
        %s761 = scalar_lea.vmem %s0, %s760
      $region108: #{transformer_forward.7} parent=103 // pred_fallthru
        _
      // Predicated region
      $region109: #{transformer_forward.7} parent=103 // pred_check
        %p762 = pneg %p93
      $region110: #{transformer_forward.7} parent=103 // pred_check_branch
        %764 = sbr.rel (%p762) target = $region112
      $region111: #{transformer_forward.7} parent=103 // pred_region
        %p765 = scmp.lt.s32.totalorder %s40, 1
        %s766 = scalar_select %p765, %s40, 1
        %s767 = smul.addr %s766, 8
        %s768 = scalar_lea.vmem %s1, %s767
      $region112: #{transformer_forward.7} parent=103 // pred_fallthru
        _
      // Predicated region
      $region113: #{transformer_forward.7} parent=103 // pred_check
        %p769 = pneg %p119
      $region114: #{transformer_forward.7} parent=103 // pred_check_branch
        %771 = sbr.rel (%p769) target = $region116
      $region115: #{transformer_forward.7} parent=103 // pred_region
        %p772 = scmp.lt.s32.totalorder %s40, 1
        %s773 = scalar_select %p772, %s40, 1
        %s774 = smul.addr %s773, 8
        %s775 = scalar_lea.vmem %s2, %s774
      $region116: #{transformer_forward.7} parent=103 // pred_fallthru
        _
      // Predicated region
      $region117: #{transformer_forward.7} parent=103 // pred_check
        %p776 = pneg %p145
      $region118: #{transformer_forward.7} parent=103 // pred_check_branch
        %778 = sbr.rel (%p776) target = $region120
      $region119: #{transformer_forward.7} parent=103 // pred_region
        %p779 = scmp.lt.s32.totalorder %s40, 1
        %s780 = scalar_select %p779, %s40, 1
        %s781 = scalar_lea.vmem %s3, %s780
      $region120: #{transformer_forward.7} parent=103 // pred_fallthru
        _
      // Predicated region
      $region121: #{transformer_forward.7} parent=103 // pred_check
        %p782 = pneg %p171
      $region122: #{transformer_forward.7} parent=103 // pred_check_branch
        %784 = sbr.rel (%p782) target = $region124
      $region123: #{transformer_forward.7} parent=103 // pred_region
        %p785 = scmp.lt.s32.totalorder %s40, 1
        %s786 = scalar_select %p785, %s40, 1
        %s787 = scalar_lea.vmem %s4, %s786
      $region124: #{transformer_forward.7} parent=103 // pred_fallthru
        _
    $region104: #{transformer_forward.7} parent=5 // pred_fallthru
      _
    %p788 = scmp.le.s32.totalorder 1, %s33
    %p789 = scmp.lt.s32.totalorder %s33, 3
    %p790 = pnand %p788, %p789
    %p791 = pneg %p790
    // Predicated region
    $region125: #{transformer_forward.7} parent=5 // pred_check
      _
    $region126: #{transformer_forward.7} parent=5 // pred_check_branch
      %793 = sbr.rel (%p790) target = $region128
    $region127: #{transformer_forward.7} parent=5 // pred_region
      %s794 = ssub.s32 %s33, 1
      %p795 = scmp.lt.s32.totalorder %s42, 1
      %s796 = scalar_select %p795, %s42, 1
      %p797 = scmp.lt.s32.totalorder %s43, 0
      %s798 = scalar_select %p797, %s43, 0
      %s799 = sadd.s32 %s798, %s796
      %s800 = smul.addr %s799, 8
      %s801 = scalar_lea.vmem %s0, %s800
      %p802 = pneg %p73
      %p803 = pneg %p70
      %p804 = scmp.lt.s32.totalorder %s42, 1
      %s805 = scalar_select %p804, %s42, 1
      %s806 = smul.addr %s805, 8
      %s807 = scalar_lea.vmem %s1, %s806
      %p808 = pneg %p99
      %p809 = pneg %p96
      %p810 = scmp.lt.s32.totalorder %s42, 1
      %s811 = scalar_select %p810, %s42, 1
      %s812 = smul.addr %s811, 8
      %s813 = scalar_lea.vmem %s2, %s812
      %p814 = pneg %p125
      %p815 = pneg %p122
      %p816 = scmp.lt.s32.totalorder %s42, 1
      %s817 = scalar_select %p816, %s42, 1
      %s818 = scalar_lea.vmem %s3, %s817
      %p819 = pneg %p151
      %p820 = pneg %p148
      %p821 = scmp.lt.s32.totalorder %s42, 1
      %s822 = scalar_select %p821, %s42, 1
      %s823 = scalar_lea.vmem %s4, %s822
      %p824 = pneg %p177
      %p825 = pneg %p174
      %p826 = pneg %p198
      %p827 = pneg %p195
      %p828 = pneg %p219
      %p829 = pneg %p216
      %p830 = pneg %p240
      %p831 = pneg %p237
      %p832 = pneg %p261
      %p833 = pneg %p258
      %p834 = pneg %p282
      %p835 = pneg %p279
      %p836 = pneg %p303
      %p837 = pneg %p300
      %p838 = pneg %p324
      %p839 = pneg %p321
      %p840 = pneg %p345
      %p841 = pneg %p342
      %p842 = pneg %p366
      %p843 = pneg %p363
      %p844 = pneg %p387
      %p845 = pneg %p384
      %p846 = pneg %p408
      %p847 = pneg %p405
      %p848 = pneg %p429
      %p849 = pneg %p426
      %p850 = pneg %p450
      %p851 = pneg %p447
      %p852 = pneg %p471
      %p853 = pneg %p468
      %p854 = pneg %p492
      %p855 = pneg %p489
      %p856 = pneg %p513
      %p857 = pneg %p510
      %p858 = pneg %p534
      %p859 = pneg %p531
      %p860 = pneg %p555
      %p861 = pneg %p552
      %p862 = pneg %p576
      %p863 = pneg %p573
      %p864 = pneg %p597
      %p865 = pneg %p594
      %p866 = pneg %p618
      %p867 = pneg %p615
      %p868 = pneg %p639
      %p869 = pneg %p636
      %p870 = pneg %p667
      %p871 = pneg %p664
      %p872 = scmp.lt.s32.totalorder %s42, 1
      %s873 = scalar_select %p872, %s42, 1
      %p874 = scmp.lt.s32.totalorder %s43, 0
      %s875 = scalar_select %p874, %s43, 0
      %s876 = sadd.s32 %s875, %s873
      %s877 = smul.addr %s876, 8
      %s878 = scalar_lea.vmem %s27, %s877
      %p879 = scmp.lt.s32.totalorder %s42, 1
      %s880 = scalar_select %p879, %s42, 1
      %p881 = scmp.lt.s32.totalorder %s43, 0
      %s882 = scalar_select %p881, %s43, 0
      %s883 = sadd.s32 %s882, %s880
      %s884 = smul.addr %s883, 8
      %s885 = scalar_lea.vmem %s0, %s884
      %p886 = scmp.lt.s32.totalorder %s42, 1
      %s887 = scalar_select %p886, %s42, 1
      %s888 = smul.addr %s887, 8
      %s889 = scalar_lea.vmem %s1, %s888
      %p890 = scmp.lt.s32.totalorder %s42, 1
      %s891 = scalar_select %p890, %s42, 1
      %s892 = smul.addr %s891, 8
      %s893 = scalar_lea.vmem %s2, %s892
      %p894 = scmp.lt.s32.totalorder %s42, 1
      %s895 = scalar_select %p894, %s42, 1
      %s896 = scalar_lea.vmem %s3, %s895
      %p897 = scmp.lt.s32.totalorder %s42, 1
      %s898 = scalar_select %p897, %s42, 1
      %s899 = scalar_lea.vmem %s4, %s898
      %p900 = scmp.lt.s32.totalorder %s42, 1
      %s901 = scalar_select %p900, %s42, 1
      %p902 = scmp.lt.s32.totalorder %s43, 0
      %s903 = scalar_select %p902, %s43, 0
      %s904 = sadd.s32 %s903, %s901
      %s905 = smul.addr %s904, 8
      %s906 = scalar_lea.vmem %s27, %s905
      %v908 = vld [vmem:[%s885] sm:$0xff]
      %v909 = vld [vmem:[%s889] sm:$0xff]
      %v910 = vld [vmem:[%s893] sm:$0xff]
      %s911 = smul.u32 %s43, 8
      %v912 = vld [vmem:[%s896] sm:$0x1]
      %v914 = vperm.slane %v912, 0
      %v916 = vmul.f32 %v914, -1e+30
      %v917 = vlaneseq
      %v918 = vshrl.u32 %v917, 7
      %v919 = vstv %s911
      %v920 = vadd.s32 %v918, %v919
      %v921 = vlaneseq
      %v922 = vand.u32 %v921, 127
      %vm923 = vcmp.gt.s32.totalorder %v922, %v920
      %v924 = vsel %vm923, -1e+30, 0.0
      %v925 = vadd.f32 %v916, %v924
      %v926 = vld [vmem:[%s5] sm:$0xf]
      %v927 = vld [vmem:[%s5 + $0x4] sm:$0xf]
      %v928 = vld [vmem:[%s5 + $0x8] sm:$0xf]
      %v929 = vld [vmem:[%s5 + $0xc] sm:$0xf]
      %v930 = vld [vmem:[%s5 + $0x10] sm:$0xf]
      %v931 = vld [vmem:[%s5 + $0x14] sm:$0xf]
      %v932 = vld [vmem:[%s5 + $0x18] sm:$0xf]
      %v933 = vld [vmem:[%s5 + $0x1c] sm:$0xf]
      %v934 = vld [vmem:[%s5 + $0x20] sm:$0xf]
      %v935 = vld [vmem:[%s5 + $0x24] sm:$0xf]
      %v936 = vld [vmem:[%s5 + $0x28] sm:$0xf]
      %v937 = vld [vmem:[%s5 + $0x2c] sm:$0xf]
      %v938 = vld [vmem:[%s5 + $0x30] sm:$0xf]
      %v939 = vld [vmem:[%s5 + $0x34] sm:$0xf]
      %v940 = vld [vmem:[%s5 + $0x38] sm:$0xf]
      %v941 = vld [vmem:[%s5 + $0x3c] sm:$0xf]
      %v942 = vld [vmem:[%s6] sm:$0x1]
      %v943 = vld [vmem:[%s7] sm:$0xff]
      %v944 = vld [vmem:[%s7 + $0x8] sm:$0xff]
      %v945 = vld [vmem:[%s7 + $0x10] sm:$0xff]
      %v946 = vld [vmem:[%s7 + $0x18] sm:$0xff]
      %v947 = vld [vmem:[%s7 + $0x20] sm:$0xff]
      %v948 = vld [vmem:[%s7 + $0x28] sm:$0xff]
      %v949 = vld [vmem:[%s7 + $0x30] sm:$0xff]
      %v950 = vld [vmem:[%s7 + $0x38] sm:$0xff]
      %v951 = vld [vmem:[%s7 + $0x40] sm:$0xff]
      %v952 = vld [vmem:[%s7 + $0x48] sm:$0xff]
      %v953 = vld [vmem:[%s7 + $0x50] sm:$0xff]
      %v954 = vld [vmem:[%s7 + $0x58] sm:$0xff]
      %v955 = vld [vmem:[%s7 + $0x60] sm:$0xff]
      %v956 = vld [vmem:[%s7 + $0x68] sm:$0xff]
      %v957 = vld [vmem:[%s7 + $0x70] sm:$0xff]
      %v958 = vld [vmem:[%s7 + $0x78] sm:$0xff]
      %v959 = vld [vmem:[%s8] sm:$0x3]
      %v960 = vld [vmem:[%s9] sm:$0xf]
      %v961 = vld [vmem:[%s9 + $0x4] sm:$0xf]
      %v962 = vld [vmem:[%s9 + $0x8] sm:$0xf]
      %v963 = vld [vmem:[%s9 + $0xc] sm:$0xf]
      %v964 = vld [vmem:[%s9 + $0x10] sm:$0xf]
      %v965 = vld [vmem:[%s9 + $0x14] sm:$0xf]
      %v966 = vld [vmem:[%s9 + $0x18] sm:$0xf]
      %v967 = vld [vmem:[%s9 + $0x1c] sm:$0xf]
      %v968 = vld [vmem:[%s9 + $0x20] sm:$0xf]
      %v969 = vld [vmem:[%s9 + $0x24] sm:$0xf]
      %v970 = vld [vmem:[%s9 + $0x28] sm:$0xf]
      %v971 = vld [vmem:[%s9 + $0x2c] sm:$0xf]
      %v972 = vld [vmem:[%s9 + $0x30] sm:$0xf]
      %v973 = vld [vmem:[%s9 + $0x34] sm:$0xf]
      %v974 = vld [vmem:[%s9 + $0x38] sm:$0xf]
      %v975 = vld [vmem:[%s9 + $0x3c] sm:$0xf]
      %v976 = vld [vmem:[%s10] sm:$0x1]
      %v977 = vld [vmem:[%s11] sm:$0x1]
      %v978 = vld [vmem:[%s12] sm:$0x1]
      %v979 = vpack.c.bf16 %v908, %v908
      %v981 = vperm.slane %v942, 0
      %v999 = vunpack.c.l.b16 %v926
      %v1000 = vunpack.c.l.b16 %v927
      %v1001 = vunpack.c.l.b16 %v928
      %v1002 = vunpack.c.l.b16 %v929
      %v1003 = vunpack.c.l.b16 %v930
      %v1004 = vunpack.c.l.b16 %v931
      %v1005 = vunpack.c.l.b16 %v932
      %v1006 = vunpack.c.l.b16 %v933
      %v1007 = vunpack.c.l.b16 %v934
      %v1008 = vunpack.c.l.b16 %v935
      %v1009 = vunpack.c.l.b16 %v936
      %v1010 = vunpack.c.l.b16 %v937
      %v1011 = vunpack.c.l.b16 %v938
      %v1012 = vunpack.c.l.b16 %v939
      %v1013 = vunpack.c.l.b16 %v940
      %v1014 = vunpack.c.l.b16 %v941
      %v1015 = vpack.c.b16 %v1000, %v999
      %v1016 = vpack.c.b16 %v1002, %v1001
      %v1017 = vpack.c.b16 %v1004, %v1003
      %v1018 = vpack.c.b16 %v1006, %v1005
      %v1019 = vpack.c.b16 %v1008, %v1007
      %v1020 = vpack.c.b16 %v1010, %v1009
      %v1021 = vpack.c.b16 %v1012, %v1011
      %v1022 = vpack.c.b16 %v1014, %v1013
      %1031 = vmatpush.bf16.msra.mxu0 %v1022
      %1032 = vmatpush.bf16.msra.mxu0 %v1021
      %1033 = vmatpush.bf16.msra.mxu0 %v1020
      %1034 = vmatpush.bf16.msra.mxu0 %v1019
      %1035 = vmatpush.bf16.msra.mxu0 %v1018
      %1036 = vmatpush.bf16.msra.mxu0 %v1017
      %1037 = vmatpush.bf16.msra.mxu0 %v1016
      %1038 = vmatpush.bf16.msra.mxu0 %v1015
      %1039 = vmatmul.bf16.gmra.mxu0 %v979
      %v1040 = vpop.f32.mrf.mxu0
      %v1041 = vadd.f32 %v981, %v1040
      %v1042 = vpop.f32.mrf.mxu0
      %1043 = vdwg.mxu0
      %v1044 = vpack.c.bf16 %v909, %v909
      %v1046 = vperm.slane %v959, 0
      %v1047 = vperm.slane %v959, 1
      %v1066 = vunpack.c.l.b16 %v943
      %v1067 = vunpack.c.h.b16 %v943
      %v1068 = vunpack.c.l.b16 %v944
      %v1069 = vunpack.c.h.b16 %v944
      %v1070 = vunpack.c.l.b16 %v945
      %v1071 = vunpack.c.h.b16 %v945
      %v1072 = vunpack.c.l.b16 %v946
      %v1073 = vunpack.c.h.b16 %v946
      %v1074 = vunpack.c.l.b16 %v947
      %v1075 = vunpack.c.h.b16 %v947
      %v1076 = vunpack.c.l.b16 %v948
      %v1077 = vunpack.c.h.b16 %v948
      %v1078 = vunpack.c.l.b16 %v949
      %v1079 = vunpack.c.h.b16 %v949
      %v1080 = vunpack.c.l.b16 %v950
      %v1081 = vunpack.c.h.b16 %v950
      %v1082 = vunpack.c.l.b16 %v951
      %v1083 = vunpack.c.h.b16 %v951
      %v1084 = vunpack.c.l.b16 %v952
      %v1085 = vunpack.c.h.b16 %v952
      %v1086 = vunpack.c.l.b16 %v953
      %v1087 = vunpack.c.h.b16 %v953
      %v1088 = vunpack.c.l.b16 %v954
      %v1089 = vunpack.c.h.b16 %v954
      %v1090 = vunpack.c.l.b16 %v955
      %v1091 = vunpack.c.h.b16 %v955
      %v1092 = vunpack.c.l.b16 %v956
      %v1093 = vunpack.c.h.b16 %v956
      %v1094 = vunpack.c.l.b16 %v957
      %v1095 = vunpack.c.h.b16 %v957
      %v1096 = vunpack.c.l.b16 %v958
      %v1097 = vunpack.c.h.b16 %v958
      %v1098 = vpack.c.b16 %v1068, %v1066
      %v1099 = vpack.c.b16 %v1069, %v1067
      %v1100 = vpack.c.b16 %v1072, %v1070
      %v1101 = vpack.c.b16 %v1073, %v1071
      %v1102 = vpack.c.b16 %v1076, %v1074
      %v1103 = vpack.c.b16 %v1077, %v1075
      %v1104 = vpack.c.b16 %v1080, %v1078
      %v1105 = vpack.c.b16 %v1081, %v1079
      %v1106 = vpack.c.b16 %v1084, %v1082
      %v1107 = vpack.c.b16 %v1085, %v1083
      %v1108 = vpack.c.b16 %v1088, %v1086
      %v1109 = vpack.c.b16 %v1089, %v1087
      %v1110 = vpack.c.b16 %v1092, %v1090
      %v1111 = vpack.c.b16 %v1093, %v1091
      %v1112 = vpack.c.b16 %v1096, %v1094
      %v1113 = vpack.c.b16 %v1097, %v1095
      %1130 = vmatpush.bf16.msra.mxu0 %v1112
      %1131 = vmatpush.bf16.msra.mxu0 %v1110
      %1132 = vmatpush.bf16.msra.mxu0 %v1108
      %1133 = vmatpush.bf16.msra.mxu0 %v1106
      %1134 = vmatpush.bf16.msra.mxu0 %v1104
      %1135 = vmatpush.bf16.msra.mxu0 %v1102
      %1136 = vmatpush.bf16.msra.mxu0 %v1100
      %1137 = vmatpush.bf16.msra.mxu0 %v1098
      %1138 = vmatmul.bf16.gmra.mxu0 %v1044
      %v1139 = vpop.f32.mrf.mxu0
      %v1140 = vadd.f32 %v1046, %v1139
      %v1141 = vpop.f32.mrf.mxu0
      %1142 = vdwg.mxu0
      %1143 = vmatpush.bf16.msra.mxu0 %v1113
      %1144 = vmatpush.bf16.msra.mxu0 %v1111
      %1145 = vmatpush.bf16.msra.mxu0 %v1109
      %1146 = vmatpush.bf16.msra.mxu0 %v1107
      %1147 = vmatpush.bf16.msra.mxu0 %v1105
      %1148 = vmatpush.bf16.msra.mxu0 %v1103
      %1149 = vmatpush.bf16.msra.mxu0 %v1101
      %1150 = vmatpush.bf16.msra.mxu0 %v1099
      %1151 = vmatmul.bf16.gmra.mxu0 %v1044
      %v1152 = vpop.f32.mrf.mxu0
      %v1153 = vadd.f32 %v1047, %v1152
      %v1154 = vpop.f32.mrf.mxu0
      %1155 = vdwg.mxu0
      %1157 = vrot.lane.b32.xlu0 %v1041, 96
      %v1158 = vpop.permute.xlu0 %1157
      %1160 = vrot.lane.b32.xlu0 %v1041, 64
      %v1161 = vpop.permute.xlu0 %1160
      %1163 = vrot.lane.b32.xlu0 %v1041, 32
      %v1164 = vpop.permute.xlu0 %1163
      %v1166 = vrot.slane %v1161, 4
      %vm1167 = vcmask 1047556
      %v1168 = vsel %vm1167, %v1166, %v1041
      %v1169 = vrot.slane %v1041, 4
      %v1170 = vsel %vm1167, %v1161, %v1169
      %v1172 = vunpack.c.l.s4 1983009808
      %v1173 = vunpack.c.0.s8 %v1172
      %v1174 = vperm.slane %v1168, %v1173
      %v1176 = vunpack.c.l.s4 1983009808
      %v1177 = vunpack.c.0.s8 %v1176
      %v1178 = vperm.slane %v1170, %v1177
      %v1179 = vrot.slane %v1164, 4
      %v1180 = vsel %vm1167, %v1179, %v1158
      %v1181 = vrot.slane %v1158, 4
      %v1182 = vsel %vm1167, %v1164, %v1181
      %v1184 = vunpack.c.l.s4 1983009808
      %v1185 = vunpack.c.0.s8 %v1184
      %v1186 = vperm.slane %v1180, %v1185
      %v1188 = vunpack.c.l.s4 1983009808
      %v1189 = vunpack.c.0.s8 %v1188
      %v1190 = vperm.slane %v1182, %v1189
      %v1191 = vrot.slane %v1186, 4
      %v1192 = vsel %vm1167, %v1191, %v1174
      %v1193 = vrot.slane %v1174, 4
      %v1194 = vsel %vm1167, %v1186, %v1193
      %v1196 = vunpack.c.l.s4 1934713408
      %v1197 = vunpack.c.0.s8 %v1196
      %v1198 = vperm.slane %v1192, %v1197
      %v1200 = vunpack.c.l.s4 1934713408
      %v1201 = vunpack.c.0.s8 %v1200
      %v1202 = vperm.slane %v1194, %v1201
      %v1203 = vrot.slane %v1190, 4
      %v1204 = vsel %vm1167, %v1203, %v1178
      %v1205 = vrot.slane %v1178, 4
      %v1206 = vsel %vm1167, %v1190, %v1205
      %v1208 = vunpack.c.l.s4 1934713408
      %v1209 = vunpack.c.0.s8 %v1208
      %v1210 = vperm.slane %v1204, %v1209
      %v1212 = vunpack.c.l.s4 1934713408
      %v1213 = vunpack.c.0.s8 %v1212
      %v1214 = vperm.slane %v1206, %v1213
      %v1215 = vrot.slane %v1198, 4
      %v1216 = vsel %vm1167, 0.0, %v1215
      %v1217 = vrot.slane %v1202, 4
      %v1218 = vsel %vm1167, 0.0, %v1217
      %v1219 = vrot.slane %v1210, 4
      %v1220 = vsel %vm1167, 0.0, %v1219
      %v1221 = vrot.slane %v1214, 4
      %v1222 = vsel %vm1167, 0.0, %v1221
      %v1223 = vsel %vm1167, %v1217, %v1198
      %v1225 = vunpack.c.l.s4 1983009808
      %v1226 = vunpack.c.0.s8 %v1225
      %v1227 = vperm.slane %v1223, %v1226
      %v1228 = vrot.slane %v1218, 4
      %v1229 = vsel %vm1167, %v1228, %v1216
      %v1231 = vunpack.c.l.s4 1983009808
      %v1232 = vunpack.c.0.s8 %v1231
      %v1233 = vperm.slane %v1229, %v1232
      %v1234 = vsel %vm1167, %v1221, %v1210
      %v1236 = vunpack.c.l.s4 1983009808
      %v1237 = vunpack.c.0.s8 %v1236
      %v1238 = vperm.slane %v1234, %v1237
      %v1239 = vrot.slane %v1222, 4
      %v1240 = vsel %vm1167, %v1239, %v1220
      %v1242 = vunpack.c.l.s4 1983009808
      %v1243 = vunpack.c.0.s8 %v1242
      %v1244 = vperm.slane %v1240, %v1243
      %v1245 = vrot.slane %v1233, 4
      %v1246 = vsel %vm1167, %v1245, %v1227
      %v1247 = vrot.slane %v1227, 4
      %v1248 = vsel %vm1167, %v1233, %v1247
      %v1250 = vunpack.c.l.s4 1934713408
      %v1251 = vunpack.c.0.s8 %v1250
      %v1252 = vperm.slane %v1246, %v1251
      %v1254 = vunpack.c.l.s4 1934713408
      %v1255 = vunpack.c.0.s8 %v1254
      %v1256 = vperm.slane %v1248, %v1255
      %v1257 = vrot.slane %v1244, 4
      %v1258 = vsel %vm1167, %v1257, %v1238
      %v1259 = vrot.slane %v1238, 4
      %v1260 = vsel %vm1167, %v1244, %v1259
      %v1262 = vunpack.c.l.s4 1934713408
      %v1263 = vunpack.c.0.s8 %v1262
      %v1264 = vperm.slane %v1258, %v1263
      %v1266 = vunpack.c.l.s4 1934713408
      %v1267 = vunpack.c.0.s8 %v1266
      %v1268 = vperm.slane %v1260, %v1267
      %v1269 = vrot.slane %v1264, 4
      %v1270 = vsel %vm1167, %v1269, %v1252
      %v1271 = vrot.slane %v1252, 4
      %v1272 = vsel %vm1167, %v1264, %v1271
      %v1273 = vrot.slane %v1268, 4
      %v1274 = vsel %vm1167, %v1273, %v1256
      %v1275 = vrot.slane %v1256, 4
      %v1276 = vsel %vm1167, %v1268, %v1275
      %v1277 = vpack.c.bf16 %v1270, %v1270
      %v1278 = vpack.c.bf16 %v1272, %v1272
      %v1279 = vpack.c.bf16 %v1274, %v1274
      %v1280 = vpack.c.bf16 %v1276, %v1276
      %1282 = vrot.lane.b32.xlu0 %v1140, 96
      %v1283 = vpop.permute.xlu0 %1282
      %1285 = vrot.lane.b32.xlu0 %v1140, 64
      %v1286 = vpop.permute.xlu0 %1285
      %1288 = vrot.lane.b32.xlu0 %v1140, 32
      %v1289 = vpop.permute.xlu0 %1288
      %v1291 = vrot.slane %v1286, 4
      %v1292 = vsel %vm1167, %v1291, %v1140
      %v1293 = vrot.slane %v1140, 4
      %v1294 = vsel %vm1167, %v1286, %v1293
      %v1296 = vunpack.c.l.s4 1983009808
      %v1297 = vunpack.c.0.s8 %v1296
      %v1298 = vperm.slane %v1292, %v1297
      %v1300 = vunpack.c.l.s4 1983009808
      %v1301 = vunpack.c.0.s8 %v1300
      %v1302 = vperm.slane %v1294, %v1301
      %v1303 = vrot.slane %v1289, 4
      %v1304 = vsel %vm1167, %v1303, %v1283
      %v1305 = vrot.slane %v1283, 4
      %v1306 = vsel %vm1167, %v1289, %v1305
      %v1308 = vunpack.c.l.s4 1983009808
      %v1309 = vunpack.c.0.s8 %v1308
      %v1310 = vperm.slane %v1304, %v1309
      %v1312 = vunpack.c.l.s4 1983009808
      %v1313 = vunpack.c.0.s8 %v1312
      %v1314 = vperm.slane %v1306, %v1313
      %v1315 = vrot.slane %v1310, 4
      %v1316 = vsel %vm1167, %v1315, %v1298
      %v1317 = vrot.slane %v1298, 4
      %v1318 = vsel %vm1167, %v1310, %v1317
      %v1320 = vunpack.c.l.s4 1934713408
      %v1321 = vunpack.c.0.s8 %v1320
      %v1322 = vperm.slane %v1316, %v1321
      %v1324 = vunpack.c.l.s4 1934713408
      %v1325 = vunpack.c.0.s8 %v1324
      %v1326 = vperm.slane %v1318, %v1325
      %v1327 = vrot.slane %v1314, 4
      %v1328 = vsel %vm1167, %v1327, %v1302
      %v1329 = vrot.slane %v1302, 4
      %v1330 = vsel %vm1167, %v1314, %v1329
      %v1332 = vunpack.c.l.s4 1934713408
      %v1333 = vunpack.c.0.s8 %v1332
      %v1334 = vperm.slane %v1328, %v1333
      %v1336 = vunpack.c.l.s4 1934713408
      %v1337 = vunpack.c.0.s8 %v1336
      %v1338 = vperm.slane %v1330, %v1337
      %v1339 = vrot.slane %v1322, 4
      %v1340 = vsel %vm1167, 0.0, %v1339
      %v1341 = vrot.slane %v1326, 4
      %v1342 = vsel %vm1167, 0.0, %v1341
      %v1343 = vrot.slane %v1334, 4
      %v1344 = vsel %vm1167, 0.0, %v1343
      %v1345 = vrot.slane %v1338, 4
      %v1346 = vsel %vm1167, 0.0, %v1345
      %v1347 = vsel %vm1167, %v1341, %v1322
      %v1349 = vunpack.c.l.s4 1983009808
      %v1350 = vunpack.c.0.s8 %v1349
      %v1351 = vperm.slane %v1347, %v1350
      %v1352 = vrot.slane %v1342, 4
      %v1353 = vsel %vm1167, %v1352, %v1340
      %v1355 = vunpack.c.l.s4 1983009808
      %v1356 = vunpack.c.0.s8 %v1355
      %v1357 = vperm.slane %v1353, %v1356
      %v1358 = vsel %vm1167, %v1345, %v1334
      %v1360 = vunpack.c.l.s4 1983009808
      %v1361 = vunpack.c.0.s8 %v1360
      %v1362 = vperm.slane %v1358, %v1361
      %v1363 = vrot.slane %v1346, 4
      %v1364 = vsel %vm1167, %v1363, %v1344
      %v1366 = vunpack.c.l.s4 1983009808
      %v1367 = vunpack.c.0.s8 %v1366
      %v1368 = vperm.slane %v1364, %v1367
      %v1369 = vrot.slane %v1357, 4
      %v1370 = vsel %vm1167, %v1369, %v1351
      %v1371 = vrot.slane %v1351, 4
      %v1372 = vsel %vm1167, %v1357, %v1371
      %v1374 = vunpack.c.l.s4 1934713408
      %v1375 = vunpack.c.0.s8 %v1374
      %v1376 = vperm.slane %v1370, %v1375
      %v1378 = vunpack.c.l.s4 1934713408
      %v1379 = vunpack.c.0.s8 %v1378
      %v1380 = vperm.slane %v1372, %v1379
      %v1381 = vrot.slane %v1368, 4
      %v1382 = vsel %vm1167, %v1381, %v1362
      %v1383 = vrot.slane %v1362, 4
      %v1384 = vsel %vm1167, %v1368, %v1383
      %v1386 = vunpack.c.l.s4 1934713408
      %v1387 = vunpack.c.0.s8 %v1386
      %v1388 = vperm.slane %v1382, %v1387
      %v1390 = vunpack.c.l.s4 1934713408
      %v1391 = vunpack.c.0.s8 %v1390
      %v1392 = vperm.slane %v1384, %v1391
      %v1393 = vrot.slane %v1388, 4
      %v1394 = vsel %vm1167, %v1393, %v1376
      %v1395 = vrot.slane %v1376, 4
      %v1396 = vsel %vm1167, %v1388, %v1395
      %v1397 = vrot.slane %v1392, 4
      %v1398 = vsel %vm1167, %v1397, %v1380
      %v1399 = vrot.slane %v1380, 4
      %v1400 = vsel %vm1167, %v1392, %v1399
      %v1401 = vpack.c.bf16 %v1394, %v1394
      %v1402 = vpack.c.bf16 %v1396, %v1396
      %v1403 = vpack.c.bf16 %v1398, %v1398
      %v1404 = vpack.c.bf16 %v1400, %v1400
      %1406 = vrot.lane.b32.xlu0 %v1153, 96
      %v1407 = vpop.permute.xlu0 %1406
      %1409 = vrot.lane.b32.xlu0 %v1153, 64
      %v1410 = vpop.permute.xlu0 %1409
      %1412 = vrot.lane.b32.xlu0 %v1153, 32
      %v1413 = vpop.permute.xlu0 %1412
      %v1415 = vrot.slane %v1410, 4
      %v1416 = vsel %vm1167, %v1415, %v1153
      %v1417 = vrot.slane %v1153, 4
      %v1418 = vsel %vm1167, %v1410, %v1417
      %v1420 = vunpack.c.l.s4 1983009808
      %v1421 = vunpack.c.0.s8 %v1420
      %v1422 = vperm.slane %v1416, %v1421
      %v1424 = vunpack.c.l.s4 1983009808
      %v1425 = vunpack.c.0.s8 %v1424
      %v1426 = vperm.slane %v1418, %v1425
      %v1427 = vrot.slane %v1413, 4
      %v1428 = vsel %vm1167, %v1427, %v1407
      %v1429 = vrot.slane %v1407, 4
      %v1430 = vsel %vm1167, %v1413, %v1429
      %v1432 = vunpack.c.l.s4 1983009808
      %v1433 = vunpack.c.0.s8 %v1432
      %v1434 = vperm.slane %v1428, %v1433
      %v1436 = vunpack.c.l.s4 1983009808
      %v1437 = vunpack.c.0.s8 %v1436
      %v1438 = vperm.slane %v1430, %v1437
      %v1439 = vrot.slane %v1434, 4
      %v1440 = vsel %vm1167, %v1439, %v1422
      %v1441 = vrot.slane %v1422, 4
      %v1442 = vsel %vm1167, %v1434, %v1441
      %v1444 = vunpack.c.l.s4 1934713408
      %v1445 = vunpack.c.0.s8 %v1444
      %v1446 = vperm.slane %v1440, %v1445
      %v1448 = vunpack.c.l.s4 1934713408
      %v1449 = vunpack.c.0.s8 %v1448
      %v1450 = vperm.slane %v1442, %v1449
      %v1451 = vrot.slane %v1438, 4
      %v1452 = vsel %vm1167, %v1451, %v1426
      %v1453 = vrot.slane %v1426, 4
      %v1454 = vsel %vm1167, %v1438, %v1453
      %v1456 = vunpack.c.l.s4 1934713408
      %v1457 = vunpack.c.0.s8 %v1456
      %v1458 = vperm.slane %v1452, %v1457
      %v1460 = vunpack.c.l.s4 1934713408
      %v1461 = vunpack.c.0.s8 %v1460
      %v1462 = vperm.slane %v1454, %v1461
      %v1463 = vrot.slane %v1446, 4
      %v1464 = vsel %vm1167, 0.0, %v1463
      %v1465 = vrot.slane %v1450, 4
      %v1466 = vsel %vm1167, 0.0, %v1465
      %v1467 = vrot.slane %v1458, 4
      %v1468 = vsel %vm1167, 0.0, %v1467
      %v1469 = vrot.slane %v1462, 4
      %v1470 = vsel %vm1167, 0.0, %v1469
      %v1471 = vsel %vm1167, %v1465, %v1446
      %v1473 = vunpack.c.l.s4 1983009808
      %v1474 = vunpack.c.0.s8 %v1473
      %v1475 = vperm.slane %v1471, %v1474
      %v1476 = vrot.slane %v1466, 4
      %v1477 = vsel %vm1167, %v1476, %v1464
      %v1479 = vunpack.c.l.s4 1983009808
      %v1480 = vunpack.c.0.s8 %v1479
      %v1481 = vperm.slane %v1477, %v1480
      %v1482 = vsel %vm1167, %v1469, %v1458
      %v1484 = vunpack.c.l.s4 1983009808
      %v1485 = vunpack.c.0.s8 %v1484
      %v1486 = vperm.slane %v1482, %v1485
      %v1487 = vrot.slane %v1470, 4
      %v1488 = vsel %vm1167, %v1487, %v1468
      %v1490 = vunpack.c.l.s4 1983009808
      %v1491 = vunpack.c.0.s8 %v1490
      %v1492 = vperm.slane %v1488, %v1491
      %v1493 = vrot.slane %v1481, 4
      %v1494 = vsel %vm1167, %v1493, %v1475
      %v1495 = vrot.slane %v1475, 4
      %v1496 = vsel %vm1167, %v1481, %v1495
      %v1498 = vunpack.c.l.s4 1934713408
      %v1499 = vunpack.c.0.s8 %v1498
      %v1500 = vperm.slane %v1494, %v1499
      %v1502 = vunpack.c.l.s4 1934713408
      %v1503 = vunpack.c.0.s8 %v1502
      %v1504 = vperm.slane %v1496, %v1503
      %v1505 = vrot.slane %v1492, 4
      %v1506 = vsel %vm1167, %v1505, %v1486
      %v1507 = vrot.slane %v1486, 4
      %v1508 = vsel %vm1167, %v1492, %v1507
      %v1510 = vunpack.c.l.s4 1934713408
      %v1511 = vunpack.c.0.s8 %v1510
      %v1512 = vperm.slane %v1506, %v1511
      %v1514 = vunpack.c.l.s4 1934713408
      %v1515 = vunpack.c.0.s8 %v1514
      %v1516 = vperm.slane %v1508, %v1515
      %v1517 = vrot.slane %v1512, 4
      %v1518 = vsel %vm1167, %v1517, %v1500
      %v1519 = vrot.slane %v1500, 4
      %v1520 = vsel %vm1167, %v1512, %v1519
      %v1521 = vrot.slane %v1516, 4
      %v1522 = vsel %vm1167, %v1521, %v1504
      %v1523 = vrot.slane %v1504, 4
      %v1524 = vsel %vm1167, %v1516, %v1523
      %v1525 = vpack.c.bf16 %v1518, %v1518
      %v1526 = vpack.c.bf16 %v1520, %v1520
      %v1527 = vpack.c.bf16 %v1522, %v1522
      %v1528 = vpack.c.bf16 %v1524, %v1524
      %vm1529 = vcmask 261120
      %v1531 = vsel %vm1529, %v1277, 0
      %v1534 = vsel %vm1529, %v1401, 0
      %1536 = vmatpush.bf16.xpose.msra.mxu0 0
      %1537 = vmatpush.bf16.xpose.msra.mxu0 0
      %1538 = vmatpush.bf16.xpose.msra.mxu0 0
      %1539 = vmatpush.bf16.xpose.msra.mxu0 0
      %1540 = vmatpush.bf16.xpose.msra.mxu0 0
      %1541 = vmatpush.bf16.xpose.msra.mxu0 0
      %1542 = vmatpush.bf16.xpose.msra.mxu0 0
      %1543 = vmatpush.bf16.xpose.msra.mxu0 %v1534
      %1544 = vmatmul.bf16.gmra.mxu0 %v1531
      %v1545 = vpop.f32.mrf.mxu0
      %v1546 = vadd.f32 0.0, %v1545
      %v1547 = vpop.f32.mrf.mxu0
      %1548 = vdwg.mxu0
      %v1550 = vsel %vm1529, %v1278, 0
      %v1553 = vsel %vm1529, %v1402, 0
      %1555 = vmatpush.bf16.xpose.msra.mxu0 0
      %1556 = vmatpush.bf16.xpose.msra.mxu0 0
      %1557 = vmatpush.bf16.xpose.msra.mxu0 0
      %1558 = vmatpush.bf16.xpose.msra.mxu0 0
      %1559 = vmatpush.bf16.xpose.msra.mxu0 0
      %1560 = vmatpush.bf16.xpose.msra.mxu0 0
      %1561 = vmatpush.bf16.xpose.msra.mxu0 0
      %1562 = vmatpush.bf16.xpose.msra.mxu0 %v1553
      %1563 = vmatmul.bf16.gmra.mxu0 %v1550
      %v1564 = vpop.f32.mrf.mxu0
      %v1565 = vadd.f32 0.0, %v1564
      %v1566 = vpop.f32.mrf.mxu0
      %1567 = vdwg.mxu0
      %v1569 = vsel %vm1529, %v1279, 0
      %v1572 = vsel %vm1529, %v1403, 0
      %1574 = vmatpush.bf16.xpose.msra.mxu0 0
      %1575 = vmatpush.bf16.xpose.msra.mxu0 0
      %1576 = vmatpush.bf16.xpose.msra.mxu0 0
      %1577 = vmatpush.bf16.xpose.msra.mxu0 0
      %1578 = vmatpush.bf16.xpose.msra.mxu0 0
      %1579 = vmatpush.bf16.xpose.msra.mxu0 0
      %1580 = vmatpush.bf16.xpose.msra.mxu0 0
      %1581 = vmatpush.bf16.xpose.msra.mxu0 %v1572
      %1582 = vmatmul.bf16.gmra.mxu0 %v1569
      %v1583 = vpop.f32.mrf.mxu0
      %v1584 = vadd.f32 0.0, %v1583
      %v1585 = vpop.f32.mrf.mxu0
      %1586 = vdwg.mxu0
      %v1588 = vsel %vm1529, %v1280, 0
      %v1591 = vsel %vm1529, %v1404, 0
      %1593 = vmatpush.bf16.xpose.msra.mxu0 0
      %1594 = vmatpush.bf16.xpose.msra.mxu0 0
      %1595 = vmatpush.bf16.xpose.msra.mxu0 0
      %1596 = vmatpush.bf16.xpose.msra.mxu0 0
      %1597 = vmatpush.bf16.xpose.msra.mxu0 0
      %1598 = vmatpush.bf16.xpose.msra.mxu0 0
      %1599 = vmatpush.bf16.xpose.msra.mxu0 0
      %1600 = vmatpush.bf16.xpose.msra.mxu0 %v1591
      %1601 = vmatmul.bf16.gmra.mxu0 %v1588
      %v1602 = vpop.f32.mrf.mxu0
      %v1603 = vadd.f32 0.0, %v1602
      %v1604 = vpop.f32.mrf.mxu0
      %1605 = vdwg.mxu0
      %v1606 = vmul.f32 %v1546, 0.17677669
      %v1607 = vmul.f32 %v1565, 0.17677669
      %v1608 = vmul.f32 %v1584, 0.17677669
      %v1609 = vmul.f32 %v1603, 0.17677669
      %v1610 = vadd.f32 %v1606, %v925
      %v1611 = vadd.f32 %v1607, %v925
      %v1612 = vadd.f32 %v1608, %v925
      %v1613 = vadd.f32 %v1609, %v925
      %vm1614 = vcmask 64512
      %v1615 = vsel %vm1614, %v1610, -inf
      %1616 = vmax.xlane.f32.xlu0 %v1615
      %v1617 = vpop.xlane.xlu0 %1616
      %v1618 = vsel %vm1614, %v1611, -inf
      %1619 = vmax.xlane.f32.xlu0 %v1618
      %v1620 = vpop.xlane.xlu0 %1619
      %v1621 = vsel %vm1614, %v1612, -inf
      %1622 = vmax.xlane.f32.xlu0 %v1621
      %v1623 = vpop.xlane.xlu0 %1622
      %v1624 = vsel %vm1614, %v1613, -inf
      %1625 = vmax.xlane.f32.xlu0 %v1624
      %v1626 = vpop.xlane.xlu0 %1625
      %v1627 = vsub.f32 %v1610, %v1617
      %v1628 = vsub.f32 %v1611, %v1620
      %v1629 = vsub.f32 %v1612, %v1623
      %v1630 = vsub.f32 %v1613, %v1626
      %v1631 = vmul.f32 %v1627, 1.442695
      %v1632 = vpow.pop %v1631
      %v1633 = vmul.f32 %v1628, 1.442695
      %v1634 = vpow.pop %v1633
      %v1635 = vmul.f32 %v1629, 1.442695
      %v1636 = vpow.pop %v1635
      %v1637 = vmul.f32 %v1630, 1.442695
      %v1638 = vpow.pop %v1637
      %v1639 = vsel %vm1614, %v1632, 0.0
      %1640 = vadd.xlane.f32.xlu0 %v1639
      %v1641 = vpop.xlane.xlu0 %1640
      %v1642 = vsel %vm1614, %v1634, 0.0
      %1643 = vadd.xlane.f32.xlu0 %v1642
      %v1644 = vpop.xlane.xlu0 %1643
      %v1645 = vsel %vm1614, %v1636, 0.0
      %1646 = vadd.xlane.f32.xlu0 %v1645
      %v1647 = vpop.xlane.xlu0 %1646
      %v1648 = vsel %vm1614, %v1638, 0.0
      %1649 = vadd.xlane.f32.xlu0 %v1648
      %v1650 = vpop.xlane.xlu0 %1649
      %v1651 = vrcp.pop %v1641
      %v1652 = vrcp.pop %v1644
      %v1653 = vrcp.pop %v1647
      %v1654 = vrcp.pop %v1650
      %v1655 = vmul.f32 %v1632, %v1651
      %v1656 = vmul.f32 %v1634, %v1652
      %v1657 = vmul.f32 %v1636, %v1653
      %v1658 = vmul.f32 %v1638, %v1654
      %v1659 = vpack.c.bf16 %v1655, %v1655
      %v1660 = vpack.c.bf16 %v1656, %v1656
      %v1661 = vpack.c.bf16 %v1657, %v1657
      %v1662 = vpack.c.bf16 %v1658, %v1658
      %v1664 = vsel %vm1614, %v1659, 0
      %vm1666 = vcmask 1043456
      %v1668 = vsel %vm1666, %v1525, 0
      %1670 = vmatpush.bf16.msra.mxu0 0
      %1671 = vmatpush.bf16.msra.mxu0 0
      %1672 = vmatpush.bf16.msra.mxu0 0
      %1673 = vmatpush.bf16.msra.mxu0 0
      %1674 = vmatpush.bf16.msra.mxu0 0
      %1675 = vmatpush.bf16.msra.mxu0 0
      %1676 = vmatpush.bf16.msra.mxu0 0
      %1677 = vmatpush.bf16.msra.mxu0 %v1668
      %1678 = vmatmul.bf16.gmra.mxu0 %v1664
      %v1679 = vpop.f32.mrf.mxu0
      %v1680 = vadd.f32 0.0, %v1679
      %v1681 = vpop.f32.mrf.mxu0
      %1682 = vdwg.mxu0
      %v1684 = vsel %vm1614, %v1660, 0
      %v1687 = vsel %vm1666, %v1526, 0
      %1689 = vmatpush.bf16.msra.mxu0 0
      %1690 = vmatpush.bf16.msra.mxu0 0
      %1691 = vmatpush.bf16.msra.mxu0 0
      %1692 = vmatpush.bf16.msra.mxu0 0
      %1693 = vmatpush.bf16.msra.mxu0 0
      %1694 = vmatpush.bf16.msra.mxu0 0
      %1695 = vmatpush.bf16.msra.mxu0 0
      %1696 = vmatpush.bf16.msra.mxu0 %v1687
      %1697 = vmatmul.bf16.gmra.mxu0 %v1684
      %v1698 = vpop.f32.mrf.mxu0
      %v1699 = vadd.f32 0.0, %v1698
      %v1700 = vpop.f32.mrf.mxu0
      %1701 = vdwg.mxu0
      %v1703 = vsel %vm1614, %v1661, 0
      %v1706 = vsel %vm1666, %v1527, 0
      %1708 = vmatpush.bf16.msra.mxu0 0
      %1709 = vmatpush.bf16.msra.mxu0 0
      %1710 = vmatpush.bf16.msra.mxu0 0
      %1711 = vmatpush.bf16.msra.mxu0 0
      %1712 = vmatpush.bf16.msra.mxu0 0
      %1713 = vmatpush.bf16.msra.mxu0 0
      %1714 = vmatpush.bf16.msra.mxu0 0
      %1715 = vmatpush.bf16.msra.mxu0 %v1706
      %1716 = vmatmul.bf16.gmra.mxu0 %v1703
      %v1717 = vpop.f32.mrf.mxu0
      %v1718 = vadd.f32 0.0, %v1717
      %v1719 = vpop.f32.mrf.mxu0
      %1720 = vdwg.mxu0
      %v1722 = vsel %vm1614, %v1662, 0
      %v1725 = vsel %vm1666, %v1528, 0
      %1727 = vmatpush.bf16.msra.mxu0 0
      %1728 = vmatpush.bf16.msra.mxu0 0
      %1729 = vmatpush.bf16.msra.mxu0 0
      %1730 = vmatpush.bf16.msra.mxu0 0
      %1731 = vmatpush.bf16.msra.mxu0 0
      %1732 = vmatpush.bf16.msra.mxu0 0
      %1733 = vmatpush.bf16.msra.mxu0 0
      %1734 = vmatpush.bf16.msra.mxu0 %v1725
      %1735 = vmatmul.bf16.gmra.mxu0 %v1722
      %v1736 = vpop.f32.mrf.mxu0
      %v1737 = vadd.f32 0.0, %v1736
      %v1738 = vpop.f32.mrf.mxu0
      %1739 = vdwg.mxu0
      %v1740 = vrot.slane %v1718, 4
      %v1741 = vsel %vm1167, %v1740, %v1680
      %v1742 = vrot.slane %v1680, 4
      %v1743 = vsel %vm1167, %v1718, %v1742
      %v1745 = vunpack.c.l.s4 1983009808
      %v1746 = vunpack.c.0.s8 %v1745
      %v1747 = vperm.slane %v1741, %v1746
      %v1749 = vunpack.c.l.s4 1983009808
      %v1750 = vunpack.c.0.s8 %v1749
      %v1751 = vperm.slane %v1743, %v1750
      %v1752 = vrot.slane %v1737, 4
      %v1753 = vsel %vm1167, %v1752, %v1699
      %v1754 = vrot.slane %v1699, 4
      %v1755 = vsel %vm1167, %v1737, %v1754
      %v1757 = vunpack.c.l.s4 1983009808
      %v1758 = vunpack.c.0.s8 %v1757
      %v1759 = vperm.slane %v1753, %v1758
      %v1761 = vunpack.c.l.s4 1983009808
      %v1762 = vunpack.c.0.s8 %v1761
      %v1763 = vperm.slane %v1755, %v1762
      %v1764 = vrot.slane %v1759, 4
      %v1765 = vsel %vm1167, %v1764, %v1747
      %v1766 = vrot.slane %v1747, 4
      %v1767 = vsel %vm1167, %v1759, %v1766
      %v1769 = vunpack.c.l.s4 1934713408
      %v1770 = vunpack.c.0.s8 %v1769
      %v1771 = vperm.slane %v1765, %v1770
      %v1773 = vunpack.c.l.s4 1934713408
      %v1774 = vunpack.c.0.s8 %v1773
      %v1775 = vperm.slane %v1767, %v1774
      %v1776 = vrot.slane %v1763, 4
      %v1777 = vsel %vm1167, %v1776, %v1751
      %v1778 = vrot.slane %v1751, 4
      %v1779 = vsel %vm1167, %v1763, %v1778
      %v1781 = vunpack.c.l.s4 1934713408
      %v1782 = vunpack.c.0.s8 %v1781
      %v1783 = vperm.slane %v1777, %v1782
      %v1785 = vunpack.c.l.s4 1934713408
      %v1786 = vunpack.c.0.s8 %v1785
      %v1787 = vperm.slane %v1779, %v1786
      %v1788 = vrot.slane %v1771, 4
      %v1789 = vsel %vm1167, 0.0, %v1788
      %v1790 = vrot.slane %v1775, 4
      %v1791 = vsel %vm1167, 0.0, %v1790
      %v1792 = vrot.slane %v1783, 4
      %v1793 = vsel %vm1167, 0.0, %v1792
      %v1794 = vrot.slane %v1787, 4
      %v1795 = vsel %vm1167, 0.0, %v1794
      %v1796 = vsel %vm1167, %v1790, %v1771
      %v1798 = vunpack.c.l.s4 1983009808
      %v1799 = vunpack.c.0.s8 %v1798
      %v1800 = vperm.slane %v1796, %v1799
      %v1801 = vrot.slane %v1791, 4
      %v1802 = vsel %vm1167, %v1801, %v1789
      %v1804 = vunpack.c.l.s4 1983009808
      %v1805 = vunpack.c.0.s8 %v1804
      %v1806 = vperm.slane %v1802, %v1805
      %v1807 = vsel %vm1167, %v1794, %v1783
      %v1809 = vunpack.c.l.s4 1983009808
      %v1810 = vunpack.c.0.s8 %v1809
      %v1811 = vperm.slane %v1807, %v1810
      %v1812 = vrot.slane %v1795, 4
      %v1813 = vsel %vm1167, %v1812, %v1793
      %v1815 = vunpack.c.l.s4 1983009808
      %v1816 = vunpack.c.0.s8 %v1815
      %v1817 = vperm.slane %v1813, %v1816
      %v1818 = vrot.slane %v1806, 4
      %v1819 = vsel %vm1167, %v1818, %v1800
      %v1820 = vrot.slane %v1800, 4
      %v1821 = vsel %vm1167, %v1806, %v1820
      %v1823 = vunpack.c.l.s4 1934713408
      %v1824 = vunpack.c.0.s8 %v1823
      %v1825 = vperm.slane %v1819, %v1824
      %v1827 = vunpack.c.l.s4 1934713408
      %v1828 = vunpack.c.0.s8 %v1827
      %v1829 = vperm.slane %v1821, %v1828
      %v1830 = vrot.slane %v1817, 4
      %v1831 = vsel %vm1167, %v1830, %v1811
      %v1832 = vrot.slane %v1811, 4
      %v1833 = vsel %vm1167, %v1817, %v1832
      %v1835 = vunpack.c.l.s4 1934713408
      %v1836 = vunpack.c.0.s8 %v1835
      %v1837 = vperm.slane %v1831, %v1836
      %v1839 = vunpack.c.l.s4 1934713408
      %v1840 = vunpack.c.0.s8 %v1839
      %v1841 = vperm.slane %v1833, %v1840
      %v1842 = vrot.slane %v1837, 4
      %v1843 = vsel %vm1167, %v1842, %v1825
      %v1844 = vrot.slane %v1825, 4
      %v1845 = vsel %vm1167, %v1837, %v1844
      %v1846 = vrot.slane %v1841, 4
      %v1847 = vsel %vm1167, %v1846, %v1829
      %v1848 = vrot.slane %v1829, 4
      %v1849 = vsel %vm1167, %v1841, %v1848
      %1851 = vrot.lane.b32.xlu0 %v1845, 32
      %v1852 = vpop.permute.xlu0 %1851
      %1855 = vrot.lane.b32.xlu0 %v1847, 64
      %v1856 = vpop.permute.xlu0 %1855
      %1859 = vrot.lane.b32.xlu0 %v1849, 96
      %v1860 = vpop.permute.xlu0 %1859
      %v1862 = vsel %vm1529, %v1843, %v1852
      %vm1863 = vcmask 523264
      %v1864 = vsel %vm1863, %v1862, %v1856
      %vm1865 = vcmask 785408
      %v1866 = vsel %vm1865, %v1864, %v1860
      %v1867 = vpack.c.bf16 %v1866, %v1866
      %v1869 = vperm.slane %v976, 0
      %v1887 = vunpack.c.l.b16 %v960
      %v1888 = vunpack.c.l.b16 %v961
      %v1889 = vunpack.c.l.b16 %v962
      %v1890 = vunpack.c.l.b16 %v963
      %v1891 = vunpack.c.l.b16 %v964
      %v1892 = vunpack.c.l.b16 %v965
      %v1893 = vunpack.c.l.b16 %v966
      %v1894 = vunpack.c.l.b16 %v967
      %v1895 = vunpack.c.l.b16 %v968
      %v1896 = vunpack.c.l.b16 %v969
      %v1897 = vunpack.c.l.b16 %v970
      %v1898 = vunpack.c.l.b16 %v971
      %v1899 = vunpack.c.l.b16 %v972
      %v1900 = vunpack.c.l.b16 %v973
      %v1901 = vunpack.c.l.b16 %v974
      %v1902 = vunpack.c.l.b16 %v975
      %v1903 = vpack.c.b16 %v1888, %v1887
      %v1904 = vpack.c.b16 %v1890, %v1889
      %v1905 = vpack.c.b16 %v1892, %v1891
      %v1906 = vpack.c.b16 %v1894, %v1893
      %v1907 = vpack.c.b16 %v1896, %v1895
      %v1908 = vpack.c.b16 %v1898, %v1897
      %v1909 = vpack.c.b16 %v1900, %v1899
      %v1910 = vpack.c.b16 %v1902, %v1901
      %1919 = vmatpush.bf16.msra.mxu0 %v1910
      %1920 = vmatpush.bf16.msra.mxu0 %v1909
      %1921 = vmatpush.bf16.msra.mxu0 %v1908
      %1922 = vmatpush.bf16.msra.mxu0 %v1907
      %1923 = vmatpush.bf16.msra.mxu0 %v1906
      %1924 = vmatpush.bf16.msra.mxu0 %v1905
      %1925 = vmatpush.bf16.msra.mxu0 %v1904
      %1926 = vmatpush.bf16.msra.mxu0 %v1903
      %1927 = vmatmul.bf16.gmra.mxu0 %v1867
      %v1928 = vpop.f32.mrf.mxu0
      %v1929 = vadd.f32 %v1869, %v1928
      %v1930 = vpop.f32.mrf.mxu0
      %1931 = vdwg.mxu0
      %v1932 = vadd.f32 %v1929, %v908
      %1933 = vadd.xlane.f32.xlu0 %v1932
      %v1934 = vpop.xlane.xlu0 %1933
      %v1935 = vrcp.pop 128.0
      %v1936 = vmul.f32 128.0, %v1935
      %v1937 = vsub.f32 1.0, %v1936
      %v1938 = vmul.f32 %v1935, %v1937
      %v1939 = vadd.f32 %v1935, %v1938
      %vm1940 = vweird.f32 %v1935
      %v1941 = vsel %vm1940, %v1935, %v1939
      %v1942 = vmul.f32 %v1934, %v1941
      %v1943 = vsub.f32 %v1932, %v1942
      %v1944 = vmul.f32 %v1943, %v1943
      %1945 = vadd.xlane.f32.xlu0 %v1944
      %v1946 = vpop.xlane.xlu0 %1945
      %v1947 = vmul.f32 %v1946, %v1941
      %v1948 = vadd.f32 %v1947, 1e-05
      %v1949 = vrsqrt.pop %v1948
      %v1950 = vmul.f32 %v1949, %v1948
      %v1951 = vmul.f32 %v1950, %v1949
      %v1952 = vmul.f32 0.5, %v1951
      %v1953 = vsub.f32 1.5, %v1952
      %v1954 = vmul.f32 %v1949, %v1953
      %vm1955 = vweird.f32 %v1948
      %vm1956 = vweird.f32 %v1949
      %vm1957 = vmor %vm1955, %vm1956
      %v1958 = vsel %vm1957, %v1949, %v1954
      %v1959 = vmul.f32 %v1943, %v1958
      %v1961 = vperm.slane %v977, 0
      %v1963 = vmul.f32 %v1959, %v1961
      %v1965 = vperm.slane %v978, 0
      %v1967 = vadd.f32 %v1963, %v1965
      %v1968 = vld [vmem:[%s899] sm:$0x1]
      %v1970 = vperm.slane %v1968, 0
      %v1972 = vmul.f32 %v1970, -1e+30
      %v1973 = vld [vmem:[%s13] sm:$0xf]
      %v1974 = vld [vmem:[%s13 + $0x4] sm:$0xf]
      %v1975 = vld [vmem:[%s13 + $0x8] sm:$0xf]
      %v1976 = vld [vmem:[%s13 + $0xc] sm:$0xf]
      %v1977 = vld [vmem:[%s13 + $0x10] sm:$0xf]
      %v1978 = vld [vmem:[%s13 + $0x14] sm:$0xf]
      %v1979 = vld [vmem:[%s13 + $0x18] sm:$0xf]
      %v1980 = vld [vmem:[%s13 + $0x1c] sm:$0xf]
      %v1981 = vld [vmem:[%s13 + $0x20] sm:$0xf]
      %v1982 = vld [vmem:[%s13 + $0x24] sm:$0xf]
      %v1983 = vld [vmem:[%s13 + $0x28] sm:$0xf]
      %v1984 = vld [vmem:[%s13 + $0x2c] sm:$0xf]
      %v1985 = vld [vmem:[%s13 + $0x30] sm:$0xf]
      %v1986 = vld [vmem:[%s13 + $0x34] sm:$0xf]
      %v1987 = vld [vmem:[%s13 + $0x38] sm:$0xf]
      %v1988 = vld [vmem:[%s13 + $0x3c] sm:$0xf]
      %v1989 = vld [vmem:[%s14] sm:$0x1]
      %v1990 = vld [vmem:[%s15] sm:$0xff]
      %v1991 = vld [vmem:[%s15 + $0x8] sm:$0xff]
      %v1992 = vld [vmem:[%s15 + $0x10] sm:$0xff]
      %v1993 = vld [vmem:[%s15 + $0x18] sm:$0xff]
      %v1994 = vld [vmem:[%s15 + $0x20] sm:$0xff]
      %v1995 = vld [vmem:[%s15 + $0x28] sm:$0xff]
      %v1996 = vld [vmem:[%s15 + $0x30] sm:$0xff]
      %v1997 = vld [vmem:[%s15 + $0x38] sm:$0xff]
      %v1998 = vld [vmem:[%s15 + $0x40] sm:$0xff]
      %v1999 = vld [vmem:[%s15 + $0x48] sm:$0xff]
      %v2000 = vld [vmem:[%s15 + $0x50] sm:$0xff]
      %v2001 = vld [vmem:[%s15 + $0x58] sm:$0xff]
      %v2002 = vld [vmem:[%s15 + $0x60] sm:$0xff]
      %v2003 = vld [vmem:[%s15 + $0x68] sm:$0xff]
      %v2004 = vld [vmem:[%s15 + $0x70] sm:$0xff]
      %v2005 = vld [vmem:[%s15 + $0x78] sm:$0xff]
      %v2006 = vld [vmem:[%s16] sm:$0x3]
      %v2007 = vld [vmem:[%s17] sm:$0xf]
      %v2008 = vld [vmem:[%s17 + $0x4] sm:$0xf]
      %v2009 = vld [vmem:[%s17 + $0x8] sm:$0xf]
      %v2010 = vld [vmem:[%s17 + $0xc] sm:$0xf]
      %v2011 = vld [vmem:[%s17 + $0x10] sm:$0xf]
      %v2012 = vld [vmem:[%s17 + $0x14] sm:$0xf]
      %v2013 = vld [vmem:[%s17 + $0x18] sm:$0xf]
      %v2014 = vld [vmem:[%s17 + $0x1c] sm:$0xf]
      %v2015 = vld [vmem:[%s17 + $0x20] sm:$0xf]
      %v2016 = vld [vmem:[%s17 + $0x24] sm:$0xf]
      %v2017 = vld [vmem:[%s17 + $0x28] sm:$0xf]
      %v2018 = vld [vmem:[%s17 + $0x2c] sm:$0xf]
      %v2019 = vld [vmem:[%s17 + $0x30] sm:$0xf]
      %v2020 = vld [vmem:[%s17 + $0x34] sm:$0xf]
      %v2021 = vld [vmem:[%s17 + $0x38] sm:$0xf]
      %v2022 = vld [vmem:[%s17 + $0x3c] sm:$0xf]
      %v2023 = vld [vmem:[%s18] sm:$0x1]
      %v2024 = vld [vmem:[%s19] sm:$0x1]
      %v2025 = vld [vmem:[%s20] sm:$0x1]
      %v2026 = vpack.c.bf16 %v1967, %v1967
      %v2028 = vperm.slane %v1989, 0
      %v2046 = vunpack.c.l.b16 %v1973
      %v2047 = vunpack.c.l.b16 %v1974
      %v2048 = vunpack.c.l.b16 %v1975
      %v2049 = vunpack.c.l.b16 %v1976
      %v2050 = vunpack.c.l.b16 %v1977
      %v2051 = vunpack.c.l.b16 %v1978
      %v2052 = vunpack.c.l.b16 %v1979
      %v2053 = vunpack.c.l.b16 %v1980
      %v2054 = vunpack.c.l.b16 %v1981
      %v2055 = vunpack.c.l.b16 %v1982
      %v2056 = vunpack.c.l.b16 %v1983
      %v2057 = vunpack.c.l.b16 %v1984
      %v2058 = vunpack.c.l.b16 %v1985
      %v2059 = vunpack.c.l.b16 %v1986
      %v2060 = vunpack.c.l.b16 %v1987
      %v2061 = vunpack.c.l.b16 %v1988
      %v2062 = vpack.c.b16 %v2047, %v2046
      %v2063 = vpack.c.b16 %v2049, %v2048
      %v2064 = vpack.c.b16 %v2051, %v2050
      %v2065 = vpack.c.b16 %v2053, %v2052
      %v2066 = vpack.c.b16 %v2055, %v2054
      %v2067 = vpack.c.b16 %v2057, %v2056
      %v2068 = vpack.c.b16 %v2059, %v2058
      %v2069 = vpack.c.b16 %v2061, %v2060
      %2078 = vmatpush.bf16.msra.mxu0 %v2069
      %2079 = vmatpush.bf16.msra.mxu0 %v2068
      %2080 = vmatpush.bf16.msra.mxu0 %v2067
      %2081 = vmatpush.bf16.msra.mxu0 %v2066
      %2082 = vmatpush.bf16.msra.mxu0 %v2065
      %2083 = vmatpush.bf16.msra.mxu0 %v2064
      %2084 = vmatpush.bf16.msra.mxu0 %v2063
      %2085 = vmatpush.bf16.msra.mxu0 %v2062
      %2086 = vmatmul.bf16.gmra.mxu0 %v2026
      %v2087 = vpop.f32.mrf.mxu0
      %v2088 = vadd.f32 %v2028, %v2087
      %v2089 = vpop.f32.mrf.mxu0
      %2090 = vdwg.mxu0
      %v2091 = vpack.c.bf16 %v910, %v910
      %v2093 = vperm.slane %v2006, 0
      %v2094 = vperm.slane %v2006, 1
      %v2113 = vunpack.c.l.b16 %v1990
      %v2114 = vunpack.c.h.b16 %v1990
      %v2115 = vunpack.c.l.b16 %v1991
      %v2116 = vunpack.c.h.b16 %v1991
      %v2117 = vunpack.c.l.b16 %v1992
      %v2118 = vunpack.c.h.b16 %v1992
      %v2119 = vunpack.c.l.b16 %v1993
      %v2120 = vunpack.c.h.b16 %v1993
      %v2121 = vunpack.c.l.b16 %v1994
      %v2122 = vunpack.c.h.b16 %v1994
      %v2123 = vunpack.c.l.b16 %v1995
      %v2124 = vunpack.c.h.b16 %v1995
      %v2125 = vunpack.c.l.b16 %v1996
      %v2126 = vunpack.c.h.b16 %v1996
      %v2127 = vunpack.c.l.b16 %v1997
      %v2128 = vunpack.c.h.b16 %v1997
      %v2129 = vunpack.c.l.b16 %v1998
      %v2130 = vunpack.c.h.b16 %v1998
      %v2131 = vunpack.c.l.b16 %v1999
      %v2132 = vunpack.c.h.b16 %v1999
      %v2133 = vunpack.c.l.b16 %v2000
      %v2134 = vunpack.c.h.b16 %v2000
      %v2135 = vunpack.c.l.b16 %v2001
      %v2136 = vunpack.c.h.b16 %v2001
      %v2137 = vunpack.c.l.b16 %v2002
      %v2138 = vunpack.c.h.b16 %v2002
      %v2139 = vunpack.c.l.b16 %v2003
      %v2140 = vunpack.c.h.b16 %v2003
      %v2141 = vunpack.c.l.b16 %v2004
      %v2142 = vunpack.c.h.b16 %v2004
      %v2143 = vunpack.c.l.b16 %v2005
      %v2144 = vunpack.c.h.b16 %v2005
      %v2145 = vpack.c.b16 %v2115, %v2113
      %v2146 = vpack.c.b16 %v2116, %v2114
      %v2147 = vpack.c.b16 %v2119, %v2117
      %v2148 = vpack.c.b16 %v2120, %v2118
      %v2149 = vpack.c.b16 %v2123, %v2121
      %v2150 = vpack.c.b16 %v2124, %v2122
      %v2151 = vpack.c.b16 %v2127, %v2125
      %v2152 = vpack.c.b16 %v2128, %v2126
      %v2153 = vpack.c.b16 %v2131, %v2129
      %v2154 = vpack.c.b16 %v2132, %v2130
      %v2155 = vpack.c.b16 %v2135, %v2133
      %v2156 = vpack.c.b16 %v2136, %v2134
      %v2157 = vpack.c.b16 %v2139, %v2137
      %v2158 = vpack.c.b16 %v2140, %v2138
      %v2159 = vpack.c.b16 %v2143, %v2141
      %v2160 = vpack.c.b16 %v2144, %v2142
      %2177 = vmatpush.bf16.msra.mxu0 %v2159
      %2178 = vmatpush.bf16.msra.mxu0 %v2157
      %2179 = vmatpush.bf16.msra.mxu0 %v2155
      %2180 = vmatpush.bf16.msra.mxu0 %v2153
      %2181 = vmatpush.bf16.msra.mxu0 %v2151
      %2182 = vmatpush.bf16.msra.mxu0 %v2149
      %2183 = vmatpush.bf16.msra.mxu0 %v2147
      %2184 = vmatpush.bf16.msra.mxu0 %v2145
      %2185 = vmatmul.bf16.gmra.mxu0 %v2091
      %v2186 = vpop.f32.mrf.mxu0
      %v2187 = vadd.f32 %v2093, %v2186
      %v2188 = vpop.f32.mrf.mxu0
      %2189 = vdwg.mxu0
      %2190 = vmatpush.bf16.msra.mxu0 %v2160
      %2191 = vmatpush.bf16.msra.mxu0 %v2158
      %2192 = vmatpush.bf16.msra.mxu0 %v2156
      %2193 = vmatpush.bf16.msra.mxu0 %v2154
      %2194 = vmatpush.bf16.msra.mxu0 %v2152
      %2195 = vmatpush.bf16.msra.mxu0 %v2150
      %2196 = vmatpush.bf16.msra.mxu0 %v2148
      %2197 = vmatpush.bf16.msra.mxu0 %v2146
      %2198 = vmatmul.bf16.gmra.mxu0 %v2091
      %v2199 = vpop.f32.mrf.mxu0
      %v2200 = vadd.f32 %v2094, %v2199
      %v2201 = vpop.f32.mrf.mxu0
      %2202 = vdwg.mxu0
      %2204 = vrot.lane.b32.xlu0 %v2088, 96
      %v2205 = vpop.permute.xlu0 %2204
      %2207 = vrot.lane.b32.xlu0 %v2088, 64
      %v2208 = vpop.permute.xlu0 %2207
      %2210 = vrot.lane.b32.xlu0 %v2088, 32
      %v2211 = vpop.permute.xlu0 %2210
      %v2213 = vrot.slane %v2208, 4
      %v2214 = vsel %vm1167, %v2213, %v2088
      %v2215 = vrot.slane %v2088, 4
      %v2216 = vsel %vm1167, %v2208, %v2215
      %v2218 = vunpack.c.l.s4 1983009808
      %v2219 = vunpack.c.0.s8 %v2218
      %v2220 = vperm.slane %v2214, %v2219
      %v2222 = vunpack.c.l.s4 1983009808
      %v2223 = vunpack.c.0.s8 %v2222
      %v2224 = vperm.slane %v2216, %v2223
      %v2225 = vrot.slane %v2211, 4
      %v2226 = vsel %vm1167, %v2225, %v2205
      %v2227 = vrot.slane %v2205, 4
      %v2228 = vsel %vm1167, %v2211, %v2227
      %v2230 = vunpack.c.l.s4 1983009808
      %v2231 = vunpack.c.0.s8 %v2230
      %v2232 = vperm.slane %v2226, %v2231
      %v2234 = vunpack.c.l.s4 1983009808
      %v2235 = vunpack.c.0.s8 %v2234
      %v2236 = vperm.slane %v2228, %v2235
      %v2237 = vrot.slane %v2232, 4
      %v2238 = vsel %vm1167, %v2237, %v2220
      %v2239 = vrot.slane %v2220, 4
      %v2240 = vsel %vm1167, %v2232, %v2239
      %v2242 = vunpack.c.l.s4 1934713408
      %v2243 = vunpack.c.0.s8 %v2242
      %v2244 = vperm.slane %v2238, %v2243
      %v2246 = vunpack.c.l.s4 1934713408
      %v2247 = vunpack.c.0.s8 %v2246
      %v2248 = vperm.slane %v2240, %v2247
      %v2249 = vrot.slane %v2236, 4
      %v2250 = vsel %vm1167, %v2249, %v2224
      %v2251 = vrot.slane %v2224, 4
      %v2252 = vsel %vm1167, %v2236, %v2251
      %v2254 = vunpack.c.l.s4 1934713408
      %v2255 = vunpack.c.0.s8 %v2254
      %v2256 = vperm.slane %v2250, %v2255
      %v2258 = vunpack.c.l.s4 1934713408
      %v2259 = vunpack.c.0.s8 %v2258
      %v2260 = vperm.slane %v2252, %v2259
      %v2261 = vrot.slane %v2244, 4
      %v2262 = vsel %vm1167, 0.0, %v2261
      %v2263 = vrot.slane %v2248, 4
      %v2264 = vsel %vm1167, 0.0, %v2263
      %v2265 = vrot.slane %v2256, 4
      %v2266 = vsel %vm1167, 0.0, %v2265
      %v2267 = vrot.slane %v2260, 4
      %v2268 = vsel %vm1167, 0.0, %v2267
      %v2269 = vsel %vm1167, %v2263, %v2244
      %v2271 = vunpack.c.l.s4 1983009808
      %v2272 = vunpack.c.0.s8 %v2271
      %v2273 = vperm.slane %v2269, %v2272
      %v2274 = vrot.slane %v2264, 4
      %v2275 = vsel %vm1167, %v2274, %v2262
      %v2277 = vunpack.c.l.s4 1983009808
      %v2278 = vunpack.c.0.s8 %v2277
      %v2279 = vperm.slane %v2275, %v2278
      %v2280 = vsel %vm1167, %v2267, %v2256
      %v2282 = vunpack.c.l.s4 1983009808
      %v2283 = vunpack.c.0.s8 %v2282
      %v2284 = vperm.slane %v2280, %v2283
      %v2285 = vrot.slane %v2268, 4
      %v2286 = vsel %vm1167, %v2285, %v2266
      %v2288 = vunpack.c.l.s4 1983009808
      %v2289 = vunpack.c.0.s8 %v2288
      %v2290 = vperm.slane %v2286, %v2289
      %v2291 = vrot.slane %v2279, 4
      %v2292 = vsel %vm1167, %v2291, %v2273
      %v2293 = vrot.slane %v2273, 4
      %v2294 = vsel %vm1167, %v2279, %v2293
      %v2296 = vunpack.c.l.s4 1934713408
      %v2297 = vunpack.c.0.s8 %v2296
      %v2298 = vperm.slane %v2292, %v2297
      %v2300 = vunpack.c.l.s4 1934713408
      %v2301 = vunpack.c.0.s8 %v2300
      %v2302 = vperm.slane %v2294, %v2301
      %v2303 = vrot.slane %v2290, 4
      %v2304 = vsel %vm1167, %v2303, %v2284
      %v2305 = vrot.slane %v2284, 4
      %v2306 = vsel %vm1167, %v2290, %v2305
      %v2308 = vunpack.c.l.s4 1934713408
      %v2309 = vunpack.c.0.s8 %v2308
      %v2310 = vperm.slane %v2304, %v2309
      %v2312 = vunpack.c.l.s4 1934713408
      %v2313 = vunpack.c.0.s8 %v2312
      %v2314 = vperm.slane %v2306, %v2313
      %v2315 = vrot.slane %v2310, 4
      %v2316 = vsel %vm1167, %v2315, %v2298
      %v2317 = vrot.slane %v2298, 4
      %v2318 = vsel %vm1167, %v2310, %v2317
      %v2319 = vrot.slane %v2314, 4
      %v2320 = vsel %vm1167, %v2319, %v2302
      %v2321 = vrot.slane %v2302, 4
      %v2322 = vsel %vm1167, %v2314, %v2321
      %v2323 = vpack.c.bf16 %v2316, %v2316
      %v2324 = vpack.c.bf16 %v2318, %v2318
      %v2325 = vpack.c.bf16 %v2320, %v2320
      %v2326 = vpack.c.bf16 %v2322, %v2322
      %2328 = vrot.lane.b32.xlu0 %v2187, 96
      %v2329 = vpop.permute.xlu0 %2328
      %2331 = vrot.lane.b32.xlu0 %v2187, 64
      %v2332 = vpop.permute.xlu0 %2331
      %2334 = vrot.lane.b32.xlu0 %v2187, 32
      %v2335 = vpop.permute.xlu0 %2334
      %v2337 = vrot.slane %v2332, 4
      %v2338 = vsel %vm1167, %v2337, %v2187
      %v2339 = vrot.slane %v2187, 4
      %v2340 = vsel %vm1167, %v2332, %v2339
      %v2342 = vunpack.c.l.s4 1983009808
      %v2343 = vunpack.c.0.s8 %v2342
      %v2344 = vperm.slane %v2338, %v2343
      %v2346 = vunpack.c.l.s4 1983009808
      %v2347 = vunpack.c.0.s8 %v2346
      %v2348 = vperm.slane %v2340, %v2347
      %v2349 = vrot.slane %v2335, 4
      %v2350 = vsel %vm1167, %v2349, %v2329
      %v2351 = vrot.slane %v2329, 4
      %v2352 = vsel %vm1167, %v2335, %v2351
      %v2354 = vunpack.c.l.s4 1983009808
      %v2355 = vunpack.c.0.s8 %v2354
      %v2356 = vperm.slane %v2350, %v2355
      %v2358 = vunpack.c.l.s4 1983009808
      %v2359 = vunpack.c.0.s8 %v2358
      %v2360 = vperm.slane %v2352, %v2359
      %v2361 = vrot.slane %v2356, 4
      %v2362 = vsel %vm1167, %v2361, %v2344
      %v2363 = vrot.slane %v2344, 4
      %v2364 = vsel %vm1167, %v2356, %v2363
      %v2366 = vunpack.c.l.s4 1934713408
      %v2367 = vunpack.c.0.s8 %v2366
      %v2368 = vperm.slane %v2362, %v2367
      %v2370 = vunpack.c.l.s4 1934713408
      %v2371 = vunpack.c.0.s8 %v2370
      %v2372 = vperm.slane %v2364, %v2371
      %v2373 = vrot.slane %v2360, 4
      %v2374 = vsel %vm1167, %v2373, %v2348
      %v2375 = vrot.slane %v2348, 4
      %v2376 = vsel %vm1167, %v2360, %v2375
      %v2378 = vunpack.c.l.s4 1934713408
      %v2379 = vunpack.c.0.s8 %v2378
      %v2380 = vperm.slane %v2374, %v2379
      %v2382 = vunpack.c.l.s4 1934713408
      %v2383 = vunpack.c.0.s8 %v2382
      %v2384 = vperm.slane %v2376, %v2383
      %v2385 = vrot.slane %v2368, 4
      %v2386 = vsel %vm1167, 0.0, %v2385
      %v2387 = vrot.slane %v2372, 4
      %v2388 = vsel %vm1167, 0.0, %v2387
      %v2389 = vrot.slane %v2380, 4
      %v2390 = vsel %vm1167, 0.0, %v2389
      %v2391 = vrot.slane %v2384, 4
      %v2392 = vsel %vm1167, 0.0, %v2391
      %v2393 = vsel %vm1167, %v2387, %v2368
      %v2395 = vunpack.c.l.s4 1983009808
      %v2396 = vunpack.c.0.s8 %v2395
      %v2397 = vperm.slane %v2393, %v2396
      %v2398 = vrot.slane %v2388, 4
      %v2399 = vsel %vm1167, %v2398, %v2386
      %v2401 = vunpack.c.l.s4 1983009808
      %v2402 = vunpack.c.0.s8 %v2401
      %v2403 = vperm.slane %v2399, %v2402
      %v2404 = vsel %vm1167, %v2391, %v2380
      %v2406 = vunpack.c.l.s4 1983009808
      %v2407 = vunpack.c.0.s8 %v2406
      %v2408 = vperm.slane %v2404, %v2407
      %v2409 = vrot.slane %v2392, 4
      %v2410 = vsel %vm1167, %v2409, %v2390
      %v2412 = vunpack.c.l.s4 1983009808
      %v2413 = vunpack.c.0.s8 %v2412
      %v2414 = vperm.slane %v2410, %v2413
      %v2415 = vrot.slane %v2403, 4
      %v2416 = vsel %vm1167, %v2415, %v2397
      %v2417 = vrot.slane %v2397, 4
      %v2418 = vsel %vm1167, %v2403, %v2417
      %v2420 = vunpack.c.l.s4 1934713408
      %v2421 = vunpack.c.0.s8 %v2420
      %v2422 = vperm.slane %v2416, %v2421
      %v2424 = vunpack.c.l.s4 1934713408
      %v2425 = vunpack.c.0.s8 %v2424
      %v2426 = vperm.slane %v2418, %v2425
      %v2427 = vrot.slane %v2414, 4
      %v2428 = vsel %vm1167, %v2427, %v2408
      %v2429 = vrot.slane %v2408, 4
      %v2430 = vsel %vm1167, %v2414, %v2429
      %v2432 = vunpack.c.l.s4 1934713408
      %v2433 = vunpack.c.0.s8 %v2432
      %v2434 = vperm.slane %v2428, %v2433
      %v2436 = vunpack.c.l.s4 1934713408
      %v2437 = vunpack.c.0.s8 %v2436
      %v2438 = vperm.slane %v2430, %v2437
      %v2439 = vrot.slane %v2434, 4
      %v2440 = vsel %vm1167, %v2439, %v2422
      %v2441 = vrot.slane %v2422, 4
      %v2442 = vsel %vm1167, %v2434, %v2441
      %v2443 = vrot.slane %v2438, 4
      %v2444 = vsel %vm1167, %v2443, %v2426
      %v2445 = vrot.slane %v2426, 4
      %v2446 = vsel %vm1167, %v2438, %v2445
      %v2447 = vpack.c.bf16 %v2440, %v2440
      %v2448 = vpack.c.bf16 %v2442, %v2442
      %v2449 = vpack.c.bf16 %v2444, %v2444
      %v2450 = vpack.c.bf16 %v2446, %v2446
      %2452 = vrot.lane.b32.xlu0 %v2200, 96
      %v2453 = vpop.permute.xlu0 %2452
      %2455 = vrot.lane.b32.xlu0 %v2200, 64
      %v2456 = vpop.permute.xlu0 %2455
      %2458 = vrot.lane.b32.xlu0 %v2200, 32
      %v2459 = vpop.permute.xlu0 %2458
      %v2461 = vrot.slane %v2456, 4
      %v2462 = vsel %vm1167, %v2461, %v2200
      %v2463 = vrot.slane %v2200, 4
      %v2464 = vsel %vm1167, %v2456, %v2463
      %v2466 = vunpack.c.l.s4 1983009808
      %v2467 = vunpack.c.0.s8 %v2466
      %v2468 = vperm.slane %v2462, %v2467
      %v2470 = vunpack.c.l.s4 1983009808
      %v2471 = vunpack.c.0.s8 %v2470
      %v2472 = vperm.slane %v2464, %v2471
      %v2473 = vrot.slane %v2459, 4
      %v2474 = vsel %vm1167, %v2473, %v2453
      %v2475 = vrot.slane %v2453, 4
      %v2476 = vsel %vm1167, %v2459, %v2475
      %v2478 = vunpack.c.l.s4 1983009808
      %v2479 = vunpack.c.0.s8 %v2478
      %v2480 = vperm.slane %v2474, %v2479
      %v2482 = vunpack.c.l.s4 1983009808
      %v2483 = vunpack.c.0.s8 %v2482
      %v2484 = vperm.slane %v2476, %v2483
      %v2485 = vrot.slane %v2480, 4
      %v2486 = vsel %vm1167, %v2485, %v2468
      %v2487 = vrot.slane %v2468, 4
      %v2488 = vsel %vm1167, %v2480, %v2487
      %v2490 = vunpack.c.l.s4 1934713408
      %v2491 = vunpack.c.0.s8 %v2490
      %v2492 = vperm.slane %v2486, %v2491
      %v2494 = vunpack.c.l.s4 1934713408
      %v2495 = vunpack.c.0.s8 %v2494
      %v2496 = vperm.slane %v2488, %v2495
      %v2497 = vrot.slane %v2484, 4
      %v2498 = vsel %vm1167, %v2497, %v2472
      %v2499 = vrot.slane %v2472, 4
      %v2500 = vsel %vm1167, %v2484, %v2499
      %v2502 = vunpack.c.l.s4 1934713408
      %v2503 = vunpack.c.0.s8 %v2502
      %v2504 = vperm.slane %v2498, %v2503
      %v2506 = vunpack.c.l.s4 1934713408
      %v2507 = vunpack.c.0.s8 %v2506
      %v2508 = vperm.slane %v2500, %v2507
      %v2509 = vrot.slane %v2492, 4
      %v2510 = vsel %vm1167, 0.0, %v2509
      %v2511 = vrot.slane %v2496, 4
      %v2512 = vsel %vm1167, 0.0, %v2511
      %v2513 = vrot.slane %v2504, 4
      %v2514 = vsel %vm1167, 0.0, %v2513
      %v2515 = vrot.slane %v2508, 4
      %v2516 = vsel %vm1167, 0.0, %v2515
      %v2517 = vsel %vm1167, %v2511, %v2492
      %v2519 = vunpack.c.l.s4 1983009808
      %v2520 = vunpack.c.0.s8 %v2519
      %v2521 = vperm.slane %v2517, %v2520
      %v2522 = vrot.slane %v2512, 4
      %v2523 = vsel %vm1167, %v2522, %v2510
      %v2525 = vunpack.c.l.s4 1983009808
      %v2526 = vunpack.c.0.s8 %v2525
      %v2527 = vperm.slane %v2523, %v2526
      %v2528 = vsel %vm1167, %v2515, %v2504
      %v2530 = vunpack.c.l.s4 1983009808
      %v2531 = vunpack.c.0.s8 %v2530
      %v2532 = vperm.slane %v2528, %v2531
      %v2533 = vrot.slane %v2516, 4
      %v2534 = vsel %vm1167, %v2533, %v2514
      %v2536 = vunpack.c.l.s4 1983009808
      %v2537 = vunpack.c.0.s8 %v2536
      %v2538 = vperm.slane %v2534, %v2537
      %v2539 = vrot.slane %v2527, 4
      %v2540 = vsel %vm1167, %v2539, %v2521
      %v2541 = vrot.slane %v2521, 4
      %v2542 = vsel %vm1167, %v2527, %v2541
      %v2544 = vunpack.c.l.s4 1934713408
      %v2545 = vunpack.c.0.s8 %v2544
      %v2546 = vperm.slane %v2540, %v2545
      %v2548 = vunpack.c.l.s4 1934713408
      %v2549 = vunpack.c.0.s8 %v2548
      %v2550 = vperm.slane %v2542, %v2549
      %v2551 = vrot.slane %v2538, 4
      %v2552 = vsel %vm1167, %v2551, %v2532
      %v2553 = vrot.slane %v2532, 4
      %v2554 = vsel %vm1167, %v2538, %v2553
      %v2556 = vunpack.c.l.s4 1934713408
      %v2557 = vunpack.c.0.s8 %v2556
      %v2558 = vperm.slane %v2552, %v2557
      %v2560 = vunpack.c.l.s4 1934713408
      %v2561 = vunpack.c.0.s8 %v2560
      %v2562 = vperm.slane %v2554, %v2561
      %v2563 = vrot.slane %v2558, 4
      %v2564 = vsel %vm1167, %v2563, %v2546
      %v2565 = vrot.slane %v2546, 4
      %v2566 = vsel %vm1167, %v2558, %v2565
      %v2567 = vrot.slane %v2562, 4
      %v2568 = vsel %vm1167, %v2567, %v2550
      %v2569 = vrot.slane %v2550, 4
      %v2570 = vsel %vm1167, %v2562, %v2569
      %v2571 = vpack.c.bf16 %v2564, %v2564
      %v2572 = vpack.c.bf16 %v2566, %v2566
      %v2573 = vpack.c.bf16 %v2568, %v2568
      %v2574 = vpack.c.bf16 %v2570, %v2570
      %v2576 = vsel %vm1529, %v2323, 0
      %v2579 = vsel %vm1529, %v2447, 0
      %2581 = vmatpush.bf16.xpose.msra.mxu0 0
      %2582 = vmatpush.bf16.xpose.msra.mxu0 0
      %2583 = vmatpush.bf16.xpose.msra.mxu0 0
      %2584 = vmatpush.bf16.xpose.msra.mxu0 0
      %2585 = vmatpush.bf16.xpose.msra.mxu0 0
      %2586 = vmatpush.bf16.xpose.msra.mxu0 0
      %2587 = vmatpush.bf16.xpose.msra.mxu0 0
      %2588 = vmatpush.bf16.xpose.msra.mxu0 %v2579
      %2589 = vmatmul.bf16.gmra.mxu0 %v2576
      %v2590 = vpop.f32.mrf.mxu0
      %v2591 = vadd.f32 0.0, %v2590
      %v2592 = vpop.f32.mrf.mxu0
      %2593 = vdwg.mxu0
      %v2595 = vsel %vm1529, %v2324, 0
      %v2598 = vsel %vm1529, %v2448, 0
      %2600 = vmatpush.bf16.xpose.msra.mxu0 0
      %2601 = vmatpush.bf16.xpose.msra.mxu0 0
      %2602 = vmatpush.bf16.xpose.msra.mxu0 0
      %2603 = vmatpush.bf16.xpose.msra.mxu0 0
      %2604 = vmatpush.bf16.xpose.msra.mxu0 0
      %2605 = vmatpush.bf16.xpose.msra.mxu0 0
      %2606 = vmatpush.bf16.xpose.msra.mxu0 0
      %2607 = vmatpush.bf16.xpose.msra.mxu0 %v2598
      %2608 = vmatmul.bf16.gmra.mxu0 %v2595
      %v2609 = vpop.f32.mrf.mxu0
      %v2610 = vadd.f32 0.0, %v2609
      %v2611 = vpop.f32.mrf.mxu0
      %2612 = vdwg.mxu0
      %v2614 = vsel %vm1529, %v2325, 0
      %v2617 = vsel %vm1529, %v2449, 0
      %2619 = vmatpush.bf16.xpose.msra.mxu0 0
      %2620 = vmatpush.bf16.xpose.msra.mxu0 0
      %2621 = vmatpush.bf16.xpose.msra.mxu0 0
      %2622 = vmatpush.bf16.xpose.msra.mxu0 0
      %2623 = vmatpush.bf16.xpose.msra.mxu0 0
      %2624 = vmatpush.bf16.xpose.msra.mxu0 0
      %2625 = vmatpush.bf16.xpose.msra.mxu0 0
      %2626 = vmatpush.bf16.xpose.msra.mxu0 %v2617
      %2627 = vmatmul.bf16.gmra.mxu0 %v2614
      %v2628 = vpop.f32.mrf.mxu0
      %v2629 = vadd.f32 0.0, %v2628
      %v2630 = vpop.f32.mrf.mxu0
      %2631 = vdwg.mxu0
      %v2633 = vsel %vm1529, %v2326, 0
      %v2636 = vsel %vm1529, %v2450, 0
      %2638 = vmatpush.bf16.xpose.msra.mxu0 0
      %2639 = vmatpush.bf16.xpose.msra.mxu0 0
      %2640 = vmatpush.bf16.xpose.msra.mxu0 0
      %2641 = vmatpush.bf16.xpose.msra.mxu0 0
      %2642 = vmatpush.bf16.xpose.msra.mxu0 0
      %2643 = vmatpush.bf16.xpose.msra.mxu0 0
      %2644 = vmatpush.bf16.xpose.msra.mxu0 0
      %2645 = vmatpush.bf16.xpose.msra.mxu0 %v2636
      %2646 = vmatmul.bf16.gmra.mxu0 %v2633
      %v2647 = vpop.f32.mrf.mxu0
      %v2648 = vadd.f32 0.0, %v2647
      %v2649 = vpop.f32.mrf.mxu0
      %2650 = vdwg.mxu0
      %v2651 = vmul.f32 %v2591, 0.17677669
      %v2652 = vmul.f32 %v2610, 0.17677669
      %v2653 = vmul.f32 %v2629, 0.17677669
      %v2654 = vmul.f32 %v2648, 0.17677669
      %v2655 = vadd.f32 %v2651, %v1972
      %v2656 = vadd.f32 %v2652, %v1972
      %v2657 = vadd.f32 %v2653, %v1972
      %v2658 = vadd.f32 %v2654, %v1972
      %v2659 = vsel %vm1614, %v2655, -inf
      %2660 = vmax.xlane.f32.xlu0 %v2659
      %v2661 = vpop.xlane.xlu0 %2660
      %v2662 = vsel %vm1614, %v2656, -inf
      %2663 = vmax.xlane.f32.xlu0 %v2662
      %v2664 = vpop.xlane.xlu0 %2663
      %v2665 = vsel %vm1614, %v2657, -inf
      %2666 = vmax.xlane.f32.xlu0 %v2665
      %v2667 = vpop.xlane.xlu0 %2666
      %v2668 = vsel %vm1614, %v2658, -inf
      %2669 = vmax.xlane.f32.xlu0 %v2668
      %v2670 = vpop.xlane.xlu0 %2669
      %v2671 = vsub.f32 %v2655, %v2661
      %v2672 = vsub.f32 %v2656, %v2664
      %v2673 = vsub.f32 %v2657, %v2667
      %v2674 = vsub.f32 %v2658, %v2670
      %v2675 = vmul.f32 %v2671, 1.442695
      %v2676 = vpow.pop %v2675
      %v2677 = vmul.f32 %v2672, 1.442695
      %v2678 = vpow.pop %v2677
      %v2679 = vmul.f32 %v2673, 1.442695
      %v2680 = vpow.pop %v2679
      %v2681 = vmul.f32 %v2674, 1.442695
      %v2682 = vpow.pop %v2681
      %v2683 = vsel %vm1614, %v2676, 0.0
      %2684 = vadd.xlane.f32.xlu0 %v2683
      %v2685 = vpop.xlane.xlu0 %2684
      %v2686 = vsel %vm1614, %v2678, 0.0
      %2687 = vadd.xlane.f32.xlu0 %v2686
      %v2688 = vpop.xlane.xlu0 %2687
      %v2689 = vsel %vm1614, %v2680, 0.0
      %2690 = vadd.xlane.f32.xlu0 %v2689
      %v2691 = vpop.xlane.xlu0 %2690
      %v2692 = vsel %vm1614, %v2682, 0.0
      %2693 = vadd.xlane.f32.xlu0 %v2692
      %v2694 = vpop.xlane.xlu0 %2693
      %v2695 = vrcp.pop %v2685
      %v2696 = vrcp.pop %v2688
      %v2697 = vrcp.pop %v2691
      %v2698 = vrcp.pop %v2694
      %v2699 = vmul.f32 %v2676, %v2695
      %v2700 = vmul.f32 %v2678, %v2696
      %v2701 = vmul.f32 %v2680, %v2697
      %v2702 = vmul.f32 %v2682, %v2698
      %v2703 = vpack.c.bf16 %v2699, %v2699
      %v2704 = vpack.c.bf16 %v2700, %v2700
      %v2705 = vpack.c.bf16 %v2701, %v2701
      %v2706 = vpack.c.bf16 %v2702, %v2702
      %v2708 = vsel %vm1614, %v2703, 0
      %v2711 = vsel %vm1666, %v2571, 0
      %2713 = vmatpush.bf16.msra.mxu0 0
      %2714 = vmatpush.bf16.msra.mxu0 0
      %2715 = vmatpush.bf16.msra.mxu0 0
      %2716 = vmatpush.bf16.msra.mxu0 0
      %2717 = vmatpush.bf16.msra.mxu0 0
      %2718 = vmatpush.bf16.msra.mxu0 0
      %2719 = vmatpush.bf16.msra.mxu0 0
      %2720 = vmatpush.bf16.msra.mxu0 %v2711
      %2721 = vmatmul.bf16.gmra.mxu0 %v2708
      %v2722 = vpop.f32.mrf.mxu0
      %v2723 = vadd.f32 0.0, %v2722
      %v2724 = vpop.f32.mrf.mxu0
      %2725 = vdwg.mxu0
      %v2727 = vsel %vm1614, %v2704, 0
      %v2730 = vsel %vm1666, %v2572, 0
      %2732 = vmatpush.bf16.msra.mxu0 0
      %2733 = vmatpush.bf16.msra.mxu0 0
      %2734 = vmatpush.bf16.msra.mxu0 0
      %2735 = vmatpush.bf16.msra.mxu0 0
      %2736 = vmatpush.bf16.msra.mxu0 0
      %2737 = vmatpush.bf16.msra.mxu0 0
      %2738 = vmatpush.bf16.msra.mxu0 0
      %2739 = vmatpush.bf16.msra.mxu0 %v2730
      %2740 = vmatmul.bf16.gmra.mxu0 %v2727
      %v2741 = vpop.f32.mrf.mxu0
      %v2742 = vadd.f32 0.0, %v2741
      %v2743 = vpop.f32.mrf.mxu0
      %2744 = vdwg.mxu0
      %v2746 = vsel %vm1614, %v2705, 0
      %v2749 = vsel %vm1666, %v2573, 0
      %2751 = vmatpush.bf16.msra.mxu0 0
      %2752 = vmatpush.bf16.msra.mxu0 0
      %2753 = vmatpush.bf16.msra.mxu0 0
      %2754 = vmatpush.bf16.msra.mxu0 0
      %2755 = vmatpush.bf16.msra.mxu0 0
      %2756 = vmatpush.bf16.msra.mxu0 0
      %2757 = vmatpush.bf16.msra.mxu0 0
      %2758 = vmatpush.bf16.msra.mxu0 %v2749
      %2759 = vmatmul.bf16.gmra.mxu0 %v2746
      %v2760 = vpop.f32.mrf.mxu0
      %v2761 = vadd.f32 0.0, %v2760
      %v2762 = vpop.f32.mrf.mxu0
      %2763 = vdwg.mxu0
      %v2765 = vsel %vm1614, %v2706, 0
      %v2768 = vsel %vm1666, %v2574, 0
      %2770 = vmatpush.bf16.msra.mxu0 0
      %2771 = vmatpush.bf16.msra.mxu0 0
      %2772 = vmatpush.bf16.msra.mxu0 0
      %2773 = vmatpush.bf16.msra.mxu0 0
      %2774 = vmatpush.bf16.msra.mxu0 0
      %2775 = vmatpush.bf16.msra.mxu0 0
      %2776 = vmatpush.bf16.msra.mxu0 0
      %2777 = vmatpush.bf16.msra.mxu0 %v2768
      %2778 = vmatmul.bf16.gmra.mxu0 %v2765
      %v2779 = vpop.f32.mrf.mxu0
      %v2780 = vadd.f32 0.0, %v2779
      %v2781 = vpop.f32.mrf.mxu0
      %2782 = vdwg.mxu0
      %v2783 = vrot.slane %v2761, 4
      %v2784 = vsel %vm1167, %v2783, %v2723
      %v2785 = vrot.slane %v2723, 4
      %v2786 = vsel %vm1167, %v2761, %v2785
      %v2788 = vunpack.c.l.s4 1983009808
      %v2789 = vunpack.c.0.s8 %v2788
      %v2790 = vperm.slane %v2784, %v2789
      %v2792 = vunpack.c.l.s4 1983009808
      %v2793 = vunpack.c.0.s8 %v2792
      %v2794 = vperm.slane %v2786, %v2793
      %v2795 = vrot.slane %v2780, 4
      %v2796 = vsel %vm1167, %v2795, %v2742
      %v2797 = vrot.slane %v2742, 4
      %v2798 = vsel %vm1167, %v2780, %v2797
      %v2800 = vunpack.c.l.s4 1983009808
      %v2801 = vunpack.c.0.s8 %v2800
      %v2802 = vperm.slane %v2796, %v2801
      %v2804 = vunpack.c.l.s4 1983009808
      %v2805 = vunpack.c.0.s8 %v2804
      %v2806 = vperm.slane %v2798, %v2805
      %v2807 = vrot.slane %v2802, 4
      %v2808 = vsel %vm1167, %v2807, %v2790
      %v2809 = vrot.slane %v2790, 4
      %v2810 = vsel %vm1167, %v2802, %v2809
      %v2812 = vunpack.c.l.s4 1934713408
      %v2813 = vunpack.c.0.s8 %v2812
      %v2814 = vperm.slane %v2808, %v2813
      %v2816 = vunpack.c.l.s4 1934713408
      %v2817 = vunpack.c.0.s8 %v2816
      %v2818 = vperm.slane %v2810, %v2817
      %v2819 = vrot.slane %v2806, 4
      %v2820 = vsel %vm1167, %v2819, %v2794
      %v2821 = vrot.slane %v2794, 4
      %v2822 = vsel %vm1167, %v2806, %v2821
      %v2824 = vunpack.c.l.s4 1934713408
      %v2825 = vunpack.c.0.s8 %v2824
      %v2826 = vperm.slane %v2820, %v2825
      %v2828 = vunpack.c.l.s4 1934713408
      %v2829 = vunpack.c.0.s8 %v2828
      %v2830 = vperm.slane %v2822, %v2829
      %v2831 = vrot.slane %v2814, 4
      %v2832 = vsel %vm1167, 0.0, %v2831
      %v2833 = vrot.slane %v2818, 4
      %v2834 = vsel %vm1167, 0.0, %v2833
      %v2835 = vrot.slane %v2826, 4
      %v2836 = vsel %vm1167, 0.0, %v2835
      %v2837 = vrot.slane %v2830, 4
      %v2838 = vsel %vm1167, 0.0, %v2837
      %v2839 = vsel %vm1167, %v2833, %v2814
      %v2841 = vunpack.c.l.s4 1983009808
      %v2842 = vunpack.c.0.s8 %v2841
      %v2843 = vperm.slane %v2839, %v2842
      %v2844 = vrot.slane %v2834, 4
      %v2845 = vsel %vm1167, %v2844, %v2832
      %v2847 = vunpack.c.l.s4 1983009808
      %v2848 = vunpack.c.0.s8 %v2847
      %v2849 = vperm.slane %v2845, %v2848
      %v2850 = vsel %vm1167, %v2837, %v2826
      %v2852 = vunpack.c.l.s4 1983009808
      %v2853 = vunpack.c.0.s8 %v2852
      %v2854 = vperm.slane %v2850, %v2853
      %v2855 = vrot.slane %v2838, 4
      %v2856 = vsel %vm1167, %v2855, %v2836
      %v2858 = vunpack.c.l.s4 1983009808
      %v2859 = vunpack.c.0.s8 %v2858
      %v2860 = vperm.slane %v2856, %v2859
      %v2861 = vrot.slane %v2849, 4
      %v2862 = vsel %vm1167, %v2861, %v2843
      %v2863 = vrot.slane %v2843, 4
      %v2864 = vsel %vm1167, %v2849, %v2863
      %v2866 = vunpack.c.l.s4 1934713408
      %v2867 = vunpack.c.0.s8 %v2866
      %v2868 = vperm.slane %v2862, %v2867
      %v2870 = vunpack.c.l.s4 1934713408
      %v2871 = vunpack.c.0.s8 %v2870
      %v2872 = vperm.slane %v2864, %v2871
      %v2873 = vrot.slane %v2860, 4
      %v2874 = vsel %vm1167, %v2873, %v2854
      %v2875 = vrot.slane %v2854, 4
      %v2876 = vsel %vm1167, %v2860, %v2875
      %v2878 = vunpack.c.l.s4 1934713408
      %v2879 = vunpack.c.0.s8 %v2878
      %v2880 = vperm.slane %v2874, %v2879
      %v2882 = vunpack.c.l.s4 1934713408
      %v2883 = vunpack.c.0.s8 %v2882
      %v2884 = vperm.slane %v2876, %v2883
      %v2885 = vrot.slane %v2880, 4
      %v2886 = vsel %vm1167, %v2885, %v2868
      %v2887 = vrot.slane %v2868, 4
      %v2888 = vsel %vm1167, %v2880, %v2887
      %v2889 = vrot.slane %v2884, 4
      %v2890 = vsel %vm1167, %v2889, %v2872
      %v2891 = vrot.slane %v2872, 4
      %v2892 = vsel %vm1167, %v2884, %v2891
      %2894 = vrot.lane.b32.xlu0 %v2888, 32
      %v2895 = vpop.permute.xlu0 %2894
      %2898 = vrot.lane.b32.xlu0 %v2890, 64
      %v2899 = vpop.permute.xlu0 %2898
      %2902 = vrot.lane.b32.xlu0 %v2892, 96
      %v2903 = vpop.permute.xlu0 %2902
      %v2905 = vsel %vm1529, %v2886, %v2895
      %v2906 = vsel %vm1863, %v2905, %v2899
      %v2907 = vsel %vm1865, %v2906, %v2903
      %v2908 = vpack.c.bf16 %v2907, %v2907
      %v2910 = vperm.slane %v2023, 0
      %v2928 = vunpack.c.l.b16 %v2007
      %v2929 = vunpack.c.l.b16 %v2008
      %v2930 = vunpack.c.l.b16 %v2009
      %v2931 = vunpack.c.l.b16 %v2010
      %v2932 = vunpack.c.l.b16 %v2011
      %v2933 = vunpack.c.l.b16 %v2012
      %v2934 = vunpack.c.l.b16 %v2013
      %v2935 = vunpack.c.l.b16 %v2014
      %v2936 = vunpack.c.l.b16 %v2015
      %v2937 = vunpack.c.l.b16 %v2016
      %v2938 = vunpack.c.l.b16 %v2017
      %v2939 = vunpack.c.l.b16 %v2018
      %v2940 = vunpack.c.l.b16 %v2019
      %v2941 = vunpack.c.l.b16 %v2020
      %v2942 = vunpack.c.l.b16 %v2021
      %v2943 = vunpack.c.l.b16 %v2022
      %v2944 = vpack.c.b16 %v2929, %v2928
      %v2945 = vpack.c.b16 %v2931, %v2930
      %v2946 = vpack.c.b16 %v2933, %v2932
      %v2947 = vpack.c.b16 %v2935, %v2934
      %v2948 = vpack.c.b16 %v2937, %v2936
      %v2949 = vpack.c.b16 %v2939, %v2938
      %v2950 = vpack.c.b16 %v2941, %v2940
      %v2951 = vpack.c.b16 %v2943, %v2942
      %2960 = vmatpush.bf16.msra.mxu0 %v2951
      %2961 = vmatpush.bf16.msra.mxu0 %v2950
      %2962 = vmatpush.bf16.msra.mxu0 %v2949
      %2963 = vmatpush.bf16.msra.mxu0 %v2948
      %2964 = vmatpush.bf16.msra.mxu0 %v2947
      %2965 = vmatpush.bf16.msra.mxu0 %v2946
      %2966 = vmatpush.bf16.msra.mxu0 %v2945
      %2967 = vmatpush.bf16.msra.mxu0 %v2944
      %2968 = vmatmul.bf16.gmra.mxu0 %v2908
      %v2969 = vpop.f32.mrf.mxu0
      %v2970 = vadd.f32 %v2910, %v2969
      %v2971 = vpop.f32.mrf.mxu0
      %2972 = vdwg.mxu0
      %v2973 = vadd.f32 %v2970, %v1967
      %2974 = vadd.xlane.f32.xlu0 %v2973
      %v2975 = vpop.xlane.xlu0 %2974
      %v2976 = vmul.f32 %v2975, %v1941
      %v2977 = vsub.f32 %v2973, %v2976
      %v2978 = vmul.f32 %v2977, %v2977
      %2979 = vadd.xlane.f32.xlu0 %v2978
      %v2980 = vpop.xlane.xlu0 %2979
      %v2981 = vmul.f32 %v2980, %v1941
      %v2982 = vadd.f32 %v2981, 1e-05
      %v2983 = vrsqrt.pop %v2982
      %v2984 = vmul.f32 %v2983, %v2982
      %v2985 = vmul.f32 %v2984, %v2983
      %v2986 = vmul.f32 0.5, %v2985
      %v2987 = vsub.f32 1.5, %v2986
      %v2988 = vmul.f32 %v2983, %v2987
      %vm2989 = vweird.f32 %v2982
      %vm2990 = vweird.f32 %v2983
      %vm2991 = vmor %vm2989, %vm2990
      %v2992 = vsel %vm2991, %v2983, %v2988
      %v2993 = vmul.f32 %v2977, %v2992
      %v2995 = vperm.slane %v2024, 0
      %v2997 = vmul.f32 %v2993, %v2995
      %v2999 = vperm.slane %v2025, 0
      %v3001 = vadd.f32 %v2997, %v2999
      %v3002 = vld [vmem:[%s21] sm:$0xff]
      %v3003 = vld [vmem:[%s21 + $0x8] sm:$0xff]
      %v3004 = vld [vmem:[%s21 + $0x10] sm:$0xff]
      %v3005 = vld [vmem:[%s21 + $0x18] sm:$0xff]
      %v3006 = vld [vmem:[%s21 + $0x20] sm:$0xff]
      %v3007 = vld [vmem:[%s21 + $0x28] sm:$0xff]
      %v3008 = vld [vmem:[%s21 + $0x30] sm:$0xff]
      %v3009 = vld [vmem:[%s21 + $0x38] sm:$0xff]
      %v3010 = vld [vmem:[%s21 + $0x40] sm:$0xff]
      %v3011 = vld [vmem:[%s21 + $0x48] sm:$0xff]
      %v3012 = vld [vmem:[%s21 + $0x50] sm:$0xff]
      %v3013 = vld [vmem:[%s21 + $0x58] sm:$0xff]
      %v3014 = vld [vmem:[%s21 + $0x60] sm:$0xff]
      %v3015 = vld [vmem:[%s21 + $0x68] sm:$0xff]
      %v3016 = vld [vmem:[%s21 + $0x70] sm:$0xff]
      %v3017 = vld [vmem:[%s21 + $0x78] sm:$0xff]
      %v3018 = vld [vmem:[%s22] sm:$0x3]
      %v3019 = vld [vmem:[%s23] sm:$0xf]
      %v3020 = vld [vmem:[%s23 + $0x4] sm:$0xf]
      %v3021 = vld [vmem:[%s23 + $0x8] sm:$0xf]
      %v3022 = vld [vmem:[%s23 + $0xc] sm:$0xf]
      %v3023 = vld [vmem:[%s23 + $0x10] sm:$0xf]
      %v3024 = vld [vmem:[%s23 + $0x14] sm:$0xf]
      %v3025 = vld [vmem:[%s23 + $0x18] sm:$0xf]
      %v3026 = vld [vmem:[%s23 + $0x1c] sm:$0xf]
      %v3027 = vld [vmem:[%s23 + $0x20] sm:$0xf]
      %v3028 = vld [vmem:[%s23 + $0x24] sm:$0xf]
      %v3029 = vld [vmem:[%s23 + $0x28] sm:$0xf]
      %v3030 = vld [vmem:[%s23 + $0x2c] sm:$0xf]
      %v3031 = vld [vmem:[%s23 + $0x30] sm:$0xf]
      %v3032 = vld [vmem:[%s23 + $0x34] sm:$0xf]
      %v3033 = vld [vmem:[%s23 + $0x38] sm:$0xf]
      %v3034 = vld [vmem:[%s23 + $0x3c] sm:$0xf]
      %v3035 = vld [vmem:[%s23 + $0x40] sm:$0xf]
      %v3036 = vld [vmem:[%s23 + $0x44] sm:$0xf]
      %v3037 = vld [vmem:[%s23 + $0x48] sm:$0xf]
      %v3038 = vld [vmem:[%s23 + $0x4c] sm:$0xf]
      %v3039 = vld [vmem:[%s23 + $0x50] sm:$0xf]
      %v3040 = vld [vmem:[%s23 + $0x54] sm:$0xf]
      %v3041 = vld [vmem:[%s23 + $0x58] sm:$0xf]
      %v3042 = vld [vmem:[%s23 + $0x5c] sm:$0xf]
      %v3043 = vld [vmem:[%s23 + $0x60] sm:$0xf]
      %v3044 = vld [vmem:[%s23 + $0x64] sm:$0xf]
      %v3045 = vld [vmem:[%s23 + $0x68] sm:$0xf]
      %v3046 = vld [vmem:[%s23 + $0x6c] sm:$0xf]
      %v3047 = vld [vmem:[%s23 + $0x70] sm:$0xf]
      %v3048 = vld [vmem:[%s23 + $0x74] sm:$0xf]
      %v3049 = vld [vmem:[%s23 + $0x78] sm:$0xf]
      %v3050 = vld [vmem:[%s23 + $0x7c] sm:$0xf]
      %v3051 = vld [vmem:[%s24] sm:$0x1]
      %v3052 = vld [vmem:[%s25] sm:$0x1]
      %v3053 = vld [vmem:[%s26] sm:$0x1]
      %v3054 = vpack.c.bf16 %v3001, %v3001
      %v3056 = vperm.slane %v3018, 0
      %v3057 = vperm.slane %v3018, 1
      %v3076 = vunpack.c.l.b16 %v3002
      %v3077 = vunpack.c.h.b16 %v3002
      %v3078 = vunpack.c.l.b16 %v3003
      %v3079 = vunpack.c.h.b16 %v3003
      %v3080 = vunpack.c.l.b16 %v3004
      %v3081 = vunpack.c.h.b16 %v3004
      %v3082 = vunpack.c.l.b16 %v3005
      %v3083 = vunpack.c.h.b16 %v3005
      %v3084 = vunpack.c.l.b16 %v3006
      %v3085 = vunpack.c.h.b16 %v3006
      %v3086 = vunpack.c.l.b16 %v3007
      %v3087 = vunpack.c.h.b16 %v3007
      %v3088 = vunpack.c.l.b16 %v3008
      %v3089 = vunpack.c.h.b16 %v3008
      %v3090 = vunpack.c.l.b16 %v3009
      %v3091 = vunpack.c.h.b16 %v3009
      %v3092 = vunpack.c.l.b16 %v3010
      %v3093 = vunpack.c.h.b16 %v3010
      %v3094 = vunpack.c.l.b16 %v3011
      %v3095 = vunpack.c.h.b16 %v3011
      %v3096 = vunpack.c.l.b16 %v3012
      %v3097 = vunpack.c.h.b16 %v3012
      %v3098 = vunpack.c.l.b16 %v3013
      %v3099 = vunpack.c.h.b16 %v3013
      %v3100 = vunpack.c.l.b16 %v3014
      %v3101 = vunpack.c.h.b16 %v3014
      %v3102 = vunpack.c.l.b16 %v3015
      %v3103 = vunpack.c.h.b16 %v3015
      %v3104 = vunpack.c.l.b16 %v3016
      %v3105 = vunpack.c.h.b16 %v3016
      %v3106 = vunpack.c.l.b16 %v3017
      %v3107 = vunpack.c.h.b16 %v3017
      %v3108 = vpack.c.b16 %v3078, %v3076
      %v3109 = vpack.c.b16 %v3079, %v3077
      %v3110 = vpack.c.b16 %v3082, %v3080
      %v3111 = vpack.c.b16 %v3083, %v3081
      %v3112 = vpack.c.b16 %v3086, %v3084
      %v3113 = vpack.c.b16 %v3087, %v3085
      %v3114 = vpack.c.b16 %v3090, %v3088
      %v3115 = vpack.c.b16 %v3091, %v3089
      %v3116 = vpack.c.b16 %v3094, %v3092
      %v3117 = vpack.c.b16 %v3095, %v3093
      %v3118 = vpack.c.b16 %v3098, %v3096
      %v3119 = vpack.c.b16 %v3099, %v3097
      %v3120 = vpack.c.b16 %v3102, %v3100
      %v3121 = vpack.c.b16 %v3103, %v3101
      %v3122 = vpack.c.b16 %v3106, %v3104
      %v3123 = vpack.c.b16 %v3107, %v3105
      %3140 = vmatpush.bf16.msra.mxu0 %v3122
      %3141 = vmatpush.bf16.msra.mxu0 %v3120
      %3142 = vmatpush.bf16.msra.mxu0 %v3118
      %3143 = vmatpush.bf16.msra.mxu0 %v3116
      %3144 = vmatpush.bf16.msra.mxu0 %v3114
      %3145 = vmatpush.bf16.msra.mxu0 %v3112
      %3146 = vmatpush.bf16.msra.mxu0 %v3110
      %3147 = vmatpush.bf16.msra.mxu0 %v3108
      %3148 = vmatmul.bf16.gmra.mxu0 %v3054
      %v3149 = vpop.f32.mrf.mxu0
      %v3150 = vadd.f32 %v3056, %v3149
      %v3151 = vpop.f32.mrf.mxu0
      %3152 = vdwg.mxu0
      %3153 = vmatpush.bf16.msra.mxu0 %v3123
      %3154 = vmatpush.bf16.msra.mxu0 %v3121
      %3155 = vmatpush.bf16.msra.mxu0 %v3119
      %3156 = vmatpush.bf16.msra.mxu0 %v3117
      %3157 = vmatpush.bf16.msra.mxu0 %v3115
      %3158 = vmatpush.bf16.msra.mxu0 %v3113
      %3159 = vmatpush.bf16.msra.mxu0 %v3111
      %3160 = vmatpush.bf16.msra.mxu0 %v3109
      %3161 = vmatmul.bf16.gmra.mxu0 %v3054
      %v3162 = vpop.f32.mrf.mxu0
      %v3163 = vadd.f32 %v3057, %v3162
      %v3164 = vpop.f32.mrf.mxu0
      %3165 = vdwg.mxu0
      %v3166 = vmax.f32 %v3150, 0.0
      %v3167 = vmax.f32 %v3163, 0.0
      %v3168 = vpack.c.bf16 %v3166, %v3166
      %v3169 = vpack.c.bf16 %v3167, %v3167
      %v3171 = vperm.slane %v3051, 0
      %v3205 = vunpack.c.l.b16 %v3019
      %v3206 = vunpack.c.l.b16 %v3020
      %v3207 = vunpack.c.l.b16 %v3021
      %v3208 = vunpack.c.l.b16 %v3022
      %v3209 = vunpack.c.l.b16 %v3023
      %v3210 = vunpack.c.l.b16 %v3024
      %v3211 = vunpack.c.l.b16 %v3025
      %v3212 = vunpack.c.l.b16 %v3026
      %v3213 = vunpack.c.l.b16 %v3027
      %v3214 = vunpack.c.l.b16 %v3028
      %v3215 = vunpack.c.l.b16 %v3029
      %v3216 = vunpack.c.l.b16 %v3030
      %v3217 = vunpack.c.l.b16 %v3031
      %v3218 = vunpack.c.l.b16 %v3032
      %v3219 = vunpack.c.l.b16 %v3033
      %v3220 = vunpack.c.l.b16 %v3034
      %v3221 = vunpack.c.l.b16 %v3035
      %v3222 = vunpack.c.l.b16 %v3036
      %v3223 = vunpack.c.l.b16 %v3037
      %v3224 = vunpack.c.l.b16 %v3038
      %v3225 = vunpack.c.l.b16 %v3039
      %v3226 = vunpack.c.l.b16 %v3040
      %v3227 = vunpack.c.l.b16 %v3041
      %v3228 = vunpack.c.l.b16 %v3042
      %v3229 = vunpack.c.l.b16 %v3043
      %v3230 = vunpack.c.l.b16 %v3044
      %v3231 = vunpack.c.l.b16 %v3045
      %v3232 = vunpack.c.l.b16 %v3046
      %v3233 = vunpack.c.l.b16 %v3047
      %v3234 = vunpack.c.l.b16 %v3048
      %v3235 = vunpack.c.l.b16 %v3049
      %v3236 = vunpack.c.l.b16 %v3050
      %v3237 = vpack.c.b16 %v3206, %v3205
      %v3238 = vpack.c.b16 %v3208, %v3207
      %v3239 = vpack.c.b16 %v3210, %v3209
      %v3240 = vpack.c.b16 %v3212, %v3211
      %v3241 = vpack.c.b16 %v3214, %v3213
      %v3242 = vpack.c.b16 %v3216, %v3215
      %v3243 = vpack.c.b16 %v3218, %v3217
      %v3244 = vpack.c.b16 %v3220, %v3219
      %v3245 = vpack.c.b16 %v3222, %v3221
      %v3246 = vpack.c.b16 %v3224, %v3223
      %v3247 = vpack.c.b16 %v3226, %v3225
      %v3248 = vpack.c.b16 %v3228, %v3227
      %v3249 = vpack.c.b16 %v3230, %v3229
      %v3250 = vpack.c.b16 %v3232, %v3231
      %v3251 = vpack.c.b16 %v3234, %v3233
      %v3252 = vpack.c.b16 %v3236, %v3235
      %3269 = vmatpush.bf16.msra.mxu0 %v3244
      %3270 = vmatpush.bf16.msra.mxu0 %v3243
      %3271 = vmatpush.bf16.msra.mxu0 %v3242
      %3272 = vmatpush.bf16.msra.mxu0 %v3241
      %3273 = vmatpush.bf16.msra.mxu0 %v3240
      %3274 = vmatpush.bf16.msra.mxu0 %v3239
      %3275 = vmatpush.bf16.msra.mxu0 %v3238
      %3276 = vmatpush.bf16.msra.mxu0 %v3237
      %3277 = vmatmul.bf16.gmra.mxu0 %v3168
      %v3278 = vpop.f32.mrf.mxu0
      %v3279 = vadd.f32 %v3171, %v3278
      %v3280 = vpop.f32.mrf.mxu0
      %3281 = vdwg.mxu0
      %3282 = vmatpush.bf16.msra.mxu0 %v3252
      %3283 = vmatpush.bf16.msra.mxu0 %v3251
      %3284 = vmatpush.bf16.msra.mxu0 %v3250
      %3285 = vmatpush.bf16.msra.mxu0 %v3249
      %3286 = vmatpush.bf16.msra.mxu0 %v3248
      %3287 = vmatpush.bf16.msra.mxu0 %v3247
      %3288 = vmatpush.bf16.msra.mxu0 %v3246
      %3289 = vmatpush.bf16.msra.mxu0 %v3245
      %3290 = vmatmul.bf16.gmra.mxu0 %v3169
      %v3291 = vpop.f32.mrf.mxu0
      %v3292 = vadd.f32 %v3279, %v3291
      %v3293 = vpop.f32.mrf.mxu0
      %3294 = vdwg.mxu0
      %v3295 = vadd.f32 %v3292, %v3001
      %3296 = vadd.xlane.f32.xlu0 %v3295
      %v3297 = vpop.xlane.xlu0 %3296
      %v3298 = vmul.f32 %v3297, %v1941
      %v3299 = vsub.f32 %v3295, %v3298
      %v3300 = vmul.f32 %v3299, %v3299
      %3301 = vadd.xlane.f32.xlu0 %v3300
      %v3302 = vpop.xlane.xlu0 %3301
      %v3303 = vmul.f32 %v3302, %v1941
      %v3304 = vadd.f32 %v3303, 1e-05
      %v3305 = vrsqrt.pop %v3304
      %v3306 = vmul.f32 %v3305, %v3304
      %v3307 = vmul.f32 %v3306, %v3305
      %v3308 = vmul.f32 0.5, %v3307
      %v3309 = vsub.f32 1.5, %v3308
      %v3310 = vmul.f32 %v3305, %v3309
      %vm3311 = vweird.f32 %v3304
      %vm3312 = vweird.f32 %v3305
      %vm3313 = vmor %vm3311, %vm3312
      %v3314 = vsel %vm3313, %v3305, %v3310
      %v3315 = vmul.f32 %v3299, %v3314
      %v3317 = vperm.slane %v3052, 0
      %v3319 = vmul.f32 %v3315, %v3317
      %v3321 = vperm.slane %v3053, 0
      %v3323 = vadd.f32 %v3319, %v3321
      %3324 = vst [vmem:[%s906] sm:$0xff] %v3323
      %p3325 = scmp.lt.s32.totalorder %s42, 1
      %s3326 = scalar_select %p3325, %s42, 1
      %p3327 = scmp.lt.s32.totalorder %s43, 0
      %s3328 = scalar_select %p3327, %s43, 0
      %s3329 = sadd.s32 %s3328, %s3326
      %s3330 = smul.addr %s3329, 8
      %s3331 = scalar_lea.vmem %s27, %s3330
      // Predicated region
      $region129: #{transformer_forward.7} parent=127 // pred_check
        %p3332 = pneg %p664
      $region130: #{transformer_forward.7} parent=127 // pred_check_branch
        %3334 = sbr.rel (%p3332) target = $region132
      $region131: #{transformer_forward.7} parent=127 // pred_region
        _
      $region132: #{transformer_forward.7} parent=127 // pred_fallthru
        _
    $region128: #{transformer_forward.7} parent=5 // pred_fallthru
      _
    %p3335 = scmp.le.s32.totalorder 2, %s33
    // Predicated region
    $region133: #{transformer_forward.7} parent=5 // pred_check
      %p3336 = pneg %p3335
    $region134: #{transformer_forward.7} parent=5 // pred_check_branch
      %3338 = sbr.rel (%p3336) target = $region136
    $region135: #{transformer_forward.7} parent=5 // pred_region
      %s3339 = ssub.s32 %s33, 2
      // Predicated region
      $region137: #{transformer_forward.7} parent=135 // pred_check
        %p3340 = pneg %p670
      $region138: #{transformer_forward.7} parent=135 // pred_check_branch
        %3342 = sbr.rel (%p3340) target = $region140
      $region139: #{transformer_forward.7} parent=135 // pred_region
        %p3343 = scmp.lt.s32.totalorder %s44, 1
        %s3344 = scalar_select %p3343, %s44, 1
        %p3345 = scmp.lt.s32.totalorder %s45, 0
        %s3346 = scalar_select %p3345, %s45, 0
        %s3347 = sadd.s32 %s3346, %s3344
        %s3348 = smul.addr %s3347, 8
        %s3349 = scalar_lea.vmem %s27, %s3348
      $region140: #{transformer_forward.7} parent=135 // pred_fallthru
        _
    $region136: #{transformer_forward.7} parent=5 // pred_fallthru
      _
  $region6: #{transformer_forward.7} parent=0 // loop_footer
    %s37 = sadd.s32 1, %s33
  $region7: #{transformer_forward.7} parent=0 // loop_footer_branch
    %32 = sbr.rel target = $region3
  $region8: #{transformer_forward.7} parent=0 // loop_exit
    _

</llo_original>
